<compile_context>
chip_gen: v5e
topology: v5e:2x2
jax: 0.10.0
libtpu: 0.0.40
codegen_flags: <defaults>
</compile_context>

<pallas_src>
import jax
import jax.numpy as jnp
from jax.experimental import pallas as pl
from jax.experimental.pallas import tpu as pltpu

# Keep f32 matmul semantics so the Pallas kernel and the pure-JAX reference agree
# tightly (bf16 MXU inputs were considered but deliberately skipped: the review's own
# correctness note flags that it loosens the tolerance check).
jax.config.update("jax_default_matmul_precision", "highest")


# ----------------------------- Fused Pallas kernel -----------------------------

def _fused_attention_pair_kernel(h_ref, bin_ref, wh_ref, wb_ref, bab_ref,
                                 ws_ref, bs_ref, wc_ref, bc_ref,
                                 wsc_ref, bsc_ref, out_ref):
    """Global_Attention + pairwise classifier head, one batch element per grid step.

    attention:
      hA          = h @ W_att_atom                       (pair-sum after matmul)
      att_hid     = relu(hA[i] + hA[j] + bin[i,j] @ W_att_bin + b_att)
      score(i,j)  = sigmoid(att_hid[i,j] . w_s + b_s)
      ctx[i]      = sum_j score(i,j) * h[j]
    pair head:
      base        = h @ W_atom + ctx @ W_ctx
      pair_hid    = relu(base[i] + base[j] + bin[i,j] @ W_bin + b_ctx)
      out[i,j]    = pair_hid[i,j] @ W_score + b_score
    """
    h = h_ref[0]                                    # (N, H)
    N, H = h.shape
    bnn = bin_ref[0]                                # (N, N, BINF)
    bin2 = bnn.reshape(N * N, bnn.shape[-1])        # (N*N, BINF)

    # Per-atom projections for both heads in one (N,H)@(H,2H) matmul (linearity trick).
    hW = jnp.dot(h, wh_ref[...], preferred_element_type=jnp.float32)       # (N, 2H)
    hA = hW[:, :H]                                  # attention projection
    hP = hW[:, H:]                                  # pair-head projection

    # Only the binary term is truly pairwise; project for both heads in one matmul.
    binW = jnp.dot(bin2, wb_ref[...], preferred_element_type=jnp.float32)  # (N*N, 2H)
    binA = binW[:, :H]
    binP = binW[:, H:]

    # ---------------- global attention ----------------
    pairA = (hA[:, None, :] + hA[None, :, :]).reshape(N * N, H)
    att_hidden = jnp.maximum(pairA + binA + bab_ref[...], 0.0)             # (N*N, H)
    logits = jnp.dot(att_hidden, ws_ref[...],
                     preferred_element_type=jnp.float32) + bs_ref[0, 0]    # (N*N, 1)
    att_score = jax.nn.sigmoid(logits)                                     # (N*N, 1)
    # ctx[i] = sum_j score(i,j) * h[j]; row i*N+j of h_rep holds h[j].
    h_rep = jnp.broadcast_to(h[None, :, :], (N, N, H)).reshape(N * N, H)
    ctx = jnp.sum((att_score * h_rep).reshape(N, N, H), axis=1)            # (N, H)

    # ---------------- pairwise classifier head ----------------
    base = hP + jnp.dot(ctx, wc_ref[...], preferred_element_type=jnp.float32)  # (N, H)
    pairP = (base[:, None, :] + base[None, :, :]).reshape(N * N, H)
    pair_hidden = jnp.maximum(pairP + binP + bc_ref[...], 0.0)             # (N*N, H)
    score = jnp.dot(pair_hidden, wsc_ref[...],
                    preferred_element_type=jnp.float32) + bsc_ref[...]     # (N*N, OUT)
    out_ref[0] = score


# ------------------------------ Pallas wrapper ----------------------------

def fused_attention_pair_pallas(atom_hidden, binary, params):
    B, N, H = atom_hidden.shape
    BINF = binary.shape[-1]
    OUT = params['score_w'].shape[-1]

    # Concatenate weights that share the same LHS so each becomes one wider MXU matmul.
    w_h = jnp.concatenate([params['att_atom_w'], params['atom_feature_w']], axis=1)  # (H, 2H)
    w_bin = jnp.concatenate([params['att_bin_w'], params['bin_feature_w']], axis=1)  # (BINF, 2H)
    w_score_vec = params['att_score_w'].reshape(H, 1)                                # (H, 1)

    score3 = pl.pallas_call(
        _fused_attention_pair_kernel,
        out_shape=jax.ShapeDtypeStruct((B, N * N, OUT), jnp.float32),
        grid=(B,),
        in_specs=[
            pl.BlockSpec((1, N, H), lambda b: (b, 0, 0)),           # atom hidden
            pl.BlockSpec((1, N, N, BINF), lambda b: (b, 0, 0, 0)),  # binary features
            pl.BlockSpec((H, 2 * H), lambda b: (0, 0)),             # [W_att_atom | W_atom]
            pl.BlockSpec((BINF, 2 * H), lambda b: (0, 0)),          # [W_att_bin | W_bin]
            pl.BlockSpec((1, H), lambda b: (0, 0)),                 # att bias
            pl.BlockSpec((H, 1), lambda b: (0, 0)),                 # att score vector
            pl.BlockSpec(memory_space=pltpu.MemorySpace.SMEM),      # att score bias (scalar)
            pl.BlockSpec((H, H), lambda b: (0, 0)),                 # W_ctx
            pl.BlockSpec((1, H), lambda b: (0, 0)),                 # ctx bias
            pl.BlockSpec((H, OUT), lambda b: (0, 0)),               # W_score
            pl.BlockSpec((1, OUT), lambda b: (0, 0)),               # score bias
        ],
        out_specs=pl.BlockSpec((1, N * N, OUT), lambda b: (b, 0, 0)),
        compiler_params=pltpu.CompilerParams(dimension_semantics=("parallel",)),
    )(atom_hidden, binary, w_h, w_bin, params['att_bin_b'], w_score_vec,
      params['att_score_b'], params['ctx_feature_w'], params['ctx_feature_b'],
      params['score_w'], params['score_b'])
    # (B, N*N, OUT) is contiguous in the final flattening order -> free reshape.
    return score3.reshape(B, N * N * OUT)


# ------------------------- WLN_Layer (plain-JAX glue) ----------------------
# TODO(synk): WLN_Layer neighbor gathers are data-dependent; kept in plain JAX
# (gather/scatter over graph indices has no clean static-BlockSpec expression).

def wln_layer_apply(params, inputs, depth, max_nb):
    input_atom, input_bond, atom_graph, bond_graph, num_nbs, node_mask, _binary = inputs
    atom_feats = input_atom.astype(jnp.float32) @ params['wln_atom_w']    # (B, N, H)
    nb_mask = (jnp.arange(max_nb)[None, None, :] <
               num_nbs[:, :, None]).astype(jnp.float32)[..., None]        # (B, N, max_nb, 1)
    gather = jax.vmap(lambda feats, idx: feats[idx])
    kernels = None
    for _ in range(depth):
        fatom_nei = gather(atom_feats, atom_graph)                         # (B, N, max_nb, H)
        fbond_nei = gather(input_bond.astype(jnp.float32), bond_graph)     # (B, N, max_nb, BF)
        h_nei = (fatom_nei @ params['wln_nei_atom_w']) * \
                (fbond_nei @ params['wln_nei_bond_w'])
        f_nei = jnp.sum(h_nei * nb_mask, axis=-2)
        f_self = atom_feats @ params['wln_self_atom_w']
        kernels = f_nei * f_self * node_mask[..., None]                    # (B, N, H)
        l_nei = jnp.concatenate([fatom_nei, fbond_nei], axis=3)
        nei_label = jax.nn.relu(l_nei @ params['wln_u2_w'] + params['wln_u2_b'])
        nei_label = jnp.sum(nei_label * nb_mask, axis=-2)
        new_label = jnp.concatenate([atom_feats, nei_label], axis=2)
        atom_feats = jax.nn.relu(new_label @ params['wln_u1_w'] + params['wln_u1_b'])
    return kernels, atom_feats


# ----------------------------- Full forward pass ---------------------------

def wln_pairwise_atom_classifier(params, inputs, depth, max_nb, output_dim):
    binary = inputs[-1].astype(jnp.float32)
    atom_hidden, _ = wln_layer_apply(params, inputs, depth, max_nb)
    return fused_attention_pair_pallas(atom_hidden, binary, params)


def reference_forward(params, inputs, depth, max_nb, output_dim):
    """Pure-JAX reference of the same math (for validation)."""
    binary = inputs[-1].astype(jnp.float32)
    h, _ = wln_layer_apply(params, inputs, depth, max_nb)
    pair = h[:, :, None, :] + h[:, None, :, :]
    att_hidden = jax.nn.relu(pair @ params['att_atom_w']
                             + binary @ params['att_bin_w']
                             + params['att_bin_b'][0])
    logits = jnp.einsum('bijh,h->bij', att_hidden, params['att_score_w'][0]) \
        + params['att_score_b'][0, 0]
    att_score = jax.nn.sigmoid(logits)
    att_context = jnp.einsum('bij,bjh->bih', att_score, h)
    att_pair = att_context[:, :, None, :] + att_context[:, None, :, :]
    pair_hidden = jax.nn.relu(pair @ params['atom_feature_w']
                              + binary @ params['bin_feature_w']
                              + att_pair @ params['ctx_feature_w']
                              + params['ctx_feature_b'][0])
    score = pair_hidden @ params['score_w'] + params['score_b'][0]
    B, N = h.shape[0], h.shape[1]
    return score.reshape(B, N * N * output_dim)


# ------------------------------- Parameters --------------------------------

def init_params(key, afeat, bfeat, binf, hidden, output_dim):
    def lin(k, fin, fout):
        return jax.random.normal(k, (fin, fout), jnp.float32) / jnp.sqrt(fin)
    ks = jax.random.split(key, 19)
    return {
        # WLN_Layer
        'wln_atom_w': lin(ks[0], afeat, hidden),
        'wln_nei_atom_w': lin(ks[1], hidden, hidden),
        'wln_nei_bond_w': lin(ks[2], bfeat, hidden),
        'wln_self_atom_w': lin(ks[3], hidden, hidden),
        'wln_u2_w': lin(ks[4], hidden + bfeat, hidden),
        'wln_u2_b': 0.1 * jax.random.normal(ks[5], (hidden,), jnp.float32),
        'wln_u1_w': lin(ks[6], 2 * hidden, hidden),
        'wln_u1_b': 0.1 * jax.random.normal(ks[7], (hidden,), jnp.float32),
        # Global_Attention
        'att_atom_w': lin(ks[8], hidden, hidden),
        'att_bin_w': lin(ks[9], binf, hidden),
        'att_bin_b': 0.1 * jax.random.normal(ks[10], (1, hidden), jnp.float32),
        'att_score_w': lin(ks[11], hidden, 1).T,          # stored as (1, hidden)
        'att_score_b': 0.1 * jax.random.normal(ks[12], (1, 1), jnp.float32),
        # Pairwise classifier head
        'atom_feature_w': lin(ks[13], hidden, hidden),
        'bin_feature_w': lin(ks[14], binf, hidden),
        'ctx_feature_w': lin(ks[15], hidden, hidden),
        'ctx_feature_b': 0.1 * jax.random.normal(ks[16], (1, hidden), jnp.float32),
        'score_w': lin(ks[17], hidden, output_dim),
        'score_b': 0.1 * jax.random.normal(ks[18], (1, output_dim), jnp.float32),
    }


# ----------------------------------- Main -----------------------------------

if __name__ == "__main__":
    B, N, H = 2, 16, 32               # batch, atoms, hidden_size
    AFEAT, BFEAT, BINF = 16, 6, 11    # atom feat dim, bond feat dim, binary (hard-coded 11)
    NBONDS, MAX_NB, DEPTH, OUT = 24, 6, 2, 5

    root = jax.random.PRNGKey(0)
    k_in, k_par = jax.random.split(root)
    ki = jax.random.split(k_in, 7)

    input_atom = jax.random.normal(ki[0], (B, N, AFEAT), jnp.float32)
    input_bond = jax.random.normal(ki[1], (B, NBONDS, BFEAT), jnp.float32)
    atom_graph = jax.random.randint(ki[2], (B, N, MAX_NB), 0, N, jnp.int32)
    bond_graph = jax.random.randint(ki[3], (B, N, MAX_NB), 0, NBONDS, jnp.int32)
    num_nbs = jax.random.randint(ki[4], (B, N), 1, MAX_NB + 1, jnp.int32)
    node_mask = (jax.random.uniform(ki[5], (B, N)) > 0.1).astype(jnp.float32)
    binary = jax.random.normal(ki[6], (B, N, N, BINF), jnp.float32)
    inputs = [input_atom, input_bond, atom_graph, bond_graph, num_nbs, node_mask, binary]

    params = init_params(k_par, AFEAT, BFEAT, BINF, H, OUT)

    score = wln_pairwise_atom_classifier(params, inputs, DEPTH, MAX_NB, OUT)
    score = jax.block_until_ready(score)

    ref = reference_forward(params, inputs, DEPTH, MAX_NB, OUT)
    assert score.shape == (B, N * N * OUT), score.shape
    assert jnp.allclose(score, ref, rtol=5e-3, atol=5e-3), \
        float(jnp.max(jnp.abs(score - ref)))

    print("KERNEL_OK")
</pallas_src>

<mosaic_0001>
module attributes {stable_mosaic.version = 11 : i64} {
  func.func @_fused_attention_pair_kernel(%arg0: i32, %arg1: memref<1x16x32xf32, #tpu.memory_space<vmem>>, %arg2: memref<1x16x16x11xf32, #tpu.memory_space<vmem>>, %arg3: memref<32x64xf32, #tpu.memory_space<vmem>>, %arg4: memref<11x64xf32, #tpu.memory_space<vmem>>, %arg5: memref<1x32xf32, #tpu.memory_space<vmem>>, %arg6: memref<32x1xf32, #tpu.memory_space<vmem>>, %arg7: memref<1x1xf32, #tpu.memory_space<smem>>, %arg8: memref<32x32xf32, #tpu.memory_space<vmem>>, %arg9: memref<1x32xf32, #tpu.memory_space<vmem>>, %arg10: memref<32x5xf32, #tpu.memory_space<vmem>>, %arg11: memref<1x5xf32, #tpu.memory_space<vmem>>, %arg12: memref<1x256x5xf32, #tpu.memory_space<vmem>>) attributes {dimension_semantics = [#tpu.dimension_semantics<parallel>], iteration_bounds = array<i64: 2>, scalar_prefetch = 0 : i64, scratch_operands = 0 : i64, tpu.core_type = #tpu.core_type<tc>, window_params = [{transform_indices = @transform_0, window_bounds = array<i64: 1, 16, 32>}, {transform_indices = @transform_1, window_bounds = array<i64: 1, 16, 16, 11>}, {pipeline_mode = #tpu.pipeline_mode<synchronous>, transform_indices = @transform_2, window_bounds = array<i64: 32, 64>}, {pipeline_mode = #tpu.pipeline_mode<synchronous>, transform_indices = @transform_3, window_bounds = array<i64: 11, 64>}, {pipeline_mode = #tpu.pipeline_mode<synchronous>, transform_indices = @transform_4, window_bounds = array<i64: 1, 32>}, {pipeline_mode = #tpu.pipeline_mode<synchronous>, transform_indices = @transform_5, window_bounds = array<i64: 32, 1>}, {transform_indices = @transform_6, window_bounds = array<i64: 1, 1>}, {pipeline_mode = #tpu.pipeline_mode<synchronous>, transform_indices = @transform_7, window_bounds = array<i64: 32, 32>}, {pipeline_mode = #tpu.pipeline_mode<synchronous>, transform_indices = @transform_8, window_bounds = array<i64: 1, 32>}, {pipeline_mode = #tpu.pipeline_mode<synchronous>, transform_indices = @transform_9, window_bounds = array<i64: 32, 5>}, {pipeline_mode = #tpu.pipeline_mode<synchronous>, transform_indices = @transform_10, window_bounds = array<i64: 1, 5>}, {transform_indices = @transform_11, window_bounds = array<i64: 1, 256, 5>}]} {
    %c0 = arith.constant 0 : index
    %c0_0 = arith.constant 0 : index
    %c0_1 = arith.constant 0 : index
    %0 = vector.load %arg1[%c0, %c0_0, %c0_1] : memref<1x16x32xf32, #tpu.memory_space<vmem>>, vector<1x16x32xf32>
    %1 = vector.shape_cast %0 : vector<1x16x32xf32> to vector<16x32xf32>
    %c0_2 = arith.constant 0 : index
    %c0_3 = arith.constant 0 : index
    %c0_4 = arith.constant 0 : index
    %c0_5 = arith.constant 0 : index
    %2 = vector.load %arg2[%c0_2, %c0_3, %c0_4, %c0_5] : memref<1x16x16x11xf32, #tpu.memory_space<vmem>>, vector<1x16x16x11xf32>
    %3 = vector.shape_cast %2 : vector<1x16x16x11xf32> to vector<16x16x11xf32>
    %4 = vector.shape_cast %3 : vector<16x16x11xf32> to vector<256x11xf32>
    %c0_6 = arith.constant 0 : index
    %c0_7 = arith.constant 0 : index
    %5 = vector.load %arg3[%c0_6, %c0_7] : memref<32x64xf32, #tpu.memory_space<vmem>>, vector<32x64xf32>
    %cst = arith.constant dense<0.000000e+00> : vector<16x64xf32>
    %6 = tpu.matmul %1, %5, %cst {dimension_numbers = #tpu.dot_dimension_numbers<[1], [0], [0], [1], [0, 0, 1, 1], [], []>, precision = #tpu.contract_precision<fp32>} : vector<16x32xf32>, vector<32x64xf32>, vector<16x64xf32> -> vector<16x64xf32>
    %7 = vector.extract_strided_slice %6 {offsets = [0, 0], sizes = [16, 32], strides = [1, 1]} : vector<16x64xf32> to vector<16x32xf32>
    %8 = vector.extract_strided_slice %6 {offsets = [0, 32], sizes = [16, 32], strides = [1, 1]} : vector<16x64xf32> to vector<16x32xf32>
    %c0_8 = arith.constant 0 : index
    %c0_9 = arith.constant 0 : index
    %9 = vector.load %arg4[%c0_8, %c0_9] : memref<11x64xf32, #tpu.memory_space<vmem>>, vector<11x64xf32>
    %cst_10 = arith.constant dense<0.000000e+00> : vector<256x64xf32>
    %10 = tpu.matmul %4, %9, %cst_10 {dimension_numbers = #tpu.dot_dimension_numbers<[1], [0], [0], [1], [0, 0, 1, 1], [], []>, precision = #tpu.contract_precision<fp32>} : vector<256x11xf32>, vector<11x64xf32>, vector<256x64xf32> -> vector<256x64xf32>
    %11 = vector.extract_strided_slice %10 {offsets = [0, 0], sizes = [256, 32], strides = [1, 1]} : vector<256x64xf32> to vector<256x32xf32>
    %12 = vector.extract_strided_slice %10 {offsets = [0, 32], sizes = [256, 32], strides = [1, 1]} : vector<256x64xf32> to vector<256x32xf32>
    %13 = vector.shape_cast %7 : vector<16x32xf32> to vector<16x1x32xf32>
    %14 = vector.shape_cast %7 : vector<16x32xf32> to vector<1x16x32xf32>
    %15 = vector.broadcast %13 : vector<16x1x32xf32> to vector<16x16x32xf32>
    %16 = vector.broadcast %14 : vector<1x16x32xf32> to vector<16x16x32xf32>
    %17 = arith.addf %15, %16 : vector<16x16x32xf32>
    %18 = vector.shape_cast %17 : vector<16x16x32xf32> to vector<256x32xf32>
    %19 = arith.addf %18, %11 : vector<256x32xf32>
    %c0_11 = arith.constant 0 : index
    %c0_12 = arith.constant 0 : index
    %20 = vector.load %arg5[%c0_11, %c0_12] : memref<1x32xf32, #tpu.memory_space<vmem>>, vector<1x32xf32>
    %21 = vector.broadcast %20 : vector<1x32xf32> to vector<256x32xf32>
    %22 = arith.addf %19, %21 : vector<256x32xf32>
    %cst_13 = arith.constant 0.000000e+00 : f32
    %23 = vector.broadcast %cst_13 : f32 to vector<256x32xf32>
    %24 = arith.maximumf %22, %23 : vector<256x32xf32>
    %c0_14 = arith.constant 0 : index
    %c0_15 = arith.constant 0 : index
    %25 = vector.load %arg6[%c0_14, %c0_15] : memref<32x1xf32, #tpu.memory_space<vmem>>, vector<32x1xf32>
    %cst_16 = arith.constant dense<0.000000e+00> : vector<256x1xf32>
    %26 = tpu.matmul %24, %25, %cst_16 {dimension_numbers = #tpu.dot_dimension_numbers<[1], [0], [0], [1], [0, 0, 1, 1], [], []>, precision = #tpu.contract_precision<fp32>} : vector<256x32xf32>, vector<32x1xf32>, vector<256x1xf32> -> vector<256x1xf32>
    %c0_17 = arith.constant 0 : index
    %c0_18 = arith.constant 0 : index
    %27 = memref.load %arg7[%c0_17, %c0_18] : memref<1x1xf32, #tpu.memory_space<smem>>
    %28 = vector.broadcast %27 : f32 to vector<256x1xf32>
    %29 = arith.addf %26, %28 : vector<256x1xf32>
    %30 = arith.negf %29 : vector<256x1xf32>
    %31 = math.exp %30 : vector<256x1xf32>
    %cst_19 = arith.constant 1.000000e+00 : f32
    %32 = vector.broadcast %cst_19 : f32 to vector<256x1xf32>
    %33 = arith.addf %32, %31 : vector<256x1xf32>
    %34 = arith.divf %32, %33 : vector<256x1xf32>
    %35 = vector.shape_cast %1 : vector<16x32xf32> to vector<1x16x32xf32>
    %36 = vector.shape_cast %35 : vector<1x16x32xf32> to vector<1x16x32xf32>
    %37 = vector.broadcast %36 : vector<1x16x32xf32> to vector<16x16x32xf32>
    %38 = vector.shape_cast %37 : vector<16x16x32xf32> to vector<256x32xf32>
    %39 = vector.broadcast %34 : vector<256x1xf32> to vector<256x32xf32>
    %40 = arith.mulf %39, %38 : vector<256x32xf32>
    %41 = vector.shape_cast %40 : vector<256x32xf32> to vector<16x16x32xf32>
    %cst_20 = arith.constant dense<0.000000e+00> : vector<16x32xf32>
    %42 = vector.multi_reduction <add>, %41, %cst_20 [1] : vector<16x16x32xf32> to vector<16x32xf32>
    %c0_21 = arith.constant 0 : index
    %c0_22 = arith.constant 0 : index
    %43 = vector.load %arg8[%c0_21, %c0_22] : memref<32x32xf32, #tpu.memory_space<vmem>>, vector<32x32xf32>
    %cst_23 = arith.constant dense<0.000000e+00> : vector<16x32xf32>
    %44 = tpu.matmul %42, %43, %cst_23 {dimension_numbers = #tpu.dot_dimension_numbers<[1], [0], [0], [1], [0, 0, 1, 1], [], []>, precision = #tpu.contract_precision<fp32>} : vector<16x32xf32>, vector<32x32xf32>, vector<16x32xf32> -> vector<16x32xf32>
    %45 = arith.addf %8, %44 : vector<16x32xf32>
    %46 = vector.shape_cast %45 : vector<16x32xf32> to vector<16x1x32xf32>
    %47 = vector.shape_cast %45 : vector<16x32xf32> to vector<1x16x32xf32>
    %48 = vector.broadcast %46 : vector<16x1x32xf32> to vector<16x16x32xf32>
    %49 = vector.broadcast %47 : vector<1x16x32xf32> to vector<16x16x32xf32>
    %50 = arith.addf %48, %49 : vector<16x16x32xf32>
    %51 = vector.shape_cast %50 : vector<16x16x32xf32> to vector<256x32xf32>
    %52 = arith.addf %51, %12 : vector<256x32xf32>
    %c0_24 = arith.constant 0 : index
    %c0_25 = arith.constant 0 : index
    %53 = vector.load %arg9[%c0_24, %c0_25] : memref<1x32xf32, #tpu.memory_space<vmem>>, vector<1x32xf32>
    %54 = vector.broadcast %53 : vector<1x32xf32> to vector<256x32xf32>
    %55 = arith.addf %52, %54 : vector<256x32xf32>
    %cst_26 = arith.constant 0.000000e+00 : f32
    %56 = vector.broadcast %cst_26 : f32 to vector<256x32xf32>
    %57 = arith.maximumf %55, %56 : vector<256x32xf32>
    %c0_27 = arith.constant 0 : index
    %c0_28 = arith.constant 0 : index
    %58 = vector.load %arg10[%c0_27, %c0_28] : memref<32x5xf32, #tpu.memory_space<vmem>>, vector<32x5xf32>
    %cst_29 = arith.constant dense<0.000000e+00> : vector<256x5xf32>
    %59 = tpu.matmul %57, %58, %cst_29 {dimension_numbers = #tpu.dot_dimension_numbers<[1], [0], [0], [1], [0, 0, 1, 1], [], []>, precision = #tpu.contract_precision<fp32>} : vector<256x32xf32>, vector<32x5xf32>, vector<256x5xf32> -> vector<256x5xf32>
    %c0_30 = arith.constant 0 : index
    %c0_31 = arith.constant 0 : index
    %60 = vector.load %arg11[%c0_30, %c0_31] : memref<1x5xf32, #tpu.memory_space<vmem>>, vector<1x5xf32>
    %61 = vector.broadcast %60 : vector<1x5xf32> to vector<256x5xf32>
    %62 = arith.addf %59, %61 : vector<256x5xf32>
    %c0_32 = arith.constant 0 : index
    %c0_33 = arith.constant 0 : index
    %c0_34 = arith.constant 0 : index
    %63 = vector.load %arg12[%c0_32, %c0_33, %c0_34] : memref<1x256x5xf32, #tpu.memory_space<vmem>>, vector<1x256x5xf32>
    %64 = vector.shape_cast %63 : vector<1x256x5xf32> to vector<256x5xf32>
    %65 = vector.shape_cast %62 : vector<256x5xf32> to vector<1x256x5xf32>
    tpu.vector_store %arg12[%c0_32, %c0_33, %c0_34], %65 {strides = array<i32>} : memref<1x256x5xf32, #tpu.memory_space<vmem>>, vector<1x256x5xf32>,
    return
  }
  func.func @transform_0(%arg0: i32) -> (i32, i32, i32) {
    %c0_i32 = arith.constant 0 : i32
    %c0_i32_0 = arith.constant 0 : i32
    %c0_i32_1 = arith.constant 0 : i32
    return %arg0, %c0_i32, %c0_i32_0 : i32, i32, i32
  }
  func.func @transform_1(%arg0: i32) -> (i32, i32, i32, i32) {
    %c0_i32 = arith.constant 0 : i32
    %c0_i32_0 = arith.constant 0 : i32
    %c0_i32_1 = arith.constant 0 : i32
    %c0_i32_2 = arith.constant 0 : i32
    return %arg0, %c0_i32, %c0_i32_0, %c0_i32_1 : i32, i32, i32, i32
  }
  func.func @transform_2(%arg0: i32) -> (i32, i32) {
    %c0_i32 = arith.constant 0 : i32
    %c0_i32_0 = arith.constant 0 : i32
    %c0_i32_1 = arith.constant 0 : i32
    return %c0_i32, %c0_i32_0 : i32, i32
  }
  func.func @transform_3(%arg0: i32) -> (i32, i32) {
    %c0_i32 = arith.constant 0 : i32
    %c0_i32_0 = arith.constant 0 : i32
    %c0_i32_1 = arith.constant 0 : i32
    return %c0_i32, %c0_i32_0 : i32, i32
  }
  func.func @transform_4(%arg0: i32) -> (i32, i32) {
    %c0_i32 = arith.constant 0 : i32
    %c0_i32_0 = arith.constant 0 : i32
    %c0_i32_1 = arith.constant 0 : i32
    return %c0_i32, %c0_i32_0 : i32, i32
  }
  func.func @transform_5(%arg0: i32) -> (i32, i32) {
    %c0_i32 = arith.constant 0 : i32
    %c0_i32_0 = arith.constant 0 : i32
    %c0_i32_1 = arith.constant 0 : i32
    return %c0_i32, %c0_i32_0 : i32, i32
  }
  func.func @transform_6(%arg0: i32) -> (i32, i32) {
    %c0_i32 = arith.constant 0 : i32
    %c0_i32_0 = arith.constant 0 : i32
    %c0_i32_1 = arith.constant 0 : i32
    return %c0_i32, %c0_i32_0 : i32, i32
  }
  func.func @transform_7(%arg0: i32) -> (i32, i32) {
    %c0_i32 = arith.constant 0 : i32
    %c0_i32_0 = arith.constant 0 : i32
    %c0_i32_1 = arith.constant 0 : i32
    return %c0_i32, %c0_i32_0 : i32, i32
  }
  func.func @transform_8(%arg0: i32) -> (i32, i32) {
    %c0_i32 = arith.constant 0 : i32
    %c0_i32_0 = arith.constant 0 : i32
    %c0_i32_1 = arith.constant 0 : i32
    return %c0_i32, %c0_i32_0 : i32, i32
  }
  func.func @transform_9(%arg0: i32) -> (i32, i32) {
    %c0_i32 = arith.constant 0 : i32
    %c0_i32_0 = arith.constant 0 : i32
    %c0_i32_1 = arith.constant 0 : i32
    return %c0_i32, %c0_i32_0 : i32, i32
  }
  func.func @transform_10(%arg0: i32) -> (i32, i32) {
    %c0_i32 = arith.constant 0 : i32
    %c0_i32_0 = arith.constant 0 : i32
    %c0_i32_1 = arith.constant 0 : i32
    return %c0_i32, %c0_i32_0 : i32, i32
  }
  func.func @transform_11(%arg0: i32) -> (i32, i32, i32) {
    %c0_i32 = arith.constant 0 : i32
    %c0_i32_0 = arith.constant 0 : i32
    %c0_i32_1 = arith.constant 0 : i32
    return %arg0, %c0_i32, %c0_i32_0 : i32, i32, i32
  }
}

</mosaic_0001>

<llo_original>
// kernel: tpu_custom_call.1
$region0: #{tpu_custom_call.1}
  #allocation0 [shape = 'u32[]', space=smem, size = 0x4, offset = 0x4, fixed_abs, tag = 'smem constant byte address 0x4 - core index']
  #allocation1 [shape = 'u32[72,128]{1,0:T(1,128)}', space=vmem, size = 0x9000, scoped, tag = 'internal scratch']
  #allocation2 [shape = 'f32[1,1]{1,0:T(1,128)S(6)}', space=smem, size = 0x200, scoped, tag = 'scoped memory for tpu_custom_call.1']
  %s0 = inlined_call_operand.vmem [shape: f32[2,16,32], index: 0, kind: input, shape index: {}]
  %s1 = inlined_call_operand.vmem [shape: f32[2,16,16,11], index: 1, kind: input, shape index: {}]
  %s2 = inlined_call_operand.vmem [shape: f32[32,64], index: 2, kind: input, shape index: {}]
  %s3 = inlined_call_operand.vmem [shape: f32[11,64], index: 3, kind: input, shape index: {}]
  %s4 = inlined_call_operand.vmem [shape: f32[1,32], index: 4, kind: input, shape index: {}]
  %s5 = inlined_call_operand.vmem [shape: f32[32,1], index: 5, kind: input, shape index: {}]
  %s6 = inlined_call_operand.<no memory space> [shape: f32[1,1], index: 6, kind: input, shape index: {}]
  %s7 = inlined_call_operand.vmem [shape: f32[32,32], index: 7, kind: input, shape index: {}]
  %s8 = inlined_call_operand.vmem [shape: f32[1,32], index: 8, kind: input, shape index: {}]
  %s9 = inlined_call_operand.vmem [shape: f32[32,5], index: 9, kind: input, shape index: {}]
  %s10 = inlined_call_operand.vmem [shape: f32[1,5], index: 10, kind: input, shape index: {}]
  %s11 = inlined_call_operand.vmem [shape: f32[2,256,5], index: 11, kind: output, shape index: {}]
  %s12 = sld [smem:[#allocation0]]
  $region77: #{tpu_custom_call.1} parent=0
    _
  %s14 = ssub.s32 1, %s12
  %s15 = scalar_select 0, %s14, %s12
  %16 = sst [smem:[#allocation2]] %s6
  loop: start=0, step=1, limit=4
  $region2: #{tpu_custom_call.1} parent=0 // loop_pre_header
    _
  $region3: #{tpu_custom_call.1} parent=0 // loop_header
    %s18 = sphi 0, %s22
    %p19 = scmp.ge.s32.totalorder %s18, 4
    %s28 = sphi 0, %s30
    %s31 = sphi 0, %s28
    %s32 = sphi 0, %s31
    %s48 = sphi 0, %s32
    %s54 = sphi 0, %s56
    %s57 = sphi 0, %s54
    %s58 = sphi 0, %s57
    %s74 = sphi 0, %s58
    %s78 = sphi 0, %s78
    %s80 = sphi 0, %s78
    %s81 = sphi 0, %s80
    %s95 = sphi 0, %s81
    %s99 = sphi 0, %s99
    %s101 = sphi 0, %s99
    %s102 = sphi 0, %s101
    %s116 = sphi 0, %s102
    %s120 = sphi 0, %s120
    %s122 = sphi 0, %s120
    %s123 = sphi 0, %s122
    %s137 = sphi 0, %s123
    %s141 = sphi 0, %s141
    %s143 = sphi 0, %s141
    %s144 = sphi 0, %s143
    %s158 = sphi 0, %s144
    %s162 = sphi 0, %s162
    %s164 = sphi 0, %s162
    %s165 = sphi 0, %s164
    %s179 = sphi 0, %s165
    %s183 = sphi 0, %s183
    %s185 = sphi 0, %s183
    %s186 = sphi 0, %s185
    %s200 = sphi 0, %s186
    %s204 = sphi 0, %s204
    %s206 = sphi 0, %s204
    %s207 = sphi 0, %s206
    %s221 = sphi 0, %s207
    %s225 = sphi 0, %s225
    %s227 = sphi 0, %s225
    %s228 = sphi 0, %s227
    %s242 = sphi 0, %s228
    %s246 = sphi 0, %s246
    %s248 = sphi 0, %s246
    %s249 = sphi 0, %s248
    %s263 = sphi 0, %s249
    %s269 = sphi 0, %s271
    %s272 = sphi 0, %s269
    %s273 = sphi 0, %s272
    %s289 = sphi 0, %s273
  $region4: #{tpu_custom_call.1} parent=0 // loop_header_branch
    %21 = sbr.rel (%p19) target = $region8
  $region5: #{tpu_custom_call.1} parent=0 // loop_body
    %s23 = ssub.s32 %s18, 1
    %s24 = ssub.s32 %s18, 2
    %s25 = sadd.s32 %s18, 1
    %s26 = ssub.s32 %s18, %s25
    %p27 = scmp.eq.s32.totalorder %s26, 0
    %s29 = sadd.s32 %s28, 1
    %s30 = scalar_select %p27, %s28, %s29
    %p33 = pneg %p27
    %p34 = scmp.eq.s32.totalorder %s18, 1
    %p35 = por %p33, %p34
    %p36 = scmp.ne.s32.totalorder %s28, %s31
    %p37 = scmp.eq.s32.totalorder %s18, 0
    %p38 = por %p36, %p37
    %p39 = scmp.ne.s32.totalorder %s28, %s31
    %p40 = scmp.eq.s32.totalorder %s23, 1
    %p41 = por %p39, %p40
    %p42 = scmp.ne.s32.totalorder %s31, %s32
    %p43 = scmp.eq.s32.totalorder %s23, 0
    %p44 = por %p42, %p43
    %p45 = scmp.ne.s32.totalorder %s31, %s32
    %p46 = scmp.eq.s32.totalorder %s24, 1
    %p47 = por %p45, %p46
    %p49 = scmp.ne.s32.totalorder %s32, %s48
    %p50 = scmp.eq.s32.totalorder %s24, 0
    %p51 = por %p49, %p50
    %s52 = ssub.s32 %s18, %s25
    %p53 = scmp.eq.s32.totalorder %s52, 0
    %s55 = sadd.s32 %s54, 1
    %s56 = scalar_select %p53, %s54, %s55
    %p59 = pneg %p53
    %p60 = scmp.eq.s32.totalorder %s18, 1
    %p61 = por %p59, %p60
    %p62 = scmp.ne.s32.totalorder %s54, %s57
    %p63 = scmp.eq.s32.totalorder %s18, 0
    %p64 = por %p62, %p63
    %p65 = scmp.ne.s32.totalorder %s54, %s57
    %p66 = scmp.eq.s32.totalorder %s23, 1
    %p67 = por %p65, %p66
    %p68 = scmp.ne.s32.totalorder %s57, %s58
    %p69 = scmp.eq.s32.totalorder %s23, 0
    %p70 = por %p68, %p69
    %p71 = scmp.ne.s32.totalorder %s57, %s58
    %p72 = scmp.eq.s32.totalorder %s24, 1
    %p73 = por %p71, %p72
    %p75 = scmp.ne.s32.totalorder %s58, %s74
    %p76 = scmp.eq.s32.totalorder %s24, 0
    %p77 = por %p75, %p76
    %s79 = sadd.s32 %s78, 1
    %p82 = scmp.eq.s32.totalorder %s18, 1
    %p83 = scmp.ne.s32.totalorder %s78, %s80
    %p84 = scmp.eq.s32.totalorder %s18, 0
    %p85 = por %p83, %p84
    %p86 = scmp.ne.s32.totalorder %s78, %s80
    %p87 = scmp.eq.s32.totalorder %s23, 1
    %p88 = por %p86, %p87
    %p89 = scmp.ne.s32.totalorder %s80, %s81
    %p90 = scmp.eq.s32.totalorder %s23, 0
    %p91 = por %p89, %p90
    %p92 = scmp.ne.s32.totalorder %s80, %s81
    %p93 = scmp.eq.s32.totalorder %s24, 1
    %p94 = por %p92, %p93
    %p96 = scmp.ne.s32.totalorder %s81, %s95
    %p97 = scmp.eq.s32.totalorder %s24, 0
    %p98 = por %p96, %p97
    %s100 = sadd.s32 %s99, 1
    %p103 = scmp.eq.s32.totalorder %s18, 1
    %p104 = scmp.ne.s32.totalorder %s99, %s101
    %p105 = scmp.eq.s32.totalorder %s18, 0
    %p106 = por %p104, %p105
    %p107 = scmp.ne.s32.totalorder %s99, %s101
    %p108 = scmp.eq.s32.totalorder %s23, 1
    %p109 = por %p107, %p108
    %p110 = scmp.ne.s32.totalorder %s101, %s102
    %p111 = scmp.eq.s32.totalorder %s23, 0
    %p112 = por %p110, %p111
    %p113 = scmp.ne.s32.totalorder %s101, %s102
    %p114 = scmp.eq.s32.totalorder %s24, 1
    %p115 = por %p113, %p114
    %p117 = scmp.ne.s32.totalorder %s102, %s116
    %p118 = scmp.eq.s32.totalorder %s24, 0
    %p119 = por %p117, %p118
    %s121 = sadd.s32 %s120, 1
    %p124 = scmp.eq.s32.totalorder %s18, 1
    %p125 = scmp.ne.s32.totalorder %s120, %s122
    %p126 = scmp.eq.s32.totalorder %s18, 0
    %p127 = por %p125, %p126
    %p128 = scmp.ne.s32.totalorder %s120, %s122
    %p129 = scmp.eq.s32.totalorder %s23, 1
    %p130 = por %p128, %p129
    %p131 = scmp.ne.s32.totalorder %s122, %s123
    %p132 = scmp.eq.s32.totalorder %s23, 0
    %p133 = por %p131, %p132
    %p134 = scmp.ne.s32.totalorder %s122, %s123
    %p135 = scmp.eq.s32.totalorder %s24, 1
    %p136 = por %p134, %p135
    %p138 = scmp.ne.s32.totalorder %s123, %s137
    %p139 = scmp.eq.s32.totalorder %s24, 0
    %p140 = por %p138, %p139
    %s142 = sadd.s32 %s141, 1
    %p145 = scmp.eq.s32.totalorder %s18, 1
    %p146 = scmp.ne.s32.totalorder %s141, %s143
    %p147 = scmp.eq.s32.totalorder %s18, 0
    %p148 = por %p146, %p147
    %p149 = scmp.ne.s32.totalorder %s141, %s143
    %p150 = scmp.eq.s32.totalorder %s23, 1
    %p151 = por %p149, %p150
    %p152 = scmp.ne.s32.totalorder %s143, %s144
    %p153 = scmp.eq.s32.totalorder %s23, 0
    %p154 = por %p152, %p153
    %p155 = scmp.ne.s32.totalorder %s143, %s144
    %p156 = scmp.eq.s32.totalorder %s24, 1
    %p157 = por %p155, %p156
    %p159 = scmp.ne.s32.totalorder %s144, %s158
    %p160 = scmp.eq.s32.totalorder %s24, 0
    %p161 = por %p159, %p160
    %s163 = sadd.s32 %s162, 1
    %p166 = scmp.eq.s32.totalorder %s18, 1
    %p167 = scmp.ne.s32.totalorder %s162, %s164
    %p168 = scmp.eq.s32.totalorder %s18, 0
    %p169 = por %p167, %p168
    %p170 = scmp.ne.s32.totalorder %s162, %s164
    %p171 = scmp.eq.s32.totalorder %s23, 1
    %p172 = por %p170, %p171
    %p173 = scmp.ne.s32.totalorder %s164, %s165
    %p174 = scmp.eq.s32.totalorder %s23, 0
    %p175 = por %p173, %p174
    %p176 = scmp.ne.s32.totalorder %s164, %s165
    %p177 = scmp.eq.s32.totalorder %s24, 1
    %p178 = por %p176, %p177
    %p180 = scmp.ne.s32.totalorder %s165, %s179
    %p181 = scmp.eq.s32.totalorder %s24, 0
    %p182 = por %p180, %p181
    %s184 = sadd.s32 %s183, 1
    %p187 = scmp.eq.s32.totalorder %s18, 1
    %p188 = scmp.ne.s32.totalorder %s183, %s185
    %p189 = scmp.eq.s32.totalorder %s18, 0
    %p190 = por %p188, %p189
    %p191 = scmp.ne.s32.totalorder %s183, %s185
    %p192 = scmp.eq.s32.totalorder %s23, 1
    %p193 = por %p191, %p192
    %p194 = scmp.ne.s32.totalorder %s185, %s186
    %p195 = scmp.eq.s32.totalorder %s23, 0
    %p196 = por %p194, %p195
    %p197 = scmp.ne.s32.totalorder %s185, %s186
    %p198 = scmp.eq.s32.totalorder %s24, 1
    %p199 = por %p197, %p198
    %p201 = scmp.ne.s32.totalorder %s186, %s200
    %p202 = scmp.eq.s32.totalorder %s24, 0
    %p203 = por %p201, %p202
    %s205 = sadd.s32 %s204, 1
    %p208 = scmp.eq.s32.totalorder %s18, 1
    %p209 = scmp.ne.s32.totalorder %s204, %s206
    %p210 = scmp.eq.s32.totalorder %s18, 0
    %p211 = por %p209, %p210
    %p212 = scmp.ne.s32.totalorder %s204, %s206
    %p213 = scmp.eq.s32.totalorder %s23, 1
    %p214 = por %p212, %p213
    %p215 = scmp.ne.s32.totalorder %s206, %s207
    %p216 = scmp.eq.s32.totalorder %s23, 0
    %p217 = por %p215, %p216
    %p218 = scmp.ne.s32.totalorder %s206, %s207
    %p219 = scmp.eq.s32.totalorder %s24, 1
    %p220 = por %p218, %p219
    %p222 = scmp.ne.s32.totalorder %s207, %s221
    %p223 = scmp.eq.s32.totalorder %s24, 0
    %p224 = por %p222, %p223
    %s226 = sadd.s32 %s225, 1
    %p229 = scmp.eq.s32.totalorder %s18, 1
    %p230 = scmp.ne.s32.totalorder %s225, %s227
    %p231 = scmp.eq.s32.totalorder %s18, 0
    %p232 = por %p230, %p231
    %p233 = scmp.ne.s32.totalorder %s225, %s227
    %p234 = scmp.eq.s32.totalorder %s23, 1
    %p235 = por %p233, %p234
    %p236 = scmp.ne.s32.totalorder %s227, %s228
    %p237 = scmp.eq.s32.totalorder %s23, 0
    %p238 = por %p236, %p237
    %p239 = scmp.ne.s32.totalorder %s227, %s228
    %p240 = scmp.eq.s32.totalorder %s24, 1
    %p241 = por %p239, %p240
    %p243 = scmp.ne.s32.totalorder %s228, %s242
    %p244 = scmp.eq.s32.totalorder %s24, 0
    %p245 = por %p243, %p244
    %s247 = sadd.s32 %s246, 1
    %p250 = scmp.eq.s32.totalorder %s18, 1
    %p251 = scmp.ne.s32.totalorder %s246, %s248
    %p252 = scmp.eq.s32.totalorder %s18, 0
    %p253 = por %p251, %p252
    %p254 = scmp.ne.s32.totalorder %s246, %s248
    %p255 = scmp.eq.s32.totalorder %s23, 1
    %p256 = por %p254, %p255
    %p257 = scmp.ne.s32.totalorder %s248, %s249
    %p258 = scmp.eq.s32.totalorder %s23, 0
    %p259 = por %p257, %p258
    %p260 = scmp.ne.s32.totalorder %s248, %s249
    %p261 = scmp.eq.s32.totalorder %s24, 1
    %p262 = por %p260, %p261
    %p264 = scmp.ne.s32.totalorder %s249, %s263
    %p265 = scmp.eq.s32.totalorder %s24, 0
    %p266 = por %p264, %p265
    %s267 = ssub.s32 %s18, %s25
    %p268 = scmp.eq.s32.totalorder %s267, 0
    %s270 = sadd.s32 %s269, 1
    %s271 = scalar_select %p268, %s269, %s270
    %p274 = pneg %p268
    %p275 = scmp.eq.s32.totalorder %s18, 1
    %p276 = por %p274, %p275
    %p277 = scmp.ne.s32.totalorder %s269, %s272
    %p278 = scmp.eq.s32.totalorder %s18, 0
    %p279 = por %p277, %p278
    %p280 = scmp.ne.s32.totalorder %s269, %s272
    %p281 = scmp.eq.s32.totalorder %s23, 1
    %p282 = por %p280, %p281
    %p283 = scmp.ne.s32.totalorder %s272, %s273
    %p284 = scmp.eq.s32.totalorder %s23, 0
    %p285 = por %p283, %p284
    %p286 = scmp.ne.s32.totalorder %s272, %s273
    %p287 = scmp.eq.s32.totalorder %s24, 1
    %p288 = por %p286, %p287
    %p290 = scmp.ne.s32.totalorder %s273, %s289
    %p291 = scmp.eq.s32.totalorder %s24, 0
    %p292 = por %p290, %p291
    %p293 = scmp.le.s32.totalorder 1, %s18
    %p294 = scmp.lt.s32.totalorder %s18, 3
    %p295 = pnand %p293, %p294
    %p296 = pneg %p295
    // Predicated region
    $region9: #{tpu_custom_call.1} parent=5 // pred_check
      _
    $region10: #{tpu_custom_call.1} parent=5 // pred_check_branch
      %298 = sbr.rel (%p295) target = $region12
    $region11: #{tpu_custom_call.1} parent=5 // pred_region
      %s299 = ssub.s32 %s18, 1
      // Predicated region
      $region13: #{tpu_custom_call.1} parent=11 // pred_check
        %p300 = pneg %p91
      $region14: #{tpu_custom_call.1} parent=11 // pred_check_branch
        %302 = sbr.rel (%p300) target = $region16
      $region15: #{tpu_custom_call.1} parent=11 // pred_region
        _
      $region16: #{tpu_custom_call.1} parent=11 // pred_fallthru
        _
      // Predicated region
      $region17: #{tpu_custom_call.1} parent=11 // pred_check
        %p303 = pneg %p112
      $region18: #{tpu_custom_call.1} parent=11 // pred_check_branch
        %305 = sbr.rel (%p303) target = $region20
      $region19: #{tpu_custom_call.1} parent=11 // pred_region
        _
      $region20: #{tpu_custom_call.1} parent=11 // pred_fallthru
        _
      // Predicated region
      $region21: #{tpu_custom_call.1} parent=11 // pred_check
        %p306 = pneg %p133
      $region22: #{tpu_custom_call.1} parent=11 // pred_check_branch
        %308 = sbr.rel (%p306) target = $region24
      $region23: #{tpu_custom_call.1} parent=11 // pred_region
        _
      $region24: #{tpu_custom_call.1} parent=11 // pred_fallthru
        _
      // Predicated region
      $region25: #{tpu_custom_call.1} parent=11 // pred_check
        %p309 = pneg %p154
      $region26: #{tpu_custom_call.1} parent=11 // pred_check_branch
        %311 = sbr.rel (%p309) target = $region28
      $region27: #{tpu_custom_call.1} parent=11 // pred_region
        _
      $region28: #{tpu_custom_call.1} parent=11 // pred_fallthru
        _
      // Predicated region
      $region29: #{tpu_custom_call.1} parent=11 // pred_check
        %p312 = pneg %p175
      $region30: #{tpu_custom_call.1} parent=11 // pred_check_branch
        %314 = sbr.rel (%p312) target = $region32
      $region31: #{tpu_custom_call.1} parent=11 // pred_region
        _
      $region32: #{tpu_custom_call.1} parent=11 // pred_fallthru
        _
      // Predicated region
      $region33: #{tpu_custom_call.1} parent=11 // pred_check
        %p315 = pneg %p196
      $region34: #{tpu_custom_call.1} parent=11 // pred_check_branch
        %317 = sbr.rel (%p315) target = $region36
      $region35: #{tpu_custom_call.1} parent=11 // pred_region
        _
      $region36: #{tpu_custom_call.1} parent=11 // pred_fallthru
        _
      // Predicated region
      $region37: #{tpu_custom_call.1} parent=11 // pred_check
        %p318 = pneg %p217
      $region38: #{tpu_custom_call.1} parent=11 // pred_check_branch
        %320 = sbr.rel (%p318) target = $region40
      $region39: #{tpu_custom_call.1} parent=11 // pred_region
        _
      $region40: #{tpu_custom_call.1} parent=11 // pred_fallthru
        _
      // Predicated region
      $region41: #{tpu_custom_call.1} parent=11 // pred_check
        %p321 = pneg %p238
      $region42: #{tpu_custom_call.1} parent=11 // pred_check_branch
        %323 = sbr.rel (%p321) target = $region44
      $region43: #{tpu_custom_call.1} parent=11 // pred_region
        _
      $region44: #{tpu_custom_call.1} parent=11 // pred_fallthru
        _
      // Predicated region
      $region45: #{tpu_custom_call.1} parent=11 // pred_check
        %p324 = pneg %p259
      $region46: #{tpu_custom_call.1} parent=11 // pred_check_branch
        %326 = sbr.rel (%p324) target = $region48
      $region47: #{tpu_custom_call.1} parent=11 // pred_region
        _
      $region48: #{tpu_custom_call.1} parent=11 // pred_fallthru
        _
    $region12: #{tpu_custom_call.1} parent=5 // pred_fallthru
      _
    %p327 = scmp.lt.s32.totalorder %s18, 2
    // Predicated region
    $region49: #{tpu_custom_call.1} parent=5 // pred_check
      %p328 = pneg %p327
    $region50: #{tpu_custom_call.1} parent=5 // pred_check_branch
      %330 = sbr.rel (%p328) target = $region52
    $region51: #{tpu_custom_call.1} parent=5 // pred_region
      // Predicated region
      $region53: #{tpu_custom_call.1} parent=51 // pred_check
        %p331 = pneg %p38
      $region54: #{tpu_custom_call.1} parent=51 // pred_check_branch
        %333 = sbr.rel (%p331) target = $region56
      $region55: #{tpu_custom_call.1} parent=51 // pred_region
        %p334 = scmp.lt.s32.totalorder %s18, 1
        %s335 = scalar_select %p334, %s18, 1
        %s336 = smul.addr %s335, 2
        %s337 = smul.addr %s336, 8
        %s338 = scalar_lea.vmem %s0, %s337
      $region56: #{tpu_custom_call.1} parent=51 // pred_fallthru
        _
      // Predicated region
      $region57: #{tpu_custom_call.1} parent=51 // pred_check
        %p339 = pneg %p64
      $region58: #{tpu_custom_call.1} parent=51 // pred_check_branch
        %341 = sbr.rel (%p339) target = $region60
      $region59: #{tpu_custom_call.1} parent=51 // pred_region
        %p342 = scmp.lt.s32.totalorder %s18, 1
        %s343 = scalar_select %p342, %s18, 1
        %s344 = smul.addr %s343, 32
        %s345 = smul.addr %s344, 8
        %s346 = scalar_lea.vmem %s1, %s345
      $region60: #{tpu_custom_call.1} parent=51 // pred_fallthru
        _
    $region52: #{tpu_custom_call.1} parent=5 // pred_fallthru
      _
    %p347 = scmp.le.s32.totalorder 1, %s18
    %p348 = scmp.lt.s32.totalorder %s18, 3
    %p349 = pnand %p347, %p348
    %p350 = pneg %p349
    // Predicated region
    $region61: #{tpu_custom_call.1} parent=5 // pred_check
      _
    $region62: #{tpu_custom_call.1} parent=5 // pred_check_branch
      %352 = sbr.rel (%p349) target = $region64
    $region63: #{tpu_custom_call.1} parent=5 // pred_region
      %s353 = ssub.s32 %s18, 1
      %p354 = scmp.lt.s32.totalorder %s23, 1
      %s355 = scalar_select %p354, %s23, 1
      %s356 = smul.addr %s355, 2
      %s357 = smul.addr %s356, 8
      %s358 = scalar_lea.vmem %s0, %s357
      %p359 = pneg %p44
      %p360 = pneg %p41
      %p361 = scmp.lt.s32.totalorder %s23, 1
      %s362 = scalar_select %p361, %s23, 1
      %s363 = smul.addr %s362, 32
      %s364 = smul.addr %s363, 8
      %s365 = scalar_lea.vmem %s1, %s364
      %p366 = pneg %p70
      %p367 = pneg %p67
      %p368 = pneg %p91
      %p369 = pneg %p88
      %p370 = pneg %p112
      %p371 = pneg %p109
      %p372 = pneg %p133
      %p373 = pneg %p130
      %p374 = pneg %p154
      %p375 = pneg %p151
      %p376 = pneg %p175
      %p377 = pneg %p172
      %p378 = pneg %p196
      %p379 = pneg %p193
      %p380 = pneg %p217
      %p381 = pneg %p214
      %p382 = pneg %p238
      %p383 = pneg %p235
      %p384 = pneg %p259
      %p385 = pneg %p256
      %p386 = pneg %p285
      %p387 = pneg %p282
      %p388 = scmp.lt.s32.totalorder %s23, 1
      %s389 = scalar_select %p388, %s23, 1
      %s390 = smul.addr %s389, 32
      %s391 = smul.addr %s390, 8
      %s392 = scalar_lea.vmem %s11, %s391
      %p393 = scmp.lt.s32.totalorder %s23, 1
      %s394 = scalar_select %p393, %s23, 1
      %s395 = smul.addr %s394, 2
      %s396 = smul.addr %s395, 8
      %s397 = scalar_lea.vmem %s0, %s396
      %p398 = scmp.lt.s32.totalorder %s23, 1
      %s399 = scalar_select %p398, %s23, 1
      %s400 = smul.addr %s399, 32
      %s401 = smul.addr %s400, 8
      %s402 = scalar_lea.vmem %s1, %s401
      %p403 = scmp.lt.s32.totalorder %s23, 1
      %s404 = scalar_select %p403, %s23, 1
      %s405 = smul.addr %s404, 32
      %s406 = smul.addr %s405, 8
      %s407 = scalar_lea.vmem %s11, %s406
      %v408 = vld [vmem:[%s397] sm:$0xff]
      %v409 = vld [vmem:[%s397 + $0x8] sm:$0xff]
      %v410 = vld [vmem:[%s402] sm:$0xff]
      %v411 = vld [vmem:[%s402 + $0x8] sm:$0xff]
      %v412 = vld [vmem:[%s402 + $0x10] sm:$0xff]
      %v413 = vld [vmem:[%s402 + $0x18] sm:$0xff]
      %v414 = vld [vmem:[%s402 + $0x20] sm:$0xff]
      %v415 = vld [vmem:[%s402 + $0x28] sm:$0xff]
      %v416 = vld [vmem:[%s402 + $0x30] sm:$0xff]
      %v417 = vld [vmem:[%s402 + $0x38] sm:$0xff]
      %v418 = vld [vmem:[%s402 + $0x40] sm:$0xff]
      %v419 = vld [vmem:[%s402 + $0x48] sm:$0xff]
      %v420 = vld [vmem:[%s402 + $0x50] sm:$0xff]
      %v421 = vld [vmem:[%s402 + $0x58] sm:$0xff]
      %v422 = vld [vmem:[%s402 + $0x60] sm:$0xff]
      %v423 = vld [vmem:[%s402 + $0x68] sm:$0xff]
      %v424 = vld [vmem:[%s402 + $0x70] sm:$0xff]
      %v425 = vld [vmem:[%s402 + $0x78] sm:$0xff]
      %v426 = vld [vmem:[%s402 + $0x80] sm:$0xff]
      %v427 = vld [vmem:[%s402 + $0x88] sm:$0xff]
      %v428 = vld [vmem:[%s402 + $0x90] sm:$0xff]
      %v429 = vld [vmem:[%s402 + $0x98] sm:$0xff]
      %v430 = vld [vmem:[%s402 + $0xa0] sm:$0xff]
      %v431 = vld [vmem:[%s402 + $0xa8] sm:$0xff]
      %v432 = vld [vmem:[%s402 + $0xb0] sm:$0xff]
      %v433 = vld [vmem:[%s402 + $0xb8] sm:$0xff]
      %v434 = vld [vmem:[%s402 + $0xc0] sm:$0xff]
      %v435 = vld [vmem:[%s402 + $0xc8] sm:$0xff]
      %v436 = vld [vmem:[%s402 + $0xd0] sm:$0xff]
      %v437 = vld [vmem:[%s402 + $0xd8] sm:$0xff]
      %v438 = vld [vmem:[%s402 + $0xe0] sm:$0xff]
      %v439 = vld [vmem:[%s402 + $0xe8] sm:$0xff]
      %v440 = vld [vmem:[%s402 + $0xf0] sm:$0xff]
      %v441 = vld [vmem:[%s402 + $0xf8] sm:$0xff]
      %v442 = vld [vmem:[%s2] sm:$0xff]
      %v443 = vld [vmem:[%s2 + $0x8] sm:$0xff]
      %v444 = vld [vmem:[%s2 + $0x10] sm:$0xff]
      %v445 = vld [vmem:[%s2 + $0x18] sm:$0xff]
      %vm446 = vcmask 261120
      %v448 = vsel %vm446, %v408, 0
      %v451 = vsel %vm446, %v409, 0
      %453 = vmatpush.msra.mxu0 0.0
      %454 = vmatpush.msra.mxu0 0.0
      %455 = vmatpush.msra.mxu0 0.0
      %456 = vmatpush.msra.mxu0 0.0
      %457 = vmatpush.msra.mxu0 0.0
      %458 = vmatpush.msra.mxu0 0.0
      %459 = vmatpush.msra.mxu0 0.0
      %460 = vmatpush.msra.mxu0 0.0
      %461 = vmatpush.msra.mxu0 0.0
      %462 = vmatpush.msra.mxu0 0.0
      %463 = vmatpush.msra.mxu0 0.0
      %464 = vmatpush.msra.mxu0 0.0
      %v465 = vand.u32 %v445, 4294901760
      %466 = vmatpush.msra.mxu0 %v465
      %v467 = vand.u32 %v444, 4294901760
      %468 = vmatpush.msra.mxu0 %v467
      %v469 = vand.u32 %v443, 4294901760
      %470 = vmatpush.msra.mxu0 %v469
      %v471 = vand.u32 %v442, 4294901760
      %472 = vmatpush.msra.mxu0 %v471
      %v473 = vand.u32 %v448, 4294901760
      %v474 = vsub.f32 %v448, %v473
      %v475 = vand.u32 %v474, 4294901760
      %v476 = vsub.f32 %v474, %v475
      %v477 = vand.u32 %v476, 4294901760
      %478 = vmatmul.f32.gmra.mxu0 %v477
      %v479 = vpop.f32.mrf.mxu0
      %v480 = vadd.f32 0.0, %v479
      %v481 = vand.u32 %v451, 4294901760
      %v482 = vsub.f32 %v451, %v481
      %v483 = vand.u32 %v482, 4294901760
      %v484 = vsub.f32 %v482, %v483
      %v485 = vand.u32 %v484, 4294901760
      %486 = vmatmul.f32.gmra.mxu0 %v485
      %v487 = vpop.f32.mrf.mxu0
      %v488 = vadd.f32 0.0, %v487
      %489 = vdwg.mxu0
      %490 = vmatpush.msra.mxu0 0.0
      %491 = vmatpush.msra.mxu0 0.0
      %492 = vmatpush.msra.mxu0 0.0
      %493 = vmatpush.msra.mxu0 0.0
      %494 = vmatpush.msra.mxu0 0.0
      %495 = vmatpush.msra.mxu0 0.0
      %496 = vmatpush.msra.mxu0 0.0
      %497 = vmatpush.msra.mxu0 0.0
      %498 = vmatpush.msra.mxu0 0.0
      %499 = vmatpush.msra.mxu0 0.0
      %500 = vmatpush.msra.mxu0 0.0
      %501 = vmatpush.msra.mxu0 0.0
      %v502 = vand.u32 %v445, 4294901760
      %v503 = vsub.f32 %v445, %v502
      %v504 = vand.u32 %v503, 4294901760
      %v505 = vsub.f32 %v503, %v504
      %v506 = vand.u32 %v505, 4294901760
      %507 = vmatpush.msra.mxu0 %v506
      %v508 = vand.u32 %v444, 4294901760
      %v509 = vsub.f32 %v444, %v508
      %v510 = vand.u32 %v509, 4294901760
      %v511 = vsub.f32 %v509, %v510
      %v512 = vand.u32 %v511, 4294901760
      %513 = vmatpush.msra.mxu0 %v512
      %v514 = vand.u32 %v443, 4294901760
      %v515 = vsub.f32 %v443, %v514
      %v516 = vand.u32 %v515, 4294901760
      %v517 = vsub.f32 %v515, %v516
      %v518 = vand.u32 %v517, 4294901760
      %519 = vmatpush.msra.mxu0 %v518
      %v520 = vand.u32 %v442, 4294901760
      %v521 = vsub.f32 %v442, %v520
      %v522 = vand.u32 %v521, 4294901760
      %v523 = vsub.f32 %v521, %v522
      %v524 = vand.u32 %v523, 4294901760
      %525 = vmatpush.msra.mxu0 %v524
      %v526 = vand.u32 %v448, 4294901760
      %527 = vmatmul.f32.gmra.mxu0 %v526
      %v528 = vpop.f32.mrf.mxu0
      %v529 = vadd.f32 %v480, %v528
      %v530 = vand.u32 %v451, 4294901760
      %531 = vmatmul.f32.gmra.mxu0 %v530
      %v532 = vpop.f32.mrf.mxu0
      %v533 = vadd.f32 %v488, %v532
      %534 = vdwg.mxu0
      %535 = vmatpush.msra.mxu0 0.0
      %536 = vmatpush.msra.mxu0 0.0
      %537 = vmatpush.msra.mxu0 0.0
      %538 = vmatpush.msra.mxu0 0.0
      %539 = vmatpush.msra.mxu0 0.0
      %540 = vmatpush.msra.mxu0 0.0
      %541 = vmatpush.msra.mxu0 0.0
      %542 = vmatpush.msra.mxu0 0.0
      %543 = vmatpush.msra.mxu0 0.0
      %544 = vmatpush.msra.mxu0 0.0
      %545 = vmatpush.msra.mxu0 0.0
      %546 = vmatpush.msra.mxu0 0.0
      %v547 = vand.u32 %v445, 4294901760
      %v548 = vsub.f32 %v445, %v547
      %549 = vmatpush.msra.mxu0 %v548
      %v550 = vand.u32 %v444, 4294901760
      %v551 = vsub.f32 %v444, %v550
      %552 = vmatpush.msra.mxu0 %v551
      %v553 = vand.u32 %v443, 4294901760
      %v554 = vsub.f32 %v443, %v553
      %555 = vmatpush.msra.mxu0 %v554
      %v556 = vand.u32 %v442, 4294901760
      %v557 = vsub.f32 %v442, %v556
      %558 = vmatpush.msra.mxu0 %v557
      %v559 = vand.u32 %v448, 4294901760
      %v560 = vsub.f32 %v448, %v559
      %561 = vmatmul.f32.gmra.mxu0 %v560
      %v562 = vpop.f32.mrf.mxu0
      %v563 = vadd.f32 %v529, %v562
      %v564 = vand.u32 %v451, 4294901760
      %v565 = vsub.f32 %v451, %v564
      %566 = vmatmul.f32.gmra.mxu0 %v565
      %v567 = vpop.f32.mrf.mxu0
      %v568 = vadd.f32 %v533, %v567
      %569 = vdwg.mxu0
      %570 = vmatpush.msra.mxu0 0.0
      %571 = vmatpush.msra.mxu0 0.0
      %572 = vmatpush.msra.mxu0 0.0
      %573 = vmatpush.msra.mxu0 0.0
      %574 = vmatpush.msra.mxu0 0.0
      %575 = vmatpush.msra.mxu0 0.0
      %576 = vmatpush.msra.mxu0 0.0
      %577 = vmatpush.msra.mxu0 0.0
      %578 = vmatpush.msra.mxu0 0.0
      %579 = vmatpush.msra.mxu0 0.0
      %580 = vmatpush.msra.mxu0 0.0
      %581 = vmatpush.msra.mxu0 0.0
      %v582 = vand.u32 %v445, 4294901760
      %583 = vmatpush.msra.mxu0 %v582
      %v584 = vand.u32 %v444, 4294901760
      %585 = vmatpush.msra.mxu0 %v584
      %v586 = vand.u32 %v443, 4294901760
      %587 = vmatpush.msra.mxu0 %v586
      %v588 = vand.u32 %v442, 4294901760
      %589 = vmatpush.msra.mxu0 %v588
      %v590 = vand.u32 %v448, 4294901760
      %v591 = vsub.f32 %v448, %v590
      %v592 = vand.u32 %v591, 4294901760
      %593 = vmatmul.f32.gmra.mxu0 %v592
      %v594 = vpop.f32.mrf.mxu0
      %v595 = vadd.f32 %v563, %v594
      %v596 = vand.u32 %v451, 4294901760
      %v597 = vsub.f32 %v451, %v596
      %v598 = vand.u32 %v597, 4294901760
      %599 = vmatmul.f32.gmra.mxu0 %v598
      %v600 = vpop.f32.mrf.mxu0
      %v601 = vadd.f32 %v568, %v600
      %602 = vdwg.mxu0
      %603 = vmatpush.msra.mxu0 0.0
      %604 = vmatpush.msra.mxu0 0.0
      %605 = vmatpush.msra.mxu0 0.0
      %606 = vmatpush.msra.mxu0 0.0
      %607 = vmatpush.msra.mxu0 0.0
      %608 = vmatpush.msra.mxu0 0.0
      %609 = vmatpush.msra.mxu0 0.0
      %610 = vmatpush.msra.mxu0 0.0
      %611 = vmatpush.msra.mxu0 0.0
      %612 = vmatpush.msra.mxu0 0.0
      %613 = vmatpush.msra.mxu0 0.0
      %614 = vmatpush.msra.mxu0 0.0
      %v615 = vand.u32 %v445, 4294901760
      %v616 = vsub.f32 %v445, %v615
      %v617 = vand.u32 %v616, 4294901760
      %618 = vmatpush.msra.mxu0 %v617
      %v619 = vand.u32 %v444, 4294901760
      %v620 = vsub.f32 %v444, %v619
      %v621 = vand.u32 %v620, 4294901760
      %622 = vmatpush.msra.mxu0 %v621
      %v623 = vand.u32 %v443, 4294901760
      %v624 = vsub.f32 %v443, %v623
      %v625 = vand.u32 %v624, 4294901760
      %626 = vmatpush.msra.mxu0 %v625
      %v627 = vand.u32 %v442, 4294901760
      %v628 = vsub.f32 %v442, %v627
      %v629 = vand.u32 %v628, 4294901760
      %630 = vmatpush.msra.mxu0 %v629
      %v631 = vand.u32 %v448, 4294901760
      %632 = vmatmul.f32.gmra.mxu0 %v631
      %v633 = vpop.f32.mrf.mxu0
      %v634 = vadd.f32 %v595, %v633
      %v635 = vand.u32 %v451, 4294901760
      %636 = vmatmul.f32.gmra.mxu0 %v635
      %v637 = vpop.f32.mrf.mxu0
      %v638 = vadd.f32 %v601, %v637
      %639 = vdwg.mxu0
      %640 = vmatpush.msra.mxu0 0.0
      %641 = vmatpush.msra.mxu0 0.0
      %642 = vmatpush.msra.mxu0 0.0
      %643 = vmatpush.msra.mxu0 0.0
      %644 = vmatpush.msra.mxu0 0.0
      %645 = vmatpush.msra.mxu0 0.0
      %646 = vmatpush.msra.mxu0 0.0
      %647 = vmatpush.msra.mxu0 0.0
      %648 = vmatpush.msra.mxu0 0.0
      %649 = vmatpush.msra.mxu0 0.0
      %650 = vmatpush.msra.mxu0 0.0
      %651 = vmatpush.msra.mxu0 0.0
      %v652 = vand.u32 %v445, 4294901760
      %653 = vmatpush.msra.mxu0 %v652
      %v654 = vand.u32 %v444, 4294901760
      %655 = vmatpush.msra.mxu0 %v654
      %v656 = vand.u32 %v443, 4294901760
      %657 = vmatpush.msra.mxu0 %v656
      %v658 = vand.u32 %v442, 4294901760
      %659 = vmatpush.msra.mxu0 %v658
      %v660 = vand.u32 %v448, 4294901760
      %661 = vmatmul.f32.gmra.mxu0 %v660
      %v662 = vpop.f32.mrf.mxu0
      %v663 = vadd.f32 %v634, %v662
      %v664 = vand.u32 %v451, 4294901760
      %665 = vmatmul.f32.gmra.mxu0 %v664
      %v666 = vpop.f32.mrf.mxu0
      %v667 = vadd.f32 %v638, %v666
      %668 = vdwg.mxu0
      %v669 = vld [vmem:[%s3] sm:$0xff]
      %v670 = vld [vmem:[%s3 + $0x8] sm:$0x7]
      %vm671 = vcmask 89088
      %v673 = vsel %vm671, %v410, 0
      %v676 = vsel %vm671, %v411, 0
      %v679 = vsel %vm671, %v412, 0
      %v682 = vsel %vm671, %v413, 0
      %v685 = vsel %vm671, %v414, 0
      %v688 = vsel %vm671, %v415, 0
      %v691 = vsel %vm671, %v416, 0
      %v694 = vsel %vm671, %v417, 0
      %v697 = vsel %vm671, %v418, 0
      %v700 = vsel %vm671, %v419, 0
      %v703 = vsel %vm671, %v420, 0
      %v706 = vsel %vm671, %v421, 0
      %v709 = vsel %vm671, %v422, 0
      %v712 = vsel %vm671, %v423, 0
      %v715 = vsel %vm671, %v424, 0
      %v718 = vsel %vm671, %v425, 0
      %v721 = vsel %vm671, %v426, 0
      %v724 = vsel %vm671, %v427, 0
      %v727 = vsel %vm671, %v428, 0
      %v730 = vsel %vm671, %v429, 0
      %v733 = vsel %vm671, %v430, 0
      %v736 = vsel %vm671, %v431, 0
      %v739 = vsel %vm671, %v432, 0
      %v742 = vsel %vm671, %v433, 0
      %v745 = vsel %vm671, %v434, 0
      %v748 = vsel %vm671, %v435, 0
      %v751 = vsel %vm671, %v436, 0
      %v754 = vsel %vm671, %v437, 0
      %v757 = vsel %vm671, %v438, 0
      %v760 = vsel %vm671, %v439, 0
      %v763 = vsel %vm671, %v440, 0
      %v766 = vsel %vm671, %v441, 0
      %vm768 = vcmask 1042432
      %v770 = vsel %vm768, %v670, 0
      %772 = vmatpush.msra.mxu0 0.0
      %773 = vmatpush.msra.mxu0 0.0
      %774 = vmatpush.msra.mxu0 0.0
      %775 = vmatpush.msra.mxu0 0.0
      %776 = vmatpush.msra.mxu0 0.0
      %777 = vmatpush.msra.mxu0 0.0
      %778 = vmatpush.msra.mxu0 0.0
      %779 = vmatpush.msra.mxu0 0.0
      %780 = vmatpush.msra.mxu0 0.0
      %781 = vmatpush.msra.mxu0 0.0
      %782 = vmatpush.msra.mxu0 0.0
      %783 = vmatpush.msra.mxu0 0.0
      %784 = vmatpush.msra.mxu0 0.0
      %785 = vmatpush.msra.mxu0 0.0
      %v786 = vand.u32 %v770, 4294901760
      %787 = vmatpush.msra.mxu0 %v786
      %v788 = vand.u32 %v669, 4294901760
      %789 = vmatpush.msra.mxu0 %v788
      %v790 = vand.u32 %v673, 4294901760
      %v791 = vsub.f32 %v673, %v790
      %v792 = vand.u32 %v791, 4294901760
      %v793 = vsub.f32 %v791, %v792
      %v794 = vand.u32 %v793, 4294901760
      %795 = vmatmul.f32.gmra.mxu0 %v794
      %v796 = vpop.f32.mrf.mxu0
      %v797 = vadd.f32 0.0, %v796
      %v798 = vand.u32 %v676, 4294901760
      %v799 = vsub.f32 %v676, %v798
      %v800 = vand.u32 %v799, 4294901760
      %v801 = vsub.f32 %v799, %v800
      %v802 = vand.u32 %v801, 4294901760
      %803 = vmatmul.f32.gmra.mxu0 %v802
      %v804 = vpop.f32.mrf.mxu0
      %v805 = vadd.f32 0.0, %v804
      %v806 = vand.u32 %v679, 4294901760
      %v807 = vsub.f32 %v679, %v806
      %v808 = vand.u32 %v807, 4294901760
      %v809 = vsub.f32 %v807, %v808
      %v810 = vand.u32 %v809, 4294901760
      %811 = vmatmul.f32.gmra.mxu0 %v810
      %v812 = vpop.f32.mrf.mxu0
      %v813 = vadd.f32 0.0, %v812
      %v814 = vand.u32 %v682, 4294901760
      %v815 = vsub.f32 %v682, %v814
      %v816 = vand.u32 %v815, 4294901760
      %v817 = vsub.f32 %v815, %v816
      %v818 = vand.u32 %v817, 4294901760
      %819 = vmatmul.f32.gmra.mxu0 %v818
      %v820 = vpop.f32.mrf.mxu0
      %v821 = vadd.f32 0.0, %v820
      %v822 = vand.u32 %v685, 4294901760
      %v823 = vsub.f32 %v685, %v822
      %v824 = vand.u32 %v823, 4294901760
      %v825 = vsub.f32 %v823, %v824
      %v826 = vand.u32 %v825, 4294901760
      %827 = vmatmul.f32.gmra.mxu0 %v826
      %v828 = vpop.f32.mrf.mxu0
      %v829 = vadd.f32 0.0, %v828
      %v830 = vand.u32 %v688, 4294901760
      %v831 = vsub.f32 %v688, %v830
      %v832 = vand.u32 %v831, 4294901760
      %v833 = vsub.f32 %v831, %v832
      %v834 = vand.u32 %v833, 4294901760
      %835 = vmatmul.f32.gmra.mxu0 %v834
      %v836 = vpop.f32.mrf.mxu0
      %v837 = vadd.f32 0.0, %v836
      %v838 = vand.u32 %v691, 4294901760
      %v839 = vsub.f32 %v691, %v838
      %v840 = vand.u32 %v839, 4294901760
      %v841 = vsub.f32 %v839, %v840
      %v842 = vand.u32 %v841, 4294901760
      %843 = vmatmul.f32.gmra.mxu0 %v842
      %v844 = vpop.f32.mrf.mxu0
      %v845 = vadd.f32 0.0, %v844
      %v846 = vand.u32 %v694, 4294901760
      %v847 = vsub.f32 %v694, %v846
      %v848 = vand.u32 %v847, 4294901760
      %v849 = vsub.f32 %v847, %v848
      %v850 = vand.u32 %v849, 4294901760
      %851 = vmatmul.f32.gmra.mxu0 %v850
      %v852 = vpop.f32.mrf.mxu0
      %v853 = vadd.f32 0.0, %v852
      %v854 = vand.u32 %v697, 4294901760
      %v855 = vsub.f32 %v697, %v854
      %v856 = vand.u32 %v855, 4294901760
      %v857 = vsub.f32 %v855, %v856
      %v858 = vand.u32 %v857, 4294901760
      %859 = vmatmul.f32.gmra.mxu0 %v858
      %v860 = vpop.f32.mrf.mxu0
      %v861 = vadd.f32 0.0, %v860
      %v862 = vand.u32 %v700, 4294901760
      %v863 = vsub.f32 %v700, %v862
      %v864 = vand.u32 %v863, 4294901760
      %v865 = vsub.f32 %v863, %v864
      %v866 = vand.u32 %v865, 4294901760
      %867 = vmatmul.f32.gmra.mxu0 %v866
      %v868 = vpop.f32.mrf.mxu0
      %v869 = vadd.f32 0.0, %v868
      %v870 = vand.u32 %v703, 4294901760
      %v871 = vsub.f32 %v703, %v870
      %v872 = vand.u32 %v871, 4294901760
      %v873 = vsub.f32 %v871, %v872
      %v874 = vand.u32 %v873, 4294901760
      %875 = vmatmul.f32.gmra.mxu0 %v874
      %v876 = vpop.f32.mrf.mxu0
      %v877 = vadd.f32 0.0, %v876
      %v878 = vand.u32 %v706, 4294901760
      %v879 = vsub.f32 %v706, %v878
      %v880 = vand.u32 %v879, 4294901760
      %v881 = vsub.f32 %v879, %v880
      %v882 = vand.u32 %v881, 4294901760
      %883 = vmatmul.f32.gmra.mxu0 %v882
      %v884 = vpop.f32.mrf.mxu0
      %v885 = vadd.f32 0.0, %v884
      %v886 = vand.u32 %v709, 4294901760
      %v887 = vsub.f32 %v709, %v886
      %v888 = vand.u32 %v887, 4294901760
      %v889 = vsub.f32 %v887, %v888
      %v890 = vand.u32 %v889, 4294901760
      %891 = vmatmul.f32.gmra.mxu0 %v890
      %v892 = vpop.f32.mrf.mxu0
      %v893 = vadd.f32 0.0, %v892
      %v894 = vand.u32 %v712, 4294901760
      %v895 = vsub.f32 %v712, %v894
      %v896 = vand.u32 %v895, 4294901760
      %v897 = vsub.f32 %v895, %v896
      %v898 = vand.u32 %v897, 4294901760
      %899 = vmatmul.f32.gmra.mxu0 %v898
      %v900 = vpop.f32.mrf.mxu0
      %v901 = vadd.f32 0.0, %v900
      %v902 = vand.u32 %v715, 4294901760
      %v903 = vsub.f32 %v715, %v902
      %v904 = vand.u32 %v903, 4294901760
      %v905 = vsub.f32 %v903, %v904
      %v906 = vand.u32 %v905, 4294901760
      %907 = vmatmul.f32.gmra.mxu0 %v906
      %v908 = vpop.f32.mrf.mxu0
      %v909 = vadd.f32 0.0, %v908
      %v910 = vand.u32 %v718, 4294901760
      %v911 = vsub.f32 %v718, %v910
      %v912 = vand.u32 %v911, 4294901760
      %v913 = vsub.f32 %v911, %v912
      %v914 = vand.u32 %v913, 4294901760
      %915 = vmatmul.f32.gmra.mxu0 %v914
      %v916 = vpop.f32.mrf.mxu0
      %v917 = vadd.f32 0.0, %v916
      %v918 = vand.u32 %v721, 4294901760
      %v919 = vsub.f32 %v721, %v918
      %v920 = vand.u32 %v919, 4294901760
      %v921 = vsub.f32 %v919, %v920
      %v922 = vand.u32 %v921, 4294901760
      %923 = vmatmul.f32.gmra.mxu0 %v922
      %v924 = vpop.f32.mrf.mxu0
      %v925 = vadd.f32 0.0, %v924
      %v926 = vand.u32 %v724, 4294901760
      %v927 = vsub.f32 %v724, %v926
      %v928 = vand.u32 %v927, 4294901760
      %v929 = vsub.f32 %v927, %v928
      %v930 = vand.u32 %v929, 4294901760
      %931 = vmatmul.f32.gmra.mxu0 %v930
      %v932 = vpop.f32.mrf.mxu0
      %v933 = vadd.f32 0.0, %v932
      %v934 = vand.u32 %v727, 4294901760
      %v935 = vsub.f32 %v727, %v934
      %v936 = vand.u32 %v935, 4294901760
      %v937 = vsub.f32 %v935, %v936
      %v938 = vand.u32 %v937, 4294901760
      %939 = vmatmul.f32.gmra.mxu0 %v938
      %v940 = vpop.f32.mrf.mxu0
      %v941 = vadd.f32 0.0, %v940
      %v942 = vand.u32 %v730, 4294901760
      %v943 = vsub.f32 %v730, %v942
      %v944 = vand.u32 %v943, 4294901760
      %v945 = vsub.f32 %v943, %v944
      %v946 = vand.u32 %v945, 4294901760
      %947 = vmatmul.f32.gmra.mxu0 %v946
      %v948 = vpop.f32.mrf.mxu0
      %v949 = vadd.f32 0.0, %v948
      %v950 = vand.u32 %v733, 4294901760
      %v951 = vsub.f32 %v733, %v950
      %v952 = vand.u32 %v951, 4294901760
      %v953 = vsub.f32 %v951, %v952
      %v954 = vand.u32 %v953, 4294901760
      %955 = vmatmul.f32.gmra.mxu0 %v954
      %v956 = vpop.f32.mrf.mxu0
      %v957 = vadd.f32 0.0, %v956
      %v958 = vand.u32 %v736, 4294901760
      %v959 = vsub.f32 %v736, %v958
      %v960 = vand.u32 %v959, 4294901760
      %v961 = vsub.f32 %v959, %v960
      %v962 = vand.u32 %v961, 4294901760
      %963 = vmatmul.f32.gmra.mxu0 %v962
      %v964 = vpop.f32.mrf.mxu0
      %v965 = vadd.f32 0.0, %v964
      %v966 = vand.u32 %v739, 4294901760
      %v967 = vsub.f32 %v739, %v966
      %v968 = vand.u32 %v967, 4294901760
      %v969 = vsub.f32 %v967, %v968
      %v970 = vand.u32 %v969, 4294901760
      %971 = vmatmul.f32.gmra.mxu0 %v970
      %v972 = vpop.f32.mrf.mxu0
      %v973 = vadd.f32 0.0, %v972
      %v974 = vand.u32 %v742, 4294901760
      %v975 = vsub.f32 %v742, %v974
      %v976 = vand.u32 %v975, 4294901760
      %v977 = vsub.f32 %v975, %v976
      %v978 = vand.u32 %v977, 4294901760
      %979 = vmatmul.f32.gmra.mxu0 %v978
      %v980 = vpop.f32.mrf.mxu0
      %v981 = vadd.f32 0.0, %v980
      %v982 = vand.u32 %v745, 4294901760
      %v983 = vsub.f32 %v745, %v982
      %v984 = vand.u32 %v983, 4294901760
      %v985 = vsub.f32 %v983, %v984
      %v986 = vand.u32 %v985, 4294901760
      %987 = vmatmul.f32.gmra.mxu0 %v986
      %v988 = vpop.f32.mrf.mxu0
      %v989 = vadd.f32 0.0, %v988
      %v990 = vand.u32 %v748, 4294901760
      %v991 = vsub.f32 %v748, %v990
      %v992 = vand.u32 %v991, 4294901760
      %v993 = vsub.f32 %v991, %v992
      %v994 = vand.u32 %v993, 4294901760
      %995 = vmatmul.f32.gmra.mxu0 %v994
      %v996 = vpop.f32.mrf.mxu0
      %v997 = vadd.f32 0.0, %v996
      %v998 = vand.u32 %v751, 4294901760
      %v999 = vsub.f32 %v751, %v998
      %v1000 = vand.u32 %v999, 4294901760
      %v1001 = vsub.f32 %v999, %v1000
      %v1002 = vand.u32 %v1001, 4294901760
      %1003 = vmatmul.f32.gmra.mxu0 %v1002
      %v1004 = vpop.f32.mrf.mxu0
      %v1005 = vadd.f32 0.0, %v1004
      %v1006 = vand.u32 %v754, 4294901760
      %v1007 = vsub.f32 %v754, %v1006
      %v1008 = vand.u32 %v1007, 4294901760
      %v1009 = vsub.f32 %v1007, %v1008
      %v1010 = vand.u32 %v1009, 4294901760
      %1011 = vmatmul.f32.gmra.mxu0 %v1010
      %v1012 = vpop.f32.mrf.mxu0
      %v1013 = vadd.f32 0.0, %v1012
      %v1014 = vand.u32 %v757, 4294901760
      %v1015 = vsub.f32 %v757, %v1014
      %v1016 = vand.u32 %v1015, 4294901760
      %v1017 = vsub.f32 %v1015, %v1016
      %v1018 = vand.u32 %v1017, 4294901760
      %1019 = vmatmul.f32.gmra.mxu0 %v1018
      %v1020 = vpop.f32.mrf.mxu0
      %v1021 = vadd.f32 0.0, %v1020
      %v1022 = vand.u32 %v760, 4294901760
      %v1023 = vsub.f32 %v760, %v1022
      %v1024 = vand.u32 %v1023, 4294901760
      %v1025 = vsub.f32 %v1023, %v1024
      %v1026 = vand.u32 %v1025, 4294901760
      %1027 = vmatmul.f32.gmra.mxu0 %v1026
      %v1028 = vpop.f32.mrf.mxu0
      %v1029 = vadd.f32 0.0, %v1028
      %v1030 = vand.u32 %v763, 4294901760
      %v1031 = vsub.f32 %v763, %v1030
      %v1032 = vand.u32 %v1031, 4294901760
      %v1033 = vsub.f32 %v1031, %v1032
      %v1034 = vand.u32 %v1033, 4294901760
      %1035 = vmatmul.f32.gmra.mxu0 %v1034
      %v1036 = vpop.f32.mrf.mxu0
      %v1037 = vadd.f32 0.0, %v1036
      %v1038 = vand.u32 %v766, 4294901760
      %v1039 = vsub.f32 %v766, %v1038
      %v1040 = vand.u32 %v1039, 4294901760
      %v1041 = vsub.f32 %v1039, %v1040
      %v1042 = vand.u32 %v1041, 4294901760
      %1043 = vmatmul.f32.gmra.mxu0 %v1042
      %v1044 = vpop.f32.mrf.mxu0
      %v1045 = vadd.f32 0.0, %v1044
      %1046 = vdwg.mxu0
      %1047 = vmatpush.msra.mxu0 0.0
      %1048 = vmatpush.msra.mxu0 0.0
      %1049 = vmatpush.msra.mxu0 0.0
      %1050 = vmatpush.msra.mxu0 0.0
      %1051 = vmatpush.msra.mxu0 0.0
      %1052 = vmatpush.msra.mxu0 0.0
      %1053 = vmatpush.msra.mxu0 0.0
      %1054 = vmatpush.msra.mxu0 0.0
      %1055 = vmatpush.msra.mxu0 0.0
      %1056 = vmatpush.msra.mxu0 0.0
      %1057 = vmatpush.msra.mxu0 0.0
      %1058 = vmatpush.msra.mxu0 0.0
      %1059 = vmatpush.msra.mxu0 0.0
      %1060 = vmatpush.msra.mxu0 0.0
      %v1061 = vand.u32 %v770, 4294901760
      %v1062 = vsub.f32 %v770, %v1061
      %v1063 = vand.u32 %v1062, 4294901760
      %v1064 = vsub.f32 %v1062, %v1063
      %v1065 = vand.u32 %v1064, 4294901760
      %1066 = vmatpush.msra.mxu0 %v1065
      %v1067 = vand.u32 %v669, 4294901760
      %v1068 = vsub.f32 %v669, %v1067
      %v1069 = vand.u32 %v1068, 4294901760
      %v1070 = vsub.f32 %v1068, %v1069
      %v1071 = vand.u32 %v1070, 4294901760
      %1072 = vmatpush.msra.mxu0 %v1071
      %v1073 = vand.u32 %v673, 4294901760
      %1074 = vmatmul.f32.gmra.mxu0 %v1073
      %v1075 = vpop.f32.mrf.mxu0
      %v1076 = vadd.f32 %v797, %v1075
      %v1077 = vand.u32 %v676, 4294901760
      %1078 = vmatmul.f32.gmra.mxu0 %v1077
      %v1079 = vpop.f32.mrf.mxu0
      %v1080 = vadd.f32 %v805, %v1079
      %v1081 = vand.u32 %v679, 4294901760
      %1082 = vmatmul.f32.gmra.mxu0 %v1081
      %v1083 = vpop.f32.mrf.mxu0
      %v1084 = vadd.f32 %v813, %v1083
      %v1085 = vand.u32 %v682, 4294901760
      %1086 = vmatmul.f32.gmra.mxu0 %v1085
      %v1087 = vpop.f32.mrf.mxu0
      %v1088 = vadd.f32 %v821, %v1087
      %v1089 = vand.u32 %v685, 4294901760
      %1090 = vmatmul.f32.gmra.mxu0 %v1089
      %v1091 = vpop.f32.mrf.mxu0
      %v1092 = vadd.f32 %v829, %v1091
      %v1093 = vand.u32 %v688, 4294901760
      %1094 = vmatmul.f32.gmra.mxu0 %v1093
      %v1095 = vpop.f32.mrf.mxu0
      %v1096 = vadd.f32 %v837, %v1095
      %v1097 = vand.u32 %v691, 4294901760
      %1098 = vmatmul.f32.gmra.mxu0 %v1097
      %v1099 = vpop.f32.mrf.mxu0
      %v1100 = vadd.f32 %v845, %v1099
      %v1101 = vand.u32 %v694, 4294901760
      %1102 = vmatmul.f32.gmra.mxu0 %v1101
      %v1103 = vpop.f32.mrf.mxu0
      %v1104 = vadd.f32 %v853, %v1103
      %v1105 = vand.u32 %v697, 4294901760
      %1106 = vmatmul.f32.gmra.mxu0 %v1105
      %v1107 = vpop.f32.mrf.mxu0
      %v1108 = vadd.f32 %v861, %v1107
      %v1109 = vand.u32 %v700, 4294901760
      %1110 = vmatmul.f32.gmra.mxu0 %v1109
      %v1111 = vpop.f32.mrf.mxu0
      %v1112 = vadd.f32 %v869, %v1111
      %v1113 = vand.u32 %v703, 4294901760
      %1114 = vmatmul.f32.gmra.mxu0 %v1113
      %v1115 = vpop.f32.mrf.mxu0
      %v1116 = vadd.f32 %v877, %v1115
      %v1117 = vand.u32 %v706, 4294901760
      %1118 = vmatmul.f32.gmra.mxu0 %v1117
      %v1119 = vpop.f32.mrf.mxu0
      %v1120 = vadd.f32 %v885, %v1119
      %v1121 = vand.u32 %v709, 4294901760
      %1122 = vmatmul.f32.gmra.mxu0 %v1121
      %v1123 = vpop.f32.mrf.mxu0
      %v1124 = vadd.f32 %v893, %v1123
      %v1125 = vand.u32 %v712, 4294901760
      %1126 = vmatmul.f32.gmra.mxu0 %v1125
      %v1127 = vpop.f32.mrf.mxu0
      %v1128 = vadd.f32 %v901, %v1127
      %v1129 = vand.u32 %v715, 4294901760
      %1130 = vmatmul.f32.gmra.mxu0 %v1129
      %v1131 = vpop.f32.mrf.mxu0
      %v1132 = vadd.f32 %v909, %v1131
      %v1133 = vand.u32 %v718, 4294901760
      %1134 = vmatmul.f32.gmra.mxu0 %v1133
      %v1135 = vpop.f32.mrf.mxu0
      %v1136 = vadd.f32 %v917, %v1135
      %v1137 = vand.u32 %v721, 4294901760
      %1138 = vmatmul.f32.gmra.mxu0 %v1137
      %v1139 = vpop.f32.mrf.mxu0
      %v1140 = vadd.f32 %v925, %v1139
      %v1141 = vand.u32 %v724, 4294901760
      %1142 = vmatmul.f32.gmra.mxu0 %v1141
      %v1143 = vpop.f32.mrf.mxu0
      %v1144 = vadd.f32 %v933, %v1143
      %v1145 = vand.u32 %v727, 4294901760
      %1146 = vmatmul.f32.gmra.mxu0 %v1145
      %v1147 = vpop.f32.mrf.mxu0
      %v1148 = vadd.f32 %v941, %v1147
      %v1149 = vand.u32 %v730, 4294901760
      %1150 = vmatmul.f32.gmra.mxu0 %v1149
      %v1151 = vpop.f32.mrf.mxu0
      %v1152 = vadd.f32 %v949, %v1151
      %v1153 = vand.u32 %v733, 4294901760
      %1154 = vmatmul.f32.gmra.mxu0 %v1153
      %v1155 = vpop.f32.mrf.mxu0
      %v1156 = vadd.f32 %v957, %v1155
      %v1157 = vand.u32 %v736, 4294901760
      %1158 = vmatmul.f32.gmra.mxu0 %v1157
      %v1159 = vpop.f32.mrf.mxu0
      %v1160 = vadd.f32 %v965, %v1159
      %v1161 = vand.u32 %v739, 4294901760
      %1162 = vmatmul.f32.gmra.mxu0 %v1161
      %v1163 = vpop.f32.mrf.mxu0
      %v1164 = vadd.f32 %v973, %v1163
      %v1165 = vand.u32 %v742, 4294901760
      %1166 = vmatmul.f32.gmra.mxu0 %v1165
      %v1167 = vpop.f32.mrf.mxu0
      %v1168 = vadd.f32 %v981, %v1167
      %v1169 = vand.u32 %v745, 4294901760
      %1170 = vmatmul.f32.gmra.mxu0 %v1169
      %v1171 = vpop.f32.mrf.mxu0
      %v1172 = vadd.f32 %v989, %v1171
      %v1173 = vand.u32 %v748, 4294901760
      %1174 = vmatmul.f32.gmra.mxu0 %v1173
      %v1175 = vpop.f32.mrf.mxu0
      %v1176 = vadd.f32 %v997, %v1175
      %v1177 = vand.u32 %v751, 4294901760
      %1178 = vmatmul.f32.gmra.mxu0 %v1177
      %v1179 = vpop.f32.mrf.mxu0
      %v1180 = vadd.f32 %v1005, %v1179
      %v1181 = vand.u32 %v754, 4294901760
      %1182 = vmatmul.f32.gmra.mxu0 %v1181
      %v1183 = vpop.f32.mrf.mxu0
      %v1184 = vadd.f32 %v1013, %v1183
      %v1185 = vand.u32 %v757, 4294901760
      %1186 = vmatmul.f32.gmra.mxu0 %v1185
      %v1187 = vpop.f32.mrf.mxu0
      %v1188 = vadd.f32 %v1021, %v1187
      %v1189 = vand.u32 %v760, 4294901760
      %1190 = vmatmul.f32.gmra.mxu0 %v1189
      %v1191 = vpop.f32.mrf.mxu0
      %v1192 = vadd.f32 %v1029, %v1191
      %v1193 = vand.u32 %v763, 4294901760
      %1194 = vmatmul.f32.gmra.mxu0 %v1193
      %v1195 = vpop.f32.mrf.mxu0
      %v1196 = vadd.f32 %v1037, %v1195
      %v1197 = vand.u32 %v766, 4294901760
      %1198 = vmatmul.f32.gmra.mxu0 %v1197
      %v1199 = vpop.f32.mrf.mxu0
      %v1200 = vadd.f32 %v1045, %v1199
      %1201 = vdwg.mxu0
      %1202 = vmatpush.msra.mxu0 0.0
      %1203 = vmatpush.msra.mxu0 0.0
      %1204 = vmatpush.msra.mxu0 0.0
      %1205 = vmatpush.msra.mxu0 0.0
      %1206 = vmatpush.msra.mxu0 0.0
      %1207 = vmatpush.msra.mxu0 0.0
      %1208 = vmatpush.msra.mxu0 0.0
      %1209 = vmatpush.msra.mxu0 0.0
      %1210 = vmatpush.msra.mxu0 0.0
      %1211 = vmatpush.msra.mxu0 0.0
      %1212 = vmatpush.msra.mxu0 0.0
      %1213 = vmatpush.msra.mxu0 0.0
      %1214 = vmatpush.msra.mxu0 0.0
      %1215 = vmatpush.msra.mxu0 0.0
      %v1216 = vand.u32 %v770, 4294901760
      %v1217 = vsub.f32 %v770, %v1216
      %1218 = vmatpush.msra.mxu0 %v1217
      %v1219 = vand.u32 %v669, 4294901760
      %v1220 = vsub.f32 %v669, %v1219
      %1221 = vmatpush.msra.mxu0 %v1220
      %v1222 = vand.u32 %v673, 4294901760
      %v1223 = vsub.f32 %v673, %v1222
      %1224 = vmatmul.f32.gmra.mxu0 %v1223
      %v1225 = vpop.f32.mrf.mxu0
      %v1226 = vadd.f32 %v1076, %v1225
      %v1227 = vand.u32 %v676, 4294901760
      %v1228 = vsub.f32 %v676, %v1227
      %1229 = vmatmul.f32.gmra.mxu0 %v1228
      %v1230 = vpop.f32.mrf.mxu0
      %v1231 = vadd.f32 %v1080, %v1230
      %v1232 = vand.u32 %v679, 4294901760
      %v1233 = vsub.f32 %v679, %v1232
      %1234 = vmatmul.f32.gmra.mxu0 %v1233
      %v1235 = vpop.f32.mrf.mxu0
      %v1236 = vadd.f32 %v1084, %v1235
      %v1237 = vand.u32 %v682, 4294901760
      %v1238 = vsub.f32 %v682, %v1237
      %1239 = vmatmul.f32.gmra.mxu0 %v1238
      %v1240 = vpop.f32.mrf.mxu0
      %v1241 = vadd.f32 %v1088, %v1240
      %v1242 = vand.u32 %v685, 4294901760
      %v1243 = vsub.f32 %v685, %v1242
      %1244 = vmatmul.f32.gmra.mxu0 %v1243
      %v1245 = vpop.f32.mrf.mxu0
      %v1246 = vadd.f32 %v1092, %v1245
      %v1247 = vand.u32 %v688, 4294901760
      %v1248 = vsub.f32 %v688, %v1247
      %1249 = vmatmul.f32.gmra.mxu0 %v1248
      %v1250 = vpop.f32.mrf.mxu0
      %v1251 = vadd.f32 %v1096, %v1250
      %v1252 = vand.u32 %v691, 4294901760
      %v1253 = vsub.f32 %v691, %v1252
      %1254 = vmatmul.f32.gmra.mxu0 %v1253
      %v1255 = vpop.f32.mrf.mxu0
      %v1256 = vadd.f32 %v1100, %v1255
      %v1257 = vand.u32 %v694, 4294901760
      %v1258 = vsub.f32 %v694, %v1257
      %1259 = vmatmul.f32.gmra.mxu0 %v1258
      %v1260 = vpop.f32.mrf.mxu0
      %v1261 = vadd.f32 %v1104, %v1260
      %v1262 = vand.u32 %v697, 4294901760
      %v1263 = vsub.f32 %v697, %v1262
      %1264 = vmatmul.f32.gmra.mxu0 %v1263
      %v1265 = vpop.f32.mrf.mxu0
      %v1266 = vadd.f32 %v1108, %v1265
      %v1267 = vand.u32 %v700, 4294901760
      %v1268 = vsub.f32 %v700, %v1267
      %1269 = vmatmul.f32.gmra.mxu0 %v1268
      %v1270 = vpop.f32.mrf.mxu0
      %v1271 = vadd.f32 %v1112, %v1270
      %v1272 = vand.u32 %v703, 4294901760
      %v1273 = vsub.f32 %v703, %v1272
      %1274 = vmatmul.f32.gmra.mxu0 %v1273
      %v1275 = vpop.f32.mrf.mxu0
      %v1276 = vadd.f32 %v1116, %v1275
      %v1277 = vand.u32 %v706, 4294901760
      %v1278 = vsub.f32 %v706, %v1277
      %1279 = vmatmul.f32.gmra.mxu0 %v1278
      %v1280 = vpop.f32.mrf.mxu0
      %v1281 = vadd.f32 %v1120, %v1280
      %v1282 = vand.u32 %v709, 4294901760
      %v1283 = vsub.f32 %v709, %v1282
      %1284 = vmatmul.f32.gmra.mxu0 %v1283
      %v1285 = vpop.f32.mrf.mxu0
      %v1286 = vadd.f32 %v1124, %v1285
      %v1287 = vand.u32 %v712, 4294901760
      %v1288 = vsub.f32 %v712, %v1287
      %1289 = vmatmul.f32.gmra.mxu0 %v1288
      %v1290 = vpop.f32.mrf.mxu0
      %v1291 = vadd.f32 %v1128, %v1290
      %v1292 = vand.u32 %v715, 4294901760
      %v1293 = vsub.f32 %v715, %v1292
      %1294 = vmatmul.f32.gmra.mxu0 %v1293
      %v1295 = vpop.f32.mrf.mxu0
      %v1296 = vadd.f32 %v1132, %v1295
      %v1297 = vand.u32 %v718, 4294901760
      %v1298 = vsub.f32 %v718, %v1297
      %1299 = vmatmul.f32.gmra.mxu0 %v1298
      %v1300 = vpop.f32.mrf.mxu0
      %v1301 = vadd.f32 %v1136, %v1300
      %v1302 = vand.u32 %v721, 4294901760
      %v1303 = vsub.f32 %v721, %v1302
      %1304 = vmatmul.f32.gmra.mxu0 %v1303
      %v1305 = vpop.f32.mrf.mxu0
      %v1306 = vadd.f32 %v1140, %v1305
      %v1307 = vand.u32 %v724, 4294901760
      %v1308 = vsub.f32 %v724, %v1307
      %1309 = vmatmul.f32.gmra.mxu0 %v1308
      %v1310 = vpop.f32.mrf.mxu0
      %v1311 = vadd.f32 %v1144, %v1310
      %v1312 = vand.u32 %v727, 4294901760
      %v1313 = vsub.f32 %v727, %v1312
      %1314 = vmatmul.f32.gmra.mxu0 %v1313
      %v1315 = vpop.f32.mrf.mxu0
      %v1316 = vadd.f32 %v1148, %v1315
      %v1317 = vand.u32 %v730, 4294901760
      %v1318 = vsub.f32 %v730, %v1317
      %1319 = vmatmul.f32.gmra.mxu0 %v1318
      %v1320 = vpop.f32.mrf.mxu0
      %v1321 = vadd.f32 %v1152, %v1320
      %v1322 = vand.u32 %v733, 4294901760
      %v1323 = vsub.f32 %v733, %v1322
      %1324 = vmatmul.f32.gmra.mxu0 %v1323
      %v1325 = vpop.f32.mrf.mxu0
      %v1326 = vadd.f32 %v1156, %v1325
      %v1327 = vand.u32 %v736, 4294901760
      %v1328 = vsub.f32 %v736, %v1327
      %1329 = vmatmul.f32.gmra.mxu0 %v1328
      %v1330 = vpop.f32.mrf.mxu0
      %v1331 = vadd.f32 %v1160, %v1330
      %v1332 = vand.u32 %v739, 4294901760
      %v1333 = vsub.f32 %v739, %v1332
      %1334 = vmatmul.f32.gmra.mxu0 %v1333
      %v1335 = vpop.f32.mrf.mxu0
      %v1336 = vadd.f32 %v1164, %v1335
      %v1337 = vand.u32 %v742, 4294901760
      %v1338 = vsub.f32 %v742, %v1337
      %1339 = vmatmul.f32.gmra.mxu0 %v1338
      %v1340 = vpop.f32.mrf.mxu0
      %v1341 = vadd.f32 %v1168, %v1340
      %v1342 = vand.u32 %v745, 4294901760
      %v1343 = vsub.f32 %v745, %v1342
      %1344 = vmatmul.f32.gmra.mxu0 %v1343
      %v1345 = vpop.f32.mrf.mxu0
      %v1346 = vadd.f32 %v1172, %v1345
      %v1347 = vand.u32 %v748, 4294901760
      %v1348 = vsub.f32 %v748, %v1347
      %1349 = vmatmul.f32.gmra.mxu0 %v1348
      %v1350 = vpop.f32.mrf.mxu0
      %v1351 = vadd.f32 %v1176, %v1350
      %v1352 = vand.u32 %v751, 4294901760
      %v1353 = vsub.f32 %v751, %v1352
      %1354 = vmatmul.f32.gmra.mxu0 %v1353
      %v1355 = vpop.f32.mrf.mxu0
      %v1356 = vadd.f32 %v1180, %v1355
      %v1357 = vand.u32 %v754, 4294901760
      %v1358 = vsub.f32 %v754, %v1357
      %1359 = vmatmul.f32.gmra.mxu0 %v1358
      %v1360 = vpop.f32.mrf.mxu0
      %v1361 = vadd.f32 %v1184, %v1360
      %v1362 = vand.u32 %v757, 4294901760
      %v1363 = vsub.f32 %v757, %v1362
      %1364 = vmatmul.f32.gmra.mxu0 %v1363
      %v1365 = vpop.f32.mrf.mxu0
      %v1366 = vadd.f32 %v1188, %v1365
      %v1367 = vand.u32 %v760, 4294901760
      %v1368 = vsub.f32 %v760, %v1367
      %1369 = vmatmul.f32.gmra.mxu0 %v1368
      %v1370 = vpop.f32.mrf.mxu0
      %v1371 = vadd.f32 %v1192, %v1370
      %v1372 = vand.u32 %v763, 4294901760
      %v1373 = vsub.f32 %v763, %v1372
      %1374 = vmatmul.f32.gmra.mxu0 %v1373
      %v1375 = vpop.f32.mrf.mxu0
      %v1376 = vadd.f32 %v1196, %v1375
      %v1377 = vand.u32 %v766, 4294901760
      %v1378 = vsub.f32 %v766, %v1377
      %1379 = vmatmul.f32.gmra.mxu0 %v1378
      %v1380 = vpop.f32.mrf.mxu0
      %v1381 = vadd.f32 %v1200, %v1380
      %1382 = vdwg.mxu0
      %1383 = vmatpush.msra.mxu0 0.0
      %1384 = vmatpush.msra.mxu0 0.0
      %1385 = vmatpush.msra.mxu0 0.0
      %1386 = vmatpush.msra.mxu0 0.0
      %1387 = vmatpush.msra.mxu0 0.0
      %1388 = vmatpush.msra.mxu0 0.0
      %1389 = vmatpush.msra.mxu0 0.0
      %1390 = vmatpush.msra.mxu0 0.0
      %1391 = vmatpush.msra.mxu0 0.0
      %1392 = vmatpush.msra.mxu0 0.0
      %1393 = vmatpush.msra.mxu0 0.0
      %1394 = vmatpush.msra.mxu0 0.0
      %1395 = vmatpush.msra.mxu0 0.0
      %1396 = vmatpush.msra.mxu0 0.0
      %v1397 = vand.u32 %v770, 4294901760
      %1398 = vmatpush.msra.mxu0 %v1397
      %v1399 = vand.u32 %v669, 4294901760
      %1400 = vmatpush.msra.mxu0 %v1399
      %v1401 = vand.u32 %v673, 4294901760
      %v1402 = vsub.f32 %v673, %v1401
      %v1403 = vand.u32 %v1402, 4294901760
      %1404 = vmatmul.f32.gmra.mxu0 %v1403
      %v1405 = vpop.f32.mrf.mxu0
      %v1406 = vadd.f32 %v1226, %v1405
      %v1407 = vand.u32 %v676, 4294901760
      %v1408 = vsub.f32 %v676, %v1407
      %v1409 = vand.u32 %v1408, 4294901760
      %1410 = vmatmul.f32.gmra.mxu0 %v1409
      %v1411 = vpop.f32.mrf.mxu0
      %v1412 = vadd.f32 %v1231, %v1411
      %v1413 = vand.u32 %v679, 4294901760
      %v1414 = vsub.f32 %v679, %v1413
      %v1415 = vand.u32 %v1414, 4294901760
      %1416 = vmatmul.f32.gmra.mxu0 %v1415
      %v1417 = vpop.f32.mrf.mxu0
      %v1418 = vadd.f32 %v1236, %v1417
      %v1419 = vand.u32 %v682, 4294901760
      %v1420 = vsub.f32 %v682, %v1419
      %v1421 = vand.u32 %v1420, 4294901760
      %1422 = vmatmul.f32.gmra.mxu0 %v1421
      %v1423 = vpop.f32.mrf.mxu0
      %v1424 = vadd.f32 %v1241, %v1423
      %v1425 = vand.u32 %v685, 4294901760
      %v1426 = vsub.f32 %v685, %v1425
      %v1427 = vand.u32 %v1426, 4294901760
      %1428 = vmatmul.f32.gmra.mxu0 %v1427
      %v1429 = vpop.f32.mrf.mxu0
      %v1430 = vadd.f32 %v1246, %v1429
      %v1431 = vand.u32 %v688, 4294901760
      %v1432 = vsub.f32 %v688, %v1431
      %v1433 = vand.u32 %v1432, 4294901760
      %1434 = vmatmul.f32.gmra.mxu0 %v1433
      %v1435 = vpop.f32.mrf.mxu0
      %v1436 = vadd.f32 %v1251, %v1435
      %v1437 = vand.u32 %v691, 4294901760
      %v1438 = vsub.f32 %v691, %v1437
      %v1439 = vand.u32 %v1438, 4294901760
      %1440 = vmatmul.f32.gmra.mxu0 %v1439
      %v1441 = vpop.f32.mrf.mxu0
      %v1442 = vadd.f32 %v1256, %v1441
      %v1443 = vand.u32 %v694, 4294901760
      %v1444 = vsub.f32 %v694, %v1443
      %v1445 = vand.u32 %v1444, 4294901760
      %1446 = vmatmul.f32.gmra.mxu0 %v1445
      %v1447 = vpop.f32.mrf.mxu0
      %v1448 = vadd.f32 %v1261, %v1447
      %v1449 = vand.u32 %v697, 4294901760
      %v1450 = vsub.f32 %v697, %v1449
      %v1451 = vand.u32 %v1450, 4294901760
      %1452 = vmatmul.f32.gmra.mxu0 %v1451
      %v1453 = vpop.f32.mrf.mxu0
      %v1454 = vadd.f32 %v1266, %v1453
      %v1455 = vand.u32 %v700, 4294901760
      %v1456 = vsub.f32 %v700, %v1455
      %v1457 = vand.u32 %v1456, 4294901760
      %1458 = vmatmul.f32.gmra.mxu0 %v1457
      %v1459 = vpop.f32.mrf.mxu0
      %v1460 = vadd.f32 %v1271, %v1459
      %v1461 = vand.u32 %v703, 4294901760
      %v1462 = vsub.f32 %v703, %v1461
      %v1463 = vand.u32 %v1462, 4294901760
      %1464 = vmatmul.f32.gmra.mxu0 %v1463
      %v1465 = vpop.f32.mrf.mxu0
      %v1466 = vadd.f32 %v1276, %v1465
      %v1467 = vand.u32 %v706, 4294901760
      %v1468 = vsub.f32 %v706, %v1467
      %v1469 = vand.u32 %v1468, 4294901760
      %1470 = vmatmul.f32.gmra.mxu0 %v1469
      %v1471 = vpop.f32.mrf.mxu0
      %v1472 = vadd.f32 %v1281, %v1471
      %v1473 = vand.u32 %v709, 4294901760
      %v1474 = vsub.f32 %v709, %v1473
      %v1475 = vand.u32 %v1474, 4294901760
      %1476 = vmatmul.f32.gmra.mxu0 %v1475
      %v1477 = vpop.f32.mrf.mxu0
      %v1478 = vadd.f32 %v1286, %v1477
      %v1479 = vand.u32 %v712, 4294901760
      %v1480 = vsub.f32 %v712, %v1479
      %v1481 = vand.u32 %v1480, 4294901760
      %1482 = vmatmul.f32.gmra.mxu0 %v1481
      %v1483 = vpop.f32.mrf.mxu0
      %v1484 = vadd.f32 %v1291, %v1483
      %v1485 = vand.u32 %v715, 4294901760
      %v1486 = vsub.f32 %v715, %v1485
      %v1487 = vand.u32 %v1486, 4294901760
      %1488 = vmatmul.f32.gmra.mxu0 %v1487
      %v1489 = vpop.f32.mrf.mxu0
      %v1490 = vadd.f32 %v1296, %v1489
      %v1491 = vand.u32 %v718, 4294901760
      %v1492 = vsub.f32 %v718, %v1491
      %v1493 = vand.u32 %v1492, 4294901760
      %1494 = vmatmul.f32.gmra.mxu0 %v1493
      %v1495 = vpop.f32.mrf.mxu0
      %v1496 = vadd.f32 %v1301, %v1495
      %v1497 = vand.u32 %v721, 4294901760
      %v1498 = vsub.f32 %v721, %v1497
      %v1499 = vand.u32 %v1498, 4294901760
      %1500 = vmatmul.f32.gmra.mxu0 %v1499
      %v1501 = vpop.f32.mrf.mxu0
      %v1502 = vadd.f32 %v1306, %v1501
      %v1503 = vand.u32 %v724, 4294901760
      %v1504 = vsub.f32 %v724, %v1503
      %v1505 = vand.u32 %v1504, 4294901760
      %1506 = vmatmul.f32.gmra.mxu0 %v1505
      %v1507 = vpop.f32.mrf.mxu0
      %v1508 = vadd.f32 %v1311, %v1507
      %v1509 = vand.u32 %v727, 4294901760
      %v1510 = vsub.f32 %v727, %v1509
      %v1511 = vand.u32 %v1510, 4294901760
      %1512 = vmatmul.f32.gmra.mxu0 %v1511
      %v1513 = vpop.f32.mrf.mxu0
      %v1514 = vadd.f32 %v1316, %v1513
      %v1515 = vand.u32 %v730, 4294901760
      %v1516 = vsub.f32 %v730, %v1515
      %v1517 = vand.u32 %v1516, 4294901760
      %1518 = vmatmul.f32.gmra.mxu0 %v1517
      %v1519 = vpop.f32.mrf.mxu0
      %v1520 = vadd.f32 %v1321, %v1519
      %v1521 = vand.u32 %v733, 4294901760
      %v1522 = vsub.f32 %v733, %v1521
      %v1523 = vand.u32 %v1522, 4294901760
      %1524 = vmatmul.f32.gmra.mxu0 %v1523
      %v1525 = vpop.f32.mrf.mxu0
      %v1526 = vadd.f32 %v1326, %v1525
      %v1527 = vand.u32 %v736, 4294901760
      %v1528 = vsub.f32 %v736, %v1527
      %v1529 = vand.u32 %v1528, 4294901760
      %1530 = vmatmul.f32.gmra.mxu0 %v1529
      %v1531 = vpop.f32.mrf.mxu0
      %v1532 = vadd.f32 %v1331, %v1531
      %v1533 = vand.u32 %v739, 4294901760
      %v1534 = vsub.f32 %v739, %v1533
      %v1535 = vand.u32 %v1534, 4294901760
      %1536 = vmatmul.f32.gmra.mxu0 %v1535
      %v1537 = vpop.f32.mrf.mxu0
      %v1538 = vadd.f32 %v1336, %v1537
      %v1539 = vand.u32 %v742, 4294901760
      %v1540 = vsub.f32 %v742, %v1539
      %v1541 = vand.u32 %v1540, 4294901760
      %1542 = vmatmul.f32.gmra.mxu0 %v1541
      %v1543 = vpop.f32.mrf.mxu0
      %v1544 = vadd.f32 %v1341, %v1543
      %v1545 = vand.u32 %v745, 4294901760
      %v1546 = vsub.f32 %v745, %v1545
      %v1547 = vand.u32 %v1546, 4294901760
      %1548 = vmatmul.f32.gmra.mxu0 %v1547
      %v1549 = vpop.f32.mrf.mxu0
      %v1550 = vadd.f32 %v1346, %v1549
      %v1551 = vand.u32 %v748, 4294901760
      %v1552 = vsub.f32 %v748, %v1551
      %v1553 = vand.u32 %v1552, 4294901760
      %1554 = vmatmul.f32.gmra.mxu0 %v1553
      %v1555 = vpop.f32.mrf.mxu0
      %v1556 = vadd.f32 %v1351, %v1555
      %v1557 = vand.u32 %v751, 4294901760
      %v1558 = vsub.f32 %v751, %v1557
      %v1559 = vand.u32 %v1558, 4294901760
      %1560 = vmatmul.f32.gmra.mxu0 %v1559
      %v1561 = vpop.f32.mrf.mxu0
      %v1562 = vadd.f32 %v1356, %v1561
      %v1563 = vand.u32 %v754, 4294901760
      %v1564 = vsub.f32 %v754, %v1563
      %v1565 = vand.u32 %v1564, 4294901760
      %1566 = vmatmul.f32.gmra.mxu0 %v1565
      %v1567 = vpop.f32.mrf.mxu0
      %v1568 = vadd.f32 %v1361, %v1567
      %v1569 = vand.u32 %v757, 4294901760
      %v1570 = vsub.f32 %v757, %v1569
      %v1571 = vand.u32 %v1570, 4294901760
      %1572 = vmatmul.f32.gmra.mxu0 %v1571
      %v1573 = vpop.f32.mrf.mxu0
      %v1574 = vadd.f32 %v1366, %v1573
      %v1575 = vand.u32 %v760, 4294901760
      %v1576 = vsub.f32 %v760, %v1575
      %v1577 = vand.u32 %v1576, 4294901760
      %1578 = vmatmul.f32.gmra.mxu0 %v1577
      %v1579 = vpop.f32.mrf.mxu0
      %v1580 = vadd.f32 %v1371, %v1579
      %v1581 = vand.u32 %v763, 4294901760
      %v1582 = vsub.f32 %v763, %v1581
      %v1583 = vand.u32 %v1582, 4294901760
      %1584 = vmatmul.f32.gmra.mxu0 %v1583
      %v1585 = vpop.f32.mrf.mxu0
      %v1586 = vadd.f32 %v1376, %v1585
      %v1587 = vand.u32 %v766, 4294901760
      %v1588 = vsub.f32 %v766, %v1587
      %v1589 = vand.u32 %v1588, 4294901760
      %1590 = vmatmul.f32.gmra.mxu0 %v1589
      %v1591 = vpop.f32.mrf.mxu0
      %v1592 = vadd.f32 %v1381, %v1591
      %1593 = vdwg.mxu0
      %1594 = vmatpush.msra.mxu0 0.0
      %1595 = vmatpush.msra.mxu0 0.0
      %1596 = vmatpush.msra.mxu0 0.0
      %1597 = vmatpush.msra.mxu0 0.0
      %1598 = vmatpush.msra.mxu0 0.0
      %1599 = vmatpush.msra.mxu0 0.0
      %1600 = vmatpush.msra.mxu0 0.0
      %1601 = vmatpush.msra.mxu0 0.0
      %1602 = vmatpush.msra.mxu0 0.0
      %1603 = vmatpush.msra.mxu0 0.0
      %1604 = vmatpush.msra.mxu0 0.0
      %1605 = vmatpush.msra.mxu0 0.0
      %1606 = vmatpush.msra.mxu0 0.0
      %1607 = vmatpush.msra.mxu0 0.0
      %v1608 = vand.u32 %v770, 4294901760
      %v1609 = vsub.f32 %v770, %v1608
      %v1610 = vand.u32 %v1609, 4294901760
      %1611 = vmatpush.msra.mxu0 %v1610
      %v1612 = vand.u32 %v669, 4294901760
      %v1613 = vsub.f32 %v669, %v1612
      %v1614 = vand.u32 %v1613, 4294901760
      %1615 = vmatpush.msra.mxu0 %v1614
      %v1616 = vand.u32 %v673, 4294901760
      %1617 = vmatmul.f32.gmra.mxu0 %v1616
      %v1618 = vpop.f32.mrf.mxu0
      %v1619 = vadd.f32 %v1406, %v1618
      %v1620 = vand.u32 %v676, 4294901760
      %1621 = vmatmul.f32.gmra.mxu0 %v1620
      %v1622 = vpop.f32.mrf.mxu0
      %v1623 = vadd.f32 %v1412, %v1622
      %v1624 = vand.u32 %v679, 4294901760
      %1625 = vmatmul.f32.gmra.mxu0 %v1624
      %v1626 = vpop.f32.mrf.mxu0
      %v1627 = vadd.f32 %v1418, %v1626
      %v1628 = vand.u32 %v682, 4294901760
      %1629 = vmatmul.f32.gmra.mxu0 %v1628
      %v1630 = vpop.f32.mrf.mxu0
      %v1631 = vadd.f32 %v1424, %v1630
      %v1632 = vand.u32 %v685, 4294901760
      %1633 = vmatmul.f32.gmra.mxu0 %v1632
      %v1634 = vpop.f32.mrf.mxu0
      %v1635 = vadd.f32 %v1430, %v1634
      %v1636 = vand.u32 %v688, 4294901760
      %1637 = vmatmul.f32.gmra.mxu0 %v1636
      %v1638 = vpop.f32.mrf.mxu0
      %v1639 = vadd.f32 %v1436, %v1638
      %v1640 = vand.u32 %v691, 4294901760
      %1641 = vmatmul.f32.gmra.mxu0 %v1640
      %v1642 = vpop.f32.mrf.mxu0
      %v1643 = vadd.f32 %v1442, %v1642
      %v1644 = vand.u32 %v694, 4294901760
      %1645 = vmatmul.f32.gmra.mxu0 %v1644
      %v1646 = vpop.f32.mrf.mxu0
      %v1647 = vadd.f32 %v1448, %v1646
      %v1648 = vand.u32 %v697, 4294901760
      %1649 = vmatmul.f32.gmra.mxu0 %v1648
      %v1650 = vpop.f32.mrf.mxu0
      %v1651 = vadd.f32 %v1454, %v1650
      %v1652 = vand.u32 %v700, 4294901760
      %1653 = vmatmul.f32.gmra.mxu0 %v1652
      %v1654 = vpop.f32.mrf.mxu0
      %v1655 = vadd.f32 %v1460, %v1654
      %v1656 = vand.u32 %v703, 4294901760
      %1657 = vmatmul.f32.gmra.mxu0 %v1656
      %v1658 = vpop.f32.mrf.mxu0
      %v1659 = vadd.f32 %v1466, %v1658
      %v1660 = vand.u32 %v706, 4294901760
      %1661 = vmatmul.f32.gmra.mxu0 %v1660
      %v1662 = vpop.f32.mrf.mxu0
      %v1663 = vadd.f32 %v1472, %v1662
      %v1664 = vand.u32 %v709, 4294901760
      %1665 = vmatmul.f32.gmra.mxu0 %v1664
      %v1666 = vpop.f32.mrf.mxu0
      %v1667 = vadd.f32 %v1478, %v1666
      %v1668 = vand.u32 %v712, 4294901760
      %1669 = vmatmul.f32.gmra.mxu0 %v1668
      %v1670 = vpop.f32.mrf.mxu0
      %v1671 = vadd.f32 %v1484, %v1670
      %v1672 = vand.u32 %v715, 4294901760
      %1673 = vmatmul.f32.gmra.mxu0 %v1672
      %v1674 = vpop.f32.mrf.mxu0
      %v1675 = vadd.f32 %v1490, %v1674
      %v1676 = vand.u32 %v718, 4294901760
      %1677 = vmatmul.f32.gmra.mxu0 %v1676
      %v1678 = vpop.f32.mrf.mxu0
      %v1679 = vadd.f32 %v1496, %v1678
      %v1680 = vand.u32 %v721, 4294901760
      %1681 = vmatmul.f32.gmra.mxu0 %v1680
      %v1682 = vpop.f32.mrf.mxu0
      %v1683 = vadd.f32 %v1502, %v1682
      %v1684 = vand.u32 %v724, 4294901760
      %1685 = vmatmul.f32.gmra.mxu0 %v1684
      %v1686 = vpop.f32.mrf.mxu0
      %v1687 = vadd.f32 %v1508, %v1686
      %v1688 = vand.u32 %v727, 4294901760
      %1689 = vmatmul.f32.gmra.mxu0 %v1688
      %v1690 = vpop.f32.mrf.mxu0
      %v1691 = vadd.f32 %v1514, %v1690
      %v1692 = vand.u32 %v730, 4294901760
      %1693 = vmatmul.f32.gmra.mxu0 %v1692
      %v1694 = vpop.f32.mrf.mxu0
      %v1695 = vadd.f32 %v1520, %v1694
      %v1696 = vand.u32 %v733, 4294901760
      %1697 = vmatmul.f32.gmra.mxu0 %v1696
      %v1698 = vpop.f32.mrf.mxu0
      %v1699 = vadd.f32 %v1526, %v1698
      %v1700 = vand.u32 %v736, 4294901760
      %1701 = vmatmul.f32.gmra.mxu0 %v1700
      %v1702 = vpop.f32.mrf.mxu0
      %v1703 = vadd.f32 %v1532, %v1702
      %v1704 = vand.u32 %v739, 4294901760
      %1705 = vmatmul.f32.gmra.mxu0 %v1704
      %v1706 = vpop.f32.mrf.mxu0
      %v1707 = vadd.f32 %v1538, %v1706
      %v1708 = vand.u32 %v742, 4294901760
      %1709 = vmatmul.f32.gmra.mxu0 %v1708
      %v1710 = vpop.f32.mrf.mxu0
      %v1711 = vadd.f32 %v1544, %v1710
      %v1712 = vand.u32 %v745, 4294901760
      %1713 = vmatmul.f32.gmra.mxu0 %v1712
      %v1714 = vpop.f32.mrf.mxu0
      %v1715 = vadd.f32 %v1550, %v1714
      %v1716 = vand.u32 %v748, 4294901760
      %1717 = vmatmul.f32.gmra.mxu0 %v1716
      %v1718 = vpop.f32.mrf.mxu0
      %v1719 = vadd.f32 %v1556, %v1718
      %v1720 = vand.u32 %v751, 4294901760
      %1721 = vmatmul.f32.gmra.mxu0 %v1720
      %v1722 = vpop.f32.mrf.mxu0
      %v1723 = vadd.f32 %v1562, %v1722
      %v1724 = vand.u32 %v754, 4294901760
      %1725 = vmatmul.f32.gmra.mxu0 %v1724
      %v1726 = vpop.f32.mrf.mxu0
      %v1727 = vadd.f32 %v1568, %v1726
      %v1728 = vand.u32 %v757, 4294901760
      %1729 = vmatmul.f32.gmra.mxu0 %v1728
      %v1730 = vpop.f32.mrf.mxu0
      %v1731 = vadd.f32 %v1574, %v1730
      %v1732 = vand.u32 %v760, 4294901760
      %1733 = vmatmul.f32.gmra.mxu0 %v1732
      %v1734 = vpop.f32.mrf.mxu0
      %v1735 = vadd.f32 %v1580, %v1734
      %v1736 = vand.u32 %v763, 4294901760
      %1737 = vmatmul.f32.gmra.mxu0 %v1736
      %v1738 = vpop.f32.mrf.mxu0
      %v1739 = vadd.f32 %v1586, %v1738
      %v1740 = vand.u32 %v766, 4294901760
      %1741 = vmatmul.f32.gmra.mxu0 %v1740
      %v1742 = vpop.f32.mrf.mxu0
      %v1743 = vadd.f32 %v1592, %v1742
      %1744 = vdwg.mxu0
      %1745 = vmatpush.msra.mxu0 0.0
      %1746 = vmatpush.msra.mxu0 0.0
      %1747 = vmatpush.msra.mxu0 0.0
      %1748 = vmatpush.msra.mxu0 0.0
      %1749 = vmatpush.msra.mxu0 0.0
      %1750 = vmatpush.msra.mxu0 0.0
      %1751 = vmatpush.msra.mxu0 0.0
      %1752 = vmatpush.msra.mxu0 0.0
      %1753 = vmatpush.msra.mxu0 0.0
      %1754 = vmatpush.msra.mxu0 0.0
      %1755 = vmatpush.msra.mxu0 0.0
      %1756 = vmatpush.msra.mxu0 0.0
      %1757 = vmatpush.msra.mxu0 0.0
      %1758 = vmatpush.msra.mxu0 0.0
      %v1759 = vand.u32 %v770, 4294901760
      %1760 = vmatpush.msra.mxu0 %v1759
      %v1761 = vand.u32 %v669, 4294901760
      %1762 = vmatpush.msra.mxu0 %v1761
      %v1763 = vand.u32 %v673, 4294901760
      %1764 = vmatmul.f32.gmra.mxu0 %v1763
      %v1765 = vpop.f32.mrf.mxu0
      %v1766 = vadd.f32 %v1619, %v1765
      %v1767 = vand.u32 %v676, 4294901760
      %1768 = vmatmul.f32.gmra.mxu0 %v1767
      %v1769 = vpop.f32.mrf.mxu0
      %v1770 = vadd.f32 %v1623, %v1769
      %v1771 = vand.u32 %v679, 4294901760
      %1772 = vmatmul.f32.gmra.mxu0 %v1771
      %v1773 = vpop.f32.mrf.mxu0
      %v1774 = vadd.f32 %v1627, %v1773
      %v1775 = vand.u32 %v682, 4294901760
      %1776 = vmatmul.f32.gmra.mxu0 %v1775
      %v1777 = vpop.f32.mrf.mxu0
      %v1778 = vadd.f32 %v1631, %v1777
      %v1779 = vand.u32 %v685, 4294901760
      %1780 = vmatmul.f32.gmra.mxu0 %v1779
      %v1781 = vpop.f32.mrf.mxu0
      %v1782 = vadd.f32 %v1635, %v1781
      %v1783 = vand.u32 %v688, 4294901760
      %1784 = vmatmul.f32.gmra.mxu0 %v1783
      %v1785 = vpop.f32.mrf.mxu0
      %v1786 = vadd.f32 %v1639, %v1785
      %v1787 = vand.u32 %v691, 4294901760
      %1788 = vmatmul.f32.gmra.mxu0 %v1787
      %v1789 = vpop.f32.mrf.mxu0
      %v1790 = vadd.f32 %v1643, %v1789
      %v1791 = vand.u32 %v694, 4294901760
      %1792 = vmatmul.f32.gmra.mxu0 %v1791
      %v1793 = vpop.f32.mrf.mxu0
      %v1794 = vadd.f32 %v1647, %v1793
      %v1795 = vand.u32 %v697, 4294901760
      %1796 = vmatmul.f32.gmra.mxu0 %v1795
      %v1797 = vpop.f32.mrf.mxu0
      %v1798 = vadd.f32 %v1651, %v1797
      %v1799 = vand.u32 %v700, 4294901760
      %1800 = vmatmul.f32.gmra.mxu0 %v1799
      %v1801 = vpop.f32.mrf.mxu0
      %v1802 = vadd.f32 %v1655, %v1801
      %v1803 = vand.u32 %v703, 4294901760
      %1804 = vmatmul.f32.gmra.mxu0 %v1803
      %v1805 = vpop.f32.mrf.mxu0
      %v1806 = vadd.f32 %v1659, %v1805
      %v1807 = vand.u32 %v706, 4294901760
      %1808 = vmatmul.f32.gmra.mxu0 %v1807
      %v1809 = vpop.f32.mrf.mxu0
      %v1810 = vadd.f32 %v1663, %v1809
      %v1811 = vand.u32 %v709, 4294901760
      %1812 = vmatmul.f32.gmra.mxu0 %v1811
      %v1813 = vpop.f32.mrf.mxu0
      %v1814 = vadd.f32 %v1667, %v1813
      %v1815 = vand.u32 %v712, 4294901760
      %1816 = vmatmul.f32.gmra.mxu0 %v1815
      %v1817 = vpop.f32.mrf.mxu0
      %v1818 = vadd.f32 %v1671, %v1817
      %v1819 = vand.u32 %v715, 4294901760
      %1820 = vmatmul.f32.gmra.mxu0 %v1819
      %v1821 = vpop.f32.mrf.mxu0
      %v1822 = vadd.f32 %v1675, %v1821
      %v1823 = vand.u32 %v718, 4294901760
      %1824 = vmatmul.f32.gmra.mxu0 %v1823
      %v1825 = vpop.f32.mrf.mxu0
      %v1826 = vadd.f32 %v1679, %v1825
      %v1827 = vand.u32 %v721, 4294901760
      %1828 = vmatmul.f32.gmra.mxu0 %v1827
      %v1829 = vpop.f32.mrf.mxu0
      %v1830 = vadd.f32 %v1683, %v1829
      %v1831 = vand.u32 %v724, 4294901760
      %1832 = vmatmul.f32.gmra.mxu0 %v1831
      %v1833 = vpop.f32.mrf.mxu0
      %v1834 = vadd.f32 %v1687, %v1833
      %v1835 = vand.u32 %v727, 4294901760
      %1836 = vmatmul.f32.gmra.mxu0 %v1835
      %v1837 = vpop.f32.mrf.mxu0
      %v1838 = vadd.f32 %v1691, %v1837
      %v1839 = vand.u32 %v730, 4294901760
      %1840 = vmatmul.f32.gmra.mxu0 %v1839
      %v1841 = vpop.f32.mrf.mxu0
      %v1842 = vadd.f32 %v1695, %v1841
      %v1843 = vand.u32 %v733, 4294901760
      %1844 = vmatmul.f32.gmra.mxu0 %v1843
      %v1845 = vpop.f32.mrf.mxu0
      %v1846 = vadd.f32 %v1699, %v1845
      %v1847 = vand.u32 %v736, 4294901760
      %1848 = vmatmul.f32.gmra.mxu0 %v1847
      %v1849 = vpop.f32.mrf.mxu0
      %v1850 = vadd.f32 %v1703, %v1849
      %v1851 = vand.u32 %v739, 4294901760
      %1852 = vmatmul.f32.gmra.mxu0 %v1851
      %v1853 = vpop.f32.mrf.mxu0
      %v1854 = vadd.f32 %v1707, %v1853
      %v1855 = vand.u32 %v742, 4294901760
      %1856 = vmatmul.f32.gmra.mxu0 %v1855
      %v1857 = vpop.f32.mrf.mxu0
      %v1858 = vadd.f32 %v1711, %v1857
      %v1859 = vand.u32 %v745, 4294901760
      %1860 = vmatmul.f32.gmra.mxu0 %v1859
      %v1861 = vpop.f32.mrf.mxu0
      %v1862 = vadd.f32 %v1715, %v1861
      %v1863 = vand.u32 %v748, 4294901760
      %1864 = vmatmul.f32.gmra.mxu0 %v1863
      %v1865 = vpop.f32.mrf.mxu0
      %v1866 = vadd.f32 %v1719, %v1865
      %v1867 = vand.u32 %v751, 4294901760
      %1868 = vmatmul.f32.gmra.mxu0 %v1867
      %v1869 = vpop.f32.mrf.mxu0
      %v1870 = vadd.f32 %v1723, %v1869
      %v1871 = vand.u32 %v754, 4294901760
      %1872 = vmatmul.f32.gmra.mxu0 %v1871
      %v1873 = vpop.f32.mrf.mxu0
      %v1874 = vadd.f32 %v1727, %v1873
      %v1875 = vand.u32 %v757, 4294901760
      %1876 = vmatmul.f32.gmra.mxu0 %v1875
      %v1877 = vpop.f32.mrf.mxu0
      %v1878 = vadd.f32 %v1731, %v1877
      %v1879 = vand.u32 %v760, 4294901760
      %1880 = vmatmul.f32.gmra.mxu0 %v1879
      %v1881 = vpop.f32.mrf.mxu0
      %v1882 = vadd.f32 %v1735, %v1881
      %v1883 = vand.u32 %v763, 4294901760
      %1884 = vmatmul.f32.gmra.mxu0 %v1883
      %v1885 = vpop.f32.mrf.mxu0
      %v1886 = vadd.f32 %v1739, %v1885
      %v1887 = vand.u32 %v766, 4294901760
      %1888 = vmatmul.f32.gmra.mxu0 %v1887
      %v1889 = vpop.f32.mrf.mxu0
      %v1890 = vadd.f32 %v1743, %v1889
      %1891 = vdwg.mxu0
      %v1894 = vrot.slane %v663, 1
      %v1895 = vrot.slane %v663, 2
      %v1896 = vrot.slane %v663, 3
      %v1897 = vrot.slane %v663, 4
      %v1898 = vrot.slane %v663, 5
      %v1899 = vrot.slane %v663, 6
      %v1900 = vrot.slane %v663, 7
      %v1901 = vrot.slane %v667, 1
      %v1902 = vrot.slane %v667, 2
      %v1903 = vrot.slane %v667, 3
      %v1904 = vrot.slane %v667, 4
      %v1905 = vrot.slane %v667, 5
      %v1906 = vrot.slane %v667, 6
      %v1907 = vrot.slane %v667, 7
      %v1908 = vperm.slane %v663, 0
      %v1909 = vperm.slane %v1894, 0
      %v1910 = vperm.slane %v1895, 0
      %v1911 = vperm.slane %v1896, 0
      %v1912 = vperm.slane %v1897, 0
      %v1913 = vperm.slane %v1898, 0
      %v1914 = vperm.slane %v1899, 0
      %v1915 = vperm.slane %v1900, 0
      %v1916 = vperm.slane %v667, 0
      %v1917 = vperm.slane %v1901, 0
      %v1918 = vperm.slane %v1902, 0
      %v1919 = vperm.slane %v1903, 0
      %v1920 = vperm.slane %v1904, 0
      %v1921 = vperm.slane %v1905, 0
      %v1922 = vperm.slane %v1906, 0
      %v1923 = vperm.slane %v1907, 0
      %v1940 = vadd.f32 %v1908, %v663
      %v1941 = vadd.f32 %v1908, %v667
      %v1942 = vadd.f32 %v1909, %v663
      %v1943 = vadd.f32 %v1909, %v667
      %v1944 = vadd.f32 %v1910, %v663
      %v1945 = vadd.f32 %v1910, %v667
      %v1946 = vadd.f32 %v1911, %v663
      %v1947 = vadd.f32 %v1911, %v667
      %v1948 = vadd.f32 %v1912, %v663
      %v1949 = vadd.f32 %v1912, %v667
      %v1950 = vadd.f32 %v1913, %v663
      %v1951 = vadd.f32 %v1913, %v667
      %v1952 = vadd.f32 %v1914, %v663
      %v1953 = vadd.f32 %v1914, %v667
      %v1954 = vadd.f32 %v1915, %v663
      %v1955 = vadd.f32 %v1915, %v667
      %v1956 = vadd.f32 %v1916, %v663
      %v1957 = vadd.f32 %v1916, %v667
      %v1958 = vadd.f32 %v1917, %v663
      %v1959 = vadd.f32 %v1917, %v667
      %v1960 = vadd.f32 %v1918, %v663
      %v1961 = vadd.f32 %v1918, %v667
      %v1962 = vadd.f32 %v1919, %v663
      %v1963 = vadd.f32 %v1919, %v667
      %v1964 = vadd.f32 %v1920, %v663
      %v1965 = vadd.f32 %v1920, %v667
      %v1966 = vadd.f32 %v1921, %v663
      %v1967 = vadd.f32 %v1921, %v667
      %v1968 = vadd.f32 %v1922, %v663
      %v1969 = vadd.f32 %v1922, %v667
      %v1970 = vadd.f32 %v1923, %v663
      %v1971 = vadd.f32 %v1923, %v667
      %v1972 = vadd.f32 %v1940, %v1766
      %v1973 = vadd.f32 %v1941, %v1770
      %v1974 = vadd.f32 %v1942, %v1774
      %v1975 = vadd.f32 %v1943, %v1778
      %v1976 = vadd.f32 %v1944, %v1782
      %v1977 = vadd.f32 %v1945, %v1786
      %v1978 = vadd.f32 %v1946, %v1790
      %v1979 = vadd.f32 %v1947, %v1794
      %v1980 = vadd.f32 %v1948, %v1798
      %v1981 = vadd.f32 %v1949, %v1802
      %v1982 = vadd.f32 %v1950, %v1806
      %v1983 = vadd.f32 %v1951, %v1810
      %v1984 = vadd.f32 %v1952, %v1814
      %v1985 = vadd.f32 %v1953, %v1818
      %v1986 = vadd.f32 %v1954, %v1822
      %v1987 = vadd.f32 %v1955, %v1826
      %v1988 = vadd.f32 %v1956, %v1830
      %v1989 = vadd.f32 %v1957, %v1834
      %v1990 = vadd.f32 %v1958, %v1838
      %v1991 = vadd.f32 %v1959, %v1842
      %v1992 = vadd.f32 %v1960, %v1846
      %v1993 = vadd.f32 %v1961, %v1850
      %v1994 = vadd.f32 %v1962, %v1854
      %v1995 = vadd.f32 %v1963, %v1858
      %v1996 = vadd.f32 %v1964, %v1862
      %v1997 = vadd.f32 %v1965, %v1866
      %v1998 = vadd.f32 %v1966, %v1870
      %v1999 = vadd.f32 %v1967, %v1874
      %v2000 = vadd.f32 %v1968, %v1878
      %v2001 = vadd.f32 %v1969, %v1882
      %v2002 = vadd.f32 %v1970, %v1886
      %v2003 = vadd.f32 %v1971, %v1890
      %v2004 = vld [vmem:[%s4] sm:$0x1]
      %v2006 = vperm.slane %v2004, 0
      %v2008 = vadd.f32 %v1972, %v2006
      %v2009 = vadd.f32 %v1973, %v2006
      %v2010 = vadd.f32 %v1974, %v2006
      %v2011 = vadd.f32 %v1975, %v2006
      %v2012 = vadd.f32 %v1976, %v2006
      %v2013 = vadd.f32 %v1977, %v2006
      %v2014 = vadd.f32 %v1978, %v2006
      %v2015 = vadd.f32 %v1979, %v2006
      %v2016 = vadd.f32 %v1980, %v2006
      %v2017 = vadd.f32 %v1981, %v2006
      %v2018 = vadd.f32 %v1982, %v2006
      %v2019 = vadd.f32 %v1983, %v2006
      %v2020 = vadd.f32 %v1984, %v2006
      %v2021 = vadd.f32 %v1985, %v2006
      %v2022 = vadd.f32 %v1986, %v2006
      %v2023 = vadd.f32 %v1987, %v2006
      %v2024 = vadd.f32 %v1988, %v2006
      %v2025 = vadd.f32 %v1989, %v2006
      %v2026 = vadd.f32 %v1990, %v2006
      %v2027 = vadd.f32 %v1991, %v2006
      %v2028 = vadd.f32 %v1992, %v2006
      %v2029 = vadd.f32 %v1993, %v2006
      %v2030 = vadd.f32 %v1994, %v2006
      %v2031 = vadd.f32 %v1995, %v2006
      %v2032 = vadd.f32 %v1996, %v2006
      %v2033 = vadd.f32 %v1997, %v2006
      %v2034 = vadd.f32 %v1998, %v2006
      %v2035 = vadd.f32 %v1999, %v2006
      %v2036 = vadd.f32 %v2000, %v2006
      %v2037 = vadd.f32 %v2001, %v2006
      %v2038 = vadd.f32 %v2002, %v2006
      %v2039 = vadd.f32 %v2003, %v2006
      %v2040 = vmax.f32 %v2008, 0.0
      %v2041 = vmax.f32 %v2009, 0.0
      %v2042 = vmax.f32 %v2010, 0.0
      %v2043 = vmax.f32 %v2011, 0.0
      %v2044 = vmax.f32 %v2012, 0.0
      %v2045 = vmax.f32 %v2013, 0.0
      %v2046 = vmax.f32 %v2014, 0.0
      %v2047 = vmax.f32 %v2015, 0.0
      %v2048 = vmax.f32 %v2016, 0.0
      %v2049 = vmax.f32 %v2017, 0.0
      %v2050 = vmax.f32 %v2018, 0.0
      %v2051 = vmax.f32 %v2019, 0.0
      %v2052 = vmax.f32 %v2020, 0.0
      %v2053 = vmax.f32 %v2021, 0.0
      %v2054 = vmax.f32 %v2022, 0.0
      %v2055 = vmax.f32 %v2023, 0.0
      %v2056 = vmax.f32 %v2024, 0.0
      %v2057 = vmax.f32 %v2025, 0.0
      %v2058 = vmax.f32 %v2026, 0.0
      %v2059 = vmax.f32 %v2027, 0.0
      %v2060 = vmax.f32 %v2028, 0.0
      %v2061 = vmax.f32 %v2029, 0.0
      %v2062 = vmax.f32 %v2030, 0.0
      %v2063 = vmax.f32 %v2031, 0.0
      %v2064 = vmax.f32 %v2032, 0.0
      %v2065 = vmax.f32 %v2033, 0.0
      %v2066 = vmax.f32 %v2034, 0.0
      %v2067 = vmax.f32 %v2035, 0.0
      %v2068 = vmax.f32 %v2036, 0.0
      %v2069 = vmax.f32 %v2037, 0.0
      %v2070 = vmax.f32 %v2038, 0.0
      %v2071 = vmax.f32 %v2039, 0.0
      %v2072 = vld [vmem:[%s5] sm:$0xff]
      %v2073 = vld [vmem:[%s5 + $0x8] sm:$0xff]
      %v2074 = vld [vmem:[%s5 + $0x10] sm:$0xff]
      %v2075 = vld [vmem:[%s5 + $0x18] sm:$0xff]
      %s2076 = sld [smem:[#allocation2]]
      %v2077 = vstv %s2076
      %v2079 = vsel %vm446, %v2040, 0
      %v2082 = vsel %vm446, %v2041, 0
      %v2085 = vsel %vm446, %v2042, 0
      %v2088 = vsel %vm446, %v2043, 0
      %v2091 = vsel %vm446, %v2044, 0
      %v2094 = vsel %vm446, %v2045, 0
      %v2097 = vsel %vm446, %v2046, 0
      %v2100 = vsel %vm446, %v2047, 0
      %v2103 = vsel %vm446, %v2048, 0
      %v2106 = vsel %vm446, %v2049, 0
      %v2109 = vsel %vm446, %v2050, 0
      %v2112 = vsel %vm446, %v2051, 0
      %v2115 = vsel %vm446, %v2052, 0
      %v2118 = vsel %vm446, %v2053, 0
      %v2121 = vsel %vm446, %v2054, 0
      %v2124 = vsel %vm446, %v2055, 0
      %v2127 = vsel %vm446, %v2056, 0
      %v2130 = vsel %vm446, %v2057, 0
      %v2133 = vsel %vm446, %v2058, 0
      %v2136 = vsel %vm446, %v2059, 0
      %v2139 = vsel %vm446, %v2060, 0
      %v2142 = vsel %vm446, %v2061, 0
      %v2145 = vsel %vm446, %v2062, 0
      %v2148 = vsel %vm446, %v2063, 0
      %v2151 = vsel %vm446, %v2064, 0
      %v2154 = vsel %vm446, %v2065, 0
      %v2157 = vsel %vm446, %v2066, 0
      %v2160 = vsel %vm446, %v2067, 0
      %v2163 = vsel %vm446, %v2068, 0
      %v2166 = vsel %vm446, %v2069, 0
      %v2169 = vsel %vm446, %v2070, 0
      %v2172 = vsel %vm446, %v2071, 0
      %2174 = vmatpush.msra.mxu0 0.0
      %2175 = vmatpush.msra.mxu0 0.0
      %2176 = vmatpush.msra.mxu0 0.0
      %2177 = vmatpush.msra.mxu0 0.0
      %2178 = vmatpush.msra.mxu0 0.0
      %2179 = vmatpush.msra.mxu0 0.0
      %2180 = vmatpush.msra.mxu0 0.0
      %2181 = vmatpush.msra.mxu0 0.0
      %2182 = vmatpush.msra.mxu0 0.0
      %2183 = vmatpush.msra.mxu0 0.0
      %2184 = vmatpush.msra.mxu0 0.0
      %2185 = vmatpush.msra.mxu0 0.0
      %v2186 = vand.u32 %v2075, 4294901760
      %2187 = vmatpush.msra.mxu0 %v2186
      %v2188 = vand.u32 %v2074, 4294901760
      %2189 = vmatpush.msra.mxu0 %v2188
      %v2190 = vand.u32 %v2073, 4294901760
      %2191 = vmatpush.msra.mxu0 %v2190
      %v2192 = vand.u32 %v2072, 4294901760
      %2193 = vmatpush.msra.mxu0 %v2192
      %v2194 = vand.u32 %v2079, 4294901760
      %v2195 = vsub.f32 %v2079, %v2194
      %v2196 = vand.u32 %v2195, 4294901760
      %v2197 = vsub.f32 %v2195, %v2196
      %v2198 = vand.u32 %v2197, 4294901760
      %2199 = vmatmul.f32.gmra.mxu0 %v2198
      %v2200 = vpop.f32.mrf.mxu0
      %v2201 = vadd.f32 %v2077, %v2200
      %v2202 = vand.u32 %v2082, 4294901760
      %v2203 = vsub.f32 %v2082, %v2202
      %v2204 = vand.u32 %v2203, 4294901760
      %v2205 = vsub.f32 %v2203, %v2204
      %v2206 = vand.u32 %v2205, 4294901760
      %2207 = vmatmul.f32.gmra.mxu0 %v2206
      %v2208 = vpop.f32.mrf.mxu0
      %v2209 = vadd.f32 %v2077, %v2208
      %v2210 = vand.u32 %v2085, 4294901760
      %v2211 = vsub.f32 %v2085, %v2210
      %v2212 = vand.u32 %v2211, 4294901760
      %v2213 = vsub.f32 %v2211, %v2212
      %v2214 = vand.u32 %v2213, 4294901760
      %2215 = vmatmul.f32.gmra.mxu0 %v2214
      %v2216 = vpop.f32.mrf.mxu0
      %v2217 = vadd.f32 %v2077, %v2216
      %v2218 = vand.u32 %v2088, 4294901760
      %v2219 = vsub.f32 %v2088, %v2218
      %v2220 = vand.u32 %v2219, 4294901760
      %v2221 = vsub.f32 %v2219, %v2220
      %v2222 = vand.u32 %v2221, 4294901760
      %2223 = vmatmul.f32.gmra.mxu0 %v2222
      %v2224 = vpop.f32.mrf.mxu0
      %v2225 = vadd.f32 %v2077, %v2224
      %v2226 = vand.u32 %v2091, 4294901760
      %v2227 = vsub.f32 %v2091, %v2226
      %v2228 = vand.u32 %v2227, 4294901760
      %v2229 = vsub.f32 %v2227, %v2228
      %v2230 = vand.u32 %v2229, 4294901760
      %2231 = vmatmul.f32.gmra.mxu0 %v2230
      %v2232 = vpop.f32.mrf.mxu0
      %v2233 = vadd.f32 %v2077, %v2232
      %v2234 = vand.u32 %v2094, 4294901760
      %v2235 = vsub.f32 %v2094, %v2234
      %v2236 = vand.u32 %v2235, 4294901760
      %v2237 = vsub.f32 %v2235, %v2236
      %v2238 = vand.u32 %v2237, 4294901760
      %2239 = vmatmul.f32.gmra.mxu0 %v2238
      %v2240 = vpop.f32.mrf.mxu0
      %v2241 = vadd.f32 %v2077, %v2240
      %v2242 = vand.u32 %v2097, 4294901760
      %v2243 = vsub.f32 %v2097, %v2242
      %v2244 = vand.u32 %v2243, 4294901760
      %v2245 = vsub.f32 %v2243, %v2244
      %v2246 = vand.u32 %v2245, 4294901760
      %2247 = vmatmul.f32.gmra.mxu0 %v2246
      %v2248 = vpop.f32.mrf.mxu0
      %v2249 = vadd.f32 %v2077, %v2248
      %v2250 = vand.u32 %v2100, 4294901760
      %v2251 = vsub.f32 %v2100, %v2250
      %v2252 = vand.u32 %v2251, 4294901760
      %v2253 = vsub.f32 %v2251, %v2252
      %v2254 = vand.u32 %v2253, 4294901760
      %2255 = vmatmul.f32.gmra.mxu0 %v2254
      %v2256 = vpop.f32.mrf.mxu0
      %v2257 = vadd.f32 %v2077, %v2256
      %v2258 = vand.u32 %v2103, 4294901760
      %v2259 = vsub.f32 %v2103, %v2258
      %v2260 = vand.u32 %v2259, 4294901760
      %v2261 = vsub.f32 %v2259, %v2260
      %v2262 = vand.u32 %v2261, 4294901760
      %2263 = vmatmul.f32.gmra.mxu0 %v2262
      %v2264 = vpop.f32.mrf.mxu0
      %v2265 = vadd.f32 %v2077, %v2264
      %v2266 = vand.u32 %v2106, 4294901760
      %v2267 = vsub.f32 %v2106, %v2266
      %v2268 = vand.u32 %v2267, 4294901760
      %v2269 = vsub.f32 %v2267, %v2268
      %v2270 = vand.u32 %v2269, 4294901760
      %2271 = vmatmul.f32.gmra.mxu0 %v2270
      %v2272 = vpop.f32.mrf.mxu0
      %v2273 = vadd.f32 %v2077, %v2272
      %v2274 = vand.u32 %v2109, 4294901760
      %v2275 = vsub.f32 %v2109, %v2274
      %v2276 = vand.u32 %v2275, 4294901760
      %v2277 = vsub.f32 %v2275, %v2276
      %v2278 = vand.u32 %v2277, 4294901760
      %2279 = vmatmul.f32.gmra.mxu0 %v2278
      %v2280 = vpop.f32.mrf.mxu0
      %v2281 = vadd.f32 %v2077, %v2280
      %v2282 = vand.u32 %v2112, 4294901760
      %v2283 = vsub.f32 %v2112, %v2282
      %v2284 = vand.u32 %v2283, 4294901760
      %v2285 = vsub.f32 %v2283, %v2284
      %v2286 = vand.u32 %v2285, 4294901760
      %2287 = vmatmul.f32.gmra.mxu0 %v2286
      %v2288 = vpop.f32.mrf.mxu0
      %v2289 = vadd.f32 %v2077, %v2288
      %v2290 = vand.u32 %v2115, 4294901760
      %v2291 = vsub.f32 %v2115, %v2290
      %v2292 = vand.u32 %v2291, 4294901760
      %v2293 = vsub.f32 %v2291, %v2292
      %v2294 = vand.u32 %v2293, 4294901760
      %2295 = vmatmul.f32.gmra.mxu0 %v2294
      %v2296 = vpop.f32.mrf.mxu0
      %v2297 = vadd.f32 %v2077, %v2296
      %v2298 = vand.u32 %v2118, 4294901760
      %v2299 = vsub.f32 %v2118, %v2298
      %v2300 = vand.u32 %v2299, 4294901760
      %v2301 = vsub.f32 %v2299, %v2300
      %v2302 = vand.u32 %v2301, 4294901760
      %2303 = vmatmul.f32.gmra.mxu0 %v2302
      %v2304 = vpop.f32.mrf.mxu0
      %v2305 = vadd.f32 %v2077, %v2304
      %v2306 = vand.u32 %v2121, 4294901760
      %v2307 = vsub.f32 %v2121, %v2306
      %v2308 = vand.u32 %v2307, 4294901760
      %v2309 = vsub.f32 %v2307, %v2308
      %v2310 = vand.u32 %v2309, 4294901760
      %2311 = vmatmul.f32.gmra.mxu0 %v2310
      %v2312 = vpop.f32.mrf.mxu0
      %v2313 = vadd.f32 %v2077, %v2312
      %v2314 = vand.u32 %v2124, 4294901760
      %v2315 = vsub.f32 %v2124, %v2314
      %v2316 = vand.u32 %v2315, 4294901760
      %v2317 = vsub.f32 %v2315, %v2316
      %v2318 = vand.u32 %v2317, 4294901760
      %2319 = vmatmul.f32.gmra.mxu0 %v2318
      %v2320 = vpop.f32.mrf.mxu0
      %v2321 = vadd.f32 %v2077, %v2320
      %v2322 = vand.u32 %v2127, 4294901760
      %v2323 = vsub.f32 %v2127, %v2322
      %v2324 = vand.u32 %v2323, 4294901760
      %v2325 = vsub.f32 %v2323, %v2324
      %v2326 = vand.u32 %v2325, 4294901760
      %2327 = vmatmul.f32.gmra.mxu0 %v2326
      %v2328 = vpop.f32.mrf.mxu0
      %v2329 = vadd.f32 %v2077, %v2328
      %v2330 = vand.u32 %v2130, 4294901760
      %v2331 = vsub.f32 %v2130, %v2330
      %v2332 = vand.u32 %v2331, 4294901760
      %v2333 = vsub.f32 %v2331, %v2332
      %v2334 = vand.u32 %v2333, 4294901760
      %2335 = vmatmul.f32.gmra.mxu0 %v2334
      %v2336 = vpop.f32.mrf.mxu0
      %v2337 = vadd.f32 %v2077, %v2336
      %v2338 = vand.u32 %v2133, 4294901760
      %v2339 = vsub.f32 %v2133, %v2338
      %v2340 = vand.u32 %v2339, 4294901760
      %v2341 = vsub.f32 %v2339, %v2340
      %v2342 = vand.u32 %v2341, 4294901760
      %2343 = vmatmul.f32.gmra.mxu0 %v2342
      %v2344 = vpop.f32.mrf.mxu0
      %v2345 = vadd.f32 %v2077, %v2344
      %v2346 = vand.u32 %v2136, 4294901760
      %v2347 = vsub.f32 %v2136, %v2346
      %v2348 = vand.u32 %v2347, 4294901760
      %v2349 = vsub.f32 %v2347, %v2348
      %v2350 = vand.u32 %v2349, 4294901760
      %2351 = vmatmul.f32.gmra.mxu0 %v2350
      %v2352 = vpop.f32.mrf.mxu0
      %v2353 = vadd.f32 %v2077, %v2352
      %v2354 = vand.u32 %v2139, 4294901760
      %v2355 = vsub.f32 %v2139, %v2354
      %v2356 = vand.u32 %v2355, 4294901760
      %v2357 = vsub.f32 %v2355, %v2356
      %v2358 = vand.u32 %v2357, 4294901760
      %2359 = vmatmul.f32.gmra.mxu0 %v2358
      %v2360 = vpop.f32.mrf.mxu0
      %v2361 = vadd.f32 %v2077, %v2360
      %v2362 = vand.u32 %v2142, 4294901760
      %v2363 = vsub.f32 %v2142, %v2362
      %v2364 = vand.u32 %v2363, 4294901760
      %v2365 = vsub.f32 %v2363, %v2364
      %v2366 = vand.u32 %v2365, 4294901760
      %2367 = vmatmul.f32.gmra.mxu0 %v2366
      %v2368 = vpop.f32.mrf.mxu0
      %v2369 = vadd.f32 %v2077, %v2368
      %v2370 = vand.u32 %v2145, 4294901760
      %v2371 = vsub.f32 %v2145, %v2370
      %v2372 = vand.u32 %v2371, 4294901760
      %v2373 = vsub.f32 %v2371, %v2372
      %v2374 = vand.u32 %v2373, 4294901760
      %2375 = vmatmul.f32.gmra.mxu0 %v2374
      %v2376 = vpop.f32.mrf.mxu0
      %v2377 = vadd.f32 %v2077, %v2376
      %v2378 = vand.u32 %v2148, 4294901760
      %v2379 = vsub.f32 %v2148, %v2378
      %v2380 = vand.u32 %v2379, 4294901760
      %v2381 = vsub.f32 %v2379, %v2380
      %v2382 = vand.u32 %v2381, 4294901760
      %2383 = vmatmul.f32.gmra.mxu0 %v2382
      %v2384 = vpop.f32.mrf.mxu0
      %v2385 = vadd.f32 %v2077, %v2384
      %v2386 = vand.u32 %v2151, 4294901760
      %v2387 = vsub.f32 %v2151, %v2386
      %v2388 = vand.u32 %v2387, 4294901760
      %v2389 = vsub.f32 %v2387, %v2388
      %v2390 = vand.u32 %v2389, 4294901760
      %2391 = vmatmul.f32.gmra.mxu0 %v2390
      %v2392 = vpop.f32.mrf.mxu0
      %v2393 = vadd.f32 %v2077, %v2392
      %v2394 = vand.u32 %v2154, 4294901760
      %v2395 = vsub.f32 %v2154, %v2394
      %v2396 = vand.u32 %v2395, 4294901760
      %v2397 = vsub.f32 %v2395, %v2396
      %v2398 = vand.u32 %v2397, 4294901760
      %2399 = vmatmul.f32.gmra.mxu0 %v2398
      %v2400 = vpop.f32.mrf.mxu0
      %v2401 = vadd.f32 %v2077, %v2400
      %v2402 = vand.u32 %v2157, 4294901760
      %v2403 = vsub.f32 %v2157, %v2402
      %v2404 = vand.u32 %v2403, 4294901760
      %v2405 = vsub.f32 %v2403, %v2404
      %v2406 = vand.u32 %v2405, 4294901760
      %2407 = vmatmul.f32.gmra.mxu0 %v2406
      %v2408 = vpop.f32.mrf.mxu0
      %v2409 = vadd.f32 %v2077, %v2408
      %v2410 = vand.u32 %v2160, 4294901760
      %v2411 = vsub.f32 %v2160, %v2410
      %v2412 = vand.u32 %v2411, 4294901760
      %v2413 = vsub.f32 %v2411, %v2412
      %v2414 = vand.u32 %v2413, 4294901760
      %2415 = vmatmul.f32.gmra.mxu0 %v2414
      %v2416 = vpop.f32.mrf.mxu0
      %v2417 = vadd.f32 %v2077, %v2416
      %v2418 = vand.u32 %v2163, 4294901760
      %v2419 = vsub.f32 %v2163, %v2418
      %v2420 = vand.u32 %v2419, 4294901760
      %v2421 = vsub.f32 %v2419, %v2420
      %v2422 = vand.u32 %v2421, 4294901760
      %2423 = vmatmul.f32.gmra.mxu0 %v2422
      %v2424 = vpop.f32.mrf.mxu0
      %v2425 = vadd.f32 %v2077, %v2424
      %v2426 = vand.u32 %v2166, 4294901760
      %v2427 = vsub.f32 %v2166, %v2426
      %v2428 = vand.u32 %v2427, 4294901760
      %v2429 = vsub.f32 %v2427, %v2428
      %v2430 = vand.u32 %v2429, 4294901760
      %2431 = vmatmul.f32.gmra.mxu0 %v2430
      %v2432 = vpop.f32.mrf.mxu0
      %v2433 = vadd.f32 %v2077, %v2432
      %v2434 = vand.u32 %v2169, 4294901760
      %v2435 = vsub.f32 %v2169, %v2434
      %v2436 = vand.u32 %v2435, 4294901760
      %v2437 = vsub.f32 %v2435, %v2436
      %v2438 = vand.u32 %v2437, 4294901760
      %2439 = vmatmul.f32.gmra.mxu0 %v2438
      %v2440 = vpop.f32.mrf.mxu0
      %v2441 = vadd.f32 %v2077, %v2440
      %v2442 = vand.u32 %v2172, 4294901760
      %v2443 = vsub.f32 %v2172, %v2442
      %v2444 = vand.u32 %v2443, 4294901760
      %v2445 = vsub.f32 %v2443, %v2444
      %v2446 = vand.u32 %v2445, 4294901760
      %2447 = vmatmul.f32.gmra.mxu0 %v2446
      %v2448 = vpop.f32.mrf.mxu0
      %v2449 = vadd.f32 %v2077, %v2448
      %2450 = vdwg.mxu0
      %2451 = vmatpush.msra.mxu0 0.0
      %2452 = vmatpush.msra.mxu0 0.0
      %2453 = vmatpush.msra.mxu0 0.0
      %2454 = vmatpush.msra.mxu0 0.0
      %2455 = vmatpush.msra.mxu0 0.0
      %2456 = vmatpush.msra.mxu0 0.0
      %2457 = vmatpush.msra.mxu0 0.0
      %2458 = vmatpush.msra.mxu0 0.0
      %2459 = vmatpush.msra.mxu0 0.0
      %2460 = vmatpush.msra.mxu0 0.0
      %2461 = vmatpush.msra.mxu0 0.0
      %2462 = vmatpush.msra.mxu0 0.0
      %v2463 = vand.u32 %v2075, 4294901760
      %v2464 = vsub.f32 %v2075, %v2463
      %v2465 = vand.u32 %v2464, 4294901760
      %v2466 = vsub.f32 %v2464, %v2465
      %v2467 = vand.u32 %v2466, 4294901760
      %2468 = vmatpush.msra.mxu0 %v2467
      %v2469 = vand.u32 %v2074, 4294901760
      %v2470 = vsub.f32 %v2074, %v2469
      %v2471 = vand.u32 %v2470, 4294901760
      %v2472 = vsub.f32 %v2470, %v2471
      %v2473 = vand.u32 %v2472, 4294901760
      %2474 = vmatpush.msra.mxu0 %v2473
      %v2475 = vand.u32 %v2073, 4294901760
      %v2476 = vsub.f32 %v2073, %v2475
      %v2477 = vand.u32 %v2476, 4294901760
      %v2478 = vsub.f32 %v2476, %v2477
      %v2479 = vand.u32 %v2478, 4294901760
      %2480 = vmatpush.msra.mxu0 %v2479
      %v2481 = vand.u32 %v2072, 4294901760
      %v2482 = vsub.f32 %v2072, %v2481
      %v2483 = vand.u32 %v2482, 4294901760
      %v2484 = vsub.f32 %v2482, %v2483
      %v2485 = vand.u32 %v2484, 4294901760
      %2486 = vmatpush.msra.mxu0 %v2485
      %v2487 = vand.u32 %v2079, 4294901760
      %2488 = vmatmul.f32.gmra.mxu0 %v2487
      %v2489 = vpop.f32.mrf.mxu0
      %v2490 = vadd.f32 %v2201, %v2489
      %v2491 = vand.u32 %v2082, 4294901760
      %2492 = vmatmul.f32.gmra.mxu0 %v2491
      %v2493 = vpop.f32.mrf.mxu0
      %v2494 = vadd.f32 %v2209, %v2493
      %v2495 = vand.u32 %v2085, 4294901760
      %2496 = vmatmul.f32.gmra.mxu0 %v2495
      %v2497 = vpop.f32.mrf.mxu0
      %v2498 = vadd.f32 %v2217, %v2497
      %v2499 = vand.u32 %v2088, 4294901760
      %2500 = vmatmul.f32.gmra.mxu0 %v2499
      %v2501 = vpop.f32.mrf.mxu0
      %v2502 = vadd.f32 %v2225, %v2501
      %v2503 = vand.u32 %v2091, 4294901760
      %2504 = vmatmul.f32.gmra.mxu0 %v2503
      %v2505 = vpop.f32.mrf.mxu0
      %v2506 = vadd.f32 %v2233, %v2505
      %v2507 = vand.u32 %v2094, 4294901760
      %2508 = vmatmul.f32.gmra.mxu0 %v2507
      %v2509 = vpop.f32.mrf.mxu0
      %v2510 = vadd.f32 %v2241, %v2509
      %v2511 = vand.u32 %v2097, 4294901760
      %2512 = vmatmul.f32.gmra.mxu0 %v2511
      %v2513 = vpop.f32.mrf.mxu0
      %v2514 = vadd.f32 %v2249, %v2513
      %v2515 = vand.u32 %v2100, 4294901760
      %2516 = vmatmul.f32.gmra.mxu0 %v2515
      %v2517 = vpop.f32.mrf.mxu0
      %v2518 = vadd.f32 %v2257, %v2517
      %v2519 = vand.u32 %v2103, 4294901760
      %2520 = vmatmul.f32.gmra.mxu0 %v2519
      %v2521 = vpop.f32.mrf.mxu0
      %v2522 = vadd.f32 %v2265, %v2521
      %v2523 = vand.u32 %v2106, 4294901760
      %2524 = vmatmul.f32.gmra.mxu0 %v2523
      %v2525 = vpop.f32.mrf.mxu0
      %v2526 = vadd.f32 %v2273, %v2525
      %v2527 = vand.u32 %v2109, 4294901760
      %2528 = vmatmul.f32.gmra.mxu0 %v2527
      %v2529 = vpop.f32.mrf.mxu0
      %v2530 = vadd.f32 %v2281, %v2529
      %v2531 = vand.u32 %v2112, 4294901760
      %2532 = vmatmul.f32.gmra.mxu0 %v2531
      %v2533 = vpop.f32.mrf.mxu0
      %v2534 = vadd.f32 %v2289, %v2533
      %v2535 = vand.u32 %v2115, 4294901760
      %2536 = vmatmul.f32.gmra.mxu0 %v2535
      %v2537 = vpop.f32.mrf.mxu0
      %v2538 = vadd.f32 %v2297, %v2537
      %v2539 = vand.u32 %v2118, 4294901760
      %2540 = vmatmul.f32.gmra.mxu0 %v2539
      %v2541 = vpop.f32.mrf.mxu0
      %v2542 = vadd.f32 %v2305, %v2541
      %v2543 = vand.u32 %v2121, 4294901760
      %2544 = vmatmul.f32.gmra.mxu0 %v2543
      %v2545 = vpop.f32.mrf.mxu0
      %v2546 = vadd.f32 %v2313, %v2545
      %v2547 = vand.u32 %v2124, 4294901760
      %2548 = vmatmul.f32.gmra.mxu0 %v2547
      %v2549 = vpop.f32.mrf.mxu0
      %v2550 = vadd.f32 %v2321, %v2549
      %v2551 = vand.u32 %v2127, 4294901760
      %2552 = vmatmul.f32.gmra.mxu0 %v2551
      %v2553 = vpop.f32.mrf.mxu0
      %v2554 = vadd.f32 %v2329, %v2553
      %v2555 = vand.u32 %v2130, 4294901760
      %2556 = vmatmul.f32.gmra.mxu0 %v2555
      %v2557 = vpop.f32.mrf.mxu0
      %v2558 = vadd.f32 %v2337, %v2557
      %v2559 = vand.u32 %v2133, 4294901760
      %2560 = vmatmul.f32.gmra.mxu0 %v2559
      %v2561 = vpop.f32.mrf.mxu0
      %v2562 = vadd.f32 %v2345, %v2561
      %v2563 = vand.u32 %v2136, 4294901760
      %2564 = vmatmul.f32.gmra.mxu0 %v2563
      %v2565 = vpop.f32.mrf.mxu0
      %v2566 = vadd.f32 %v2353, %v2565
      %v2567 = vand.u32 %v2139, 4294901760
      %2568 = vmatmul.f32.gmra.mxu0 %v2567
      %v2569 = vpop.f32.mrf.mxu0
      %v2570 = vadd.f32 %v2361, %v2569
      %v2571 = vand.u32 %v2142, 4294901760
      %2572 = vmatmul.f32.gmra.mxu0 %v2571
      %v2573 = vpop.f32.mrf.mxu0
      %v2574 = vadd.f32 %v2369, %v2573
      %v2575 = vand.u32 %v2145, 4294901760
      %2576 = vmatmul.f32.gmra.mxu0 %v2575
      %v2577 = vpop.f32.mrf.mxu0
      %v2578 = vadd.f32 %v2377, %v2577
      %v2579 = vand.u32 %v2148, 4294901760
      %2580 = vmatmul.f32.gmra.mxu0 %v2579
      %v2581 = vpop.f32.mrf.mxu0
      %v2582 = vadd.f32 %v2385, %v2581
      %v2583 = vand.u32 %v2151, 4294901760
      %2584 = vmatmul.f32.gmra.mxu0 %v2583
      %v2585 = vpop.f32.mrf.mxu0
      %v2586 = vadd.f32 %v2393, %v2585
      %v2587 = vand.u32 %v2154, 4294901760
      %2588 = vmatmul.f32.gmra.mxu0 %v2587
      %v2589 = vpop.f32.mrf.mxu0
      %v2590 = vadd.f32 %v2401, %v2589
      %v2591 = vand.u32 %v2157, 4294901760
      %2592 = vmatmul.f32.gmra.mxu0 %v2591
      %v2593 = vpop.f32.mrf.mxu0
      %v2594 = vadd.f32 %v2409, %v2593
      %v2595 = vand.u32 %v2160, 4294901760
      %2596 = vmatmul.f32.gmra.mxu0 %v2595
      %v2597 = vpop.f32.mrf.mxu0
      %v2598 = vadd.f32 %v2417, %v2597
      %v2599 = vand.u32 %v2163, 4294901760
      %2600 = vmatmul.f32.gmra.mxu0 %v2599
      %v2601 = vpop.f32.mrf.mxu0
      %v2602 = vadd.f32 %v2425, %v2601
      %v2603 = vand.u32 %v2166, 4294901760
      %2604 = vmatmul.f32.gmra.mxu0 %v2603
      %v2605 = vpop.f32.mrf.mxu0
      %v2606 = vadd.f32 %v2433, %v2605
      %v2607 = vand.u32 %v2169, 4294901760
      %2608 = vmatmul.f32.gmra.mxu0 %v2607
      %v2609 = vpop.f32.mrf.mxu0
      %v2610 = vadd.f32 %v2441, %v2609
      %v2611 = vand.u32 %v2172, 4294901760
      %2612 = vmatmul.f32.gmra.mxu0 %v2611
      %v2613 = vpop.f32.mrf.mxu0
      %v2614 = vadd.f32 %v2449, %v2613
      %2615 = vdwg.mxu0
      %2616 = vmatpush.msra.mxu0 0.0
      %2617 = vmatpush.msra.mxu0 0.0
      %2618 = vmatpush.msra.mxu0 0.0
      %2619 = vmatpush.msra.mxu0 0.0
      %2620 = vmatpush.msra.mxu0 0.0
      %2621 = vmatpush.msra.mxu0 0.0
      %2622 = vmatpush.msra.mxu0 0.0
      %2623 = vmatpush.msra.mxu0 0.0
      %2624 = vmatpush.msra.mxu0 0.0
      %2625 = vmatpush.msra.mxu0 0.0
      %2626 = vmatpush.msra.mxu0 0.0
      %2627 = vmatpush.msra.mxu0 0.0
      %v2628 = vand.u32 %v2075, 4294901760
      %v2629 = vsub.f32 %v2075, %v2628
      %2630 = vmatpush.msra.mxu0 %v2629
      %v2631 = vand.u32 %v2074, 4294901760
      %v2632 = vsub.f32 %v2074, %v2631
      %2633 = vmatpush.msra.mxu0 %v2632
      %v2634 = vand.u32 %v2073, 4294901760
      %v2635 = vsub.f32 %v2073, %v2634
      %2636 = vmatpush.msra.mxu0 %v2635
      %v2637 = vand.u32 %v2072, 4294901760
      %v2638 = vsub.f32 %v2072, %v2637
      %2639 = vmatpush.msra.mxu0 %v2638
      %v2640 = vand.u32 %v2079, 4294901760
      %v2641 = vsub.f32 %v2079, %v2640
      %2642 = vmatmul.f32.gmra.mxu0 %v2641
      %v2643 = vpop.f32.mrf.mxu0
      %v2644 = vadd.f32 %v2490, %v2643
      %v2645 = vand.u32 %v2082, 4294901760
      %v2646 = vsub.f32 %v2082, %v2645
      %2647 = vmatmul.f32.gmra.mxu0 %v2646
      %v2648 = vpop.f32.mrf.mxu0
      %v2649 = vadd.f32 %v2494, %v2648
      %v2650 = vand.u32 %v2085, 4294901760
      %v2651 = vsub.f32 %v2085, %v2650
      %2652 = vmatmul.f32.gmra.mxu0 %v2651
      %v2653 = vpop.f32.mrf.mxu0
      %v2654 = vadd.f32 %v2498, %v2653
      %v2655 = vand.u32 %v2088, 4294901760
      %v2656 = vsub.f32 %v2088, %v2655
      %2657 = vmatmul.f32.gmra.mxu0 %v2656
      %v2658 = vpop.f32.mrf.mxu0
      %v2659 = vadd.f32 %v2502, %v2658
      %v2660 = vand.u32 %v2091, 4294901760
      %v2661 = vsub.f32 %v2091, %v2660
      %2662 = vmatmul.f32.gmra.mxu0 %v2661
      %v2663 = vpop.f32.mrf.mxu0
      %v2664 = vadd.f32 %v2506, %v2663
      %v2665 = vand.u32 %v2094, 4294901760
      %v2666 = vsub.f32 %v2094, %v2665
      %2667 = vmatmul.f32.gmra.mxu0 %v2666
      %v2668 = vpop.f32.mrf.mxu0
      %v2669 = vadd.f32 %v2510, %v2668
      %v2670 = vand.u32 %v2097, 4294901760
      %v2671 = vsub.f32 %v2097, %v2670
      %2672 = vmatmul.f32.gmra.mxu0 %v2671
      %v2673 = vpop.f32.mrf.mxu0
      %v2674 = vadd.f32 %v2514, %v2673
      %v2675 = vand.u32 %v2100, 4294901760
      %v2676 = vsub.f32 %v2100, %v2675
      %2677 = vmatmul.f32.gmra.mxu0 %v2676
      %v2678 = vpop.f32.mrf.mxu0
      %v2679 = vadd.f32 %v2518, %v2678
      %v2680 = vand.u32 %v2103, 4294901760
      %v2681 = vsub.f32 %v2103, %v2680
      %2682 = vmatmul.f32.gmra.mxu0 %v2681
      %v2683 = vpop.f32.mrf.mxu0
      %v2684 = vadd.f32 %v2522, %v2683
      %v2685 = vand.u32 %v2106, 4294901760
      %v2686 = vsub.f32 %v2106, %v2685
      %2687 = vmatmul.f32.gmra.mxu0 %v2686
      %v2688 = vpop.f32.mrf.mxu0
      %v2689 = vadd.f32 %v2526, %v2688
      %v2690 = vand.u32 %v2109, 4294901760
      %v2691 = vsub.f32 %v2109, %v2690
      %2692 = vmatmul.f32.gmra.mxu0 %v2691
      %v2693 = vpop.f32.mrf.mxu0
      %v2694 = vadd.f32 %v2530, %v2693
      %v2695 = vand.u32 %v2112, 4294901760
      %v2696 = vsub.f32 %v2112, %v2695
      %2697 = vmatmul.f32.gmra.mxu0 %v2696
      %v2698 = vpop.f32.mrf.mxu0
      %v2699 = vadd.f32 %v2534, %v2698
      %v2700 = vand.u32 %v2115, 4294901760
      %v2701 = vsub.f32 %v2115, %v2700
      %2702 = vmatmul.f32.gmra.mxu0 %v2701
      %v2703 = vpop.f32.mrf.mxu0
      %v2704 = vadd.f32 %v2538, %v2703
      %v2705 = vand.u32 %v2118, 4294901760
      %v2706 = vsub.f32 %v2118, %v2705
      %2707 = vmatmul.f32.gmra.mxu0 %v2706
      %v2708 = vpop.f32.mrf.mxu0
      %v2709 = vadd.f32 %v2542, %v2708
      %v2710 = vand.u32 %v2121, 4294901760
      %v2711 = vsub.f32 %v2121, %v2710
      %2712 = vmatmul.f32.gmra.mxu0 %v2711
      %v2713 = vpop.f32.mrf.mxu0
      %v2714 = vadd.f32 %v2546, %v2713
      %v2715 = vand.u32 %v2124, 4294901760
      %v2716 = vsub.f32 %v2124, %v2715
      %2717 = vmatmul.f32.gmra.mxu0 %v2716
      %v2718 = vpop.f32.mrf.mxu0
      %v2719 = vadd.f32 %v2550, %v2718
      %v2720 = vand.u32 %v2127, 4294901760
      %v2721 = vsub.f32 %v2127, %v2720
      %2722 = vmatmul.f32.gmra.mxu0 %v2721
      %v2723 = vpop.f32.mrf.mxu0
      %v2724 = vadd.f32 %v2554, %v2723
      %v2725 = vand.u32 %v2130, 4294901760
      %v2726 = vsub.f32 %v2130, %v2725
      %2727 = vmatmul.f32.gmra.mxu0 %v2726
      %v2728 = vpop.f32.mrf.mxu0
      %v2729 = vadd.f32 %v2558, %v2728
      %v2730 = vand.u32 %v2133, 4294901760
      %v2731 = vsub.f32 %v2133, %v2730
      %2732 = vmatmul.f32.gmra.mxu0 %v2731
      %v2733 = vpop.f32.mrf.mxu0
      %v2734 = vadd.f32 %v2562, %v2733
      %v2735 = vand.u32 %v2136, 4294901760
      %v2736 = vsub.f32 %v2136, %v2735
      %2737 = vmatmul.f32.gmra.mxu0 %v2736
      %v2738 = vpop.f32.mrf.mxu0
      %v2739 = vadd.f32 %v2566, %v2738
      %v2740 = vand.u32 %v2139, 4294901760
      %v2741 = vsub.f32 %v2139, %v2740
      %2742 = vmatmul.f32.gmra.mxu0 %v2741
      %v2743 = vpop.f32.mrf.mxu0
      %v2744 = vadd.f32 %v2570, %v2743
      %v2745 = vand.u32 %v2142, 4294901760
      %v2746 = vsub.f32 %v2142, %v2745
      %2747 = vmatmul.f32.gmra.mxu0 %v2746
      %v2748 = vpop.f32.mrf.mxu0
      %v2749 = vadd.f32 %v2574, %v2748
      %v2750 = vand.u32 %v2145, 4294901760
      %v2751 = vsub.f32 %v2145, %v2750
      %2752 = vmatmul.f32.gmra.mxu0 %v2751
      %v2753 = vpop.f32.mrf.mxu0
      %v2754 = vadd.f32 %v2578, %v2753
      %v2755 = vand.u32 %v2148, 4294901760
      %v2756 = vsub.f32 %v2148, %v2755
      %2757 = vmatmul.f32.gmra.mxu0 %v2756
      %v2758 = vpop.f32.mrf.mxu0
      %v2759 = vadd.f32 %v2582, %v2758
      %v2760 = vand.u32 %v2151, 4294901760
      %v2761 = vsub.f32 %v2151, %v2760
      %2762 = vmatmul.f32.gmra.mxu0 %v2761
      %v2763 = vpop.f32.mrf.mxu0
      %v2764 = vadd.f32 %v2586, %v2763
      %v2765 = vand.u32 %v2154, 4294901760
      %v2766 = vsub.f32 %v2154, %v2765
      %2767 = vmatmul.f32.gmra.mxu0 %v2766
      %v2768 = vpop.f32.mrf.mxu0
      %v2769 = vadd.f32 %v2590, %v2768
      %v2770 = vand.u32 %v2157, 4294901760
      %v2771 = vsub.f32 %v2157, %v2770
      %2772 = vmatmul.f32.gmra.mxu0 %v2771
      %v2773 = vpop.f32.mrf.mxu0
      %v2774 = vadd.f32 %v2594, %v2773
      %v2775 = vand.u32 %v2160, 4294901760
      %v2776 = vsub.f32 %v2160, %v2775
      %2777 = vmatmul.f32.gmra.mxu0 %v2776
      %v2778 = vpop.f32.mrf.mxu0
      %v2779 = vadd.f32 %v2598, %v2778
      %v2780 = vand.u32 %v2163, 4294901760
      %v2781 = vsub.f32 %v2163, %v2780
      %2782 = vmatmul.f32.gmra.mxu0 %v2781
      %v2783 = vpop.f32.mrf.mxu0
      %v2784 = vadd.f32 %v2602, %v2783
      %v2785 = vand.u32 %v2166, 4294901760
      %v2786 = vsub.f32 %v2166, %v2785
      %2787 = vmatmul.f32.gmra.mxu0 %v2786
      %v2788 = vpop.f32.mrf.mxu0
      %v2789 = vadd.f32 %v2606, %v2788
      %v2790 = vand.u32 %v2169, 4294901760
      %v2791 = vsub.f32 %v2169, %v2790
      %2792 = vmatmul.f32.gmra.mxu0 %v2791
      %v2793 = vpop.f32.mrf.mxu0
      %v2794 = vadd.f32 %v2610, %v2793
      %v2795 = vand.u32 %v2172, 4294901760
      %v2796 = vsub.f32 %v2172, %v2795
      %2797 = vmatmul.f32.gmra.mxu0 %v2796
      %v2798 = vpop.f32.mrf.mxu0
      %v2799 = vadd.f32 %v2614, %v2798
      %2800 = vdwg.mxu0
      %2801 = vmatpush.msra.mxu0 0.0
      %2802 = vmatpush.msra.mxu0 0.0
      %2803 = vmatpush.msra.mxu0 0.0
      %2804 = vmatpush.msra.mxu0 0.0
      %2805 = vmatpush.msra.mxu0 0.0
      %2806 = vmatpush.msra.mxu0 0.0
      %2807 = vmatpush.msra.mxu0 0.0
      %2808 = vmatpush.msra.mxu0 0.0
      %2809 = vmatpush.msra.mxu0 0.0
      %2810 = vmatpush.msra.mxu0 0.0
      %2811 = vmatpush.msra.mxu0 0.0
      %2812 = vmatpush.msra.mxu0 0.0
      %v2813 = vand.u32 %v2075, 4294901760
      %2814 = vmatpush.msra.mxu0 %v2813
      %v2815 = vand.u32 %v2074, 4294901760
      %2816 = vmatpush.msra.mxu0 %v2815
      %v2817 = vand.u32 %v2073, 4294901760
      %2818 = vmatpush.msra.mxu0 %v2817
      %v2819 = vand.u32 %v2072, 4294901760
      %2820 = vmatpush.msra.mxu0 %v2819
      %v2821 = vand.u32 %v2079, 4294901760
      %v2822 = vsub.f32 %v2079, %v2821
      %v2823 = vand.u32 %v2822, 4294901760
      %2824 = vmatmul.f32.gmra.mxu0 %v2823
      %v2825 = vpop.f32.mrf.mxu0
      %v2826 = vadd.f32 %v2644, %v2825
      %v2827 = vand.u32 %v2082, 4294901760
      %v2828 = vsub.f32 %v2082, %v2827
      %v2829 = vand.u32 %v2828, 4294901760
      %2830 = vmatmul.f32.gmra.mxu0 %v2829
      %v2831 = vpop.f32.mrf.mxu0
      %v2832 = vadd.f32 %v2649, %v2831
      %v2833 = vand.u32 %v2085, 4294901760
      %v2834 = vsub.f32 %v2085, %v2833
      %v2835 = vand.u32 %v2834, 4294901760
      %2836 = vmatmul.f32.gmra.mxu0 %v2835
      %v2837 = vpop.f32.mrf.mxu0
      %v2838 = vadd.f32 %v2654, %v2837
      %v2839 = vand.u32 %v2088, 4294901760
      %v2840 = vsub.f32 %v2088, %v2839
      %v2841 = vand.u32 %v2840, 4294901760
      %2842 = vmatmul.f32.gmra.mxu0 %v2841
      %v2843 = vpop.f32.mrf.mxu0
      %v2844 = vadd.f32 %v2659, %v2843
      %v2845 = vand.u32 %v2091, 4294901760
      %v2846 = vsub.f32 %v2091, %v2845
      %v2847 = vand.u32 %v2846, 4294901760
      %2848 = vmatmul.f32.gmra.mxu0 %v2847
      %v2849 = vpop.f32.mrf.mxu0
      %v2850 = vadd.f32 %v2664, %v2849
      %v2851 = vand.u32 %v2094, 4294901760
      %v2852 = vsub.f32 %v2094, %v2851
      %v2853 = vand.u32 %v2852, 4294901760
      %2854 = vmatmul.f32.gmra.mxu0 %v2853
      %v2855 = vpop.f32.mrf.mxu0
      %v2856 = vadd.f32 %v2669, %v2855
      %v2857 = vand.u32 %v2097, 4294901760
      %v2858 = vsub.f32 %v2097, %v2857
      %v2859 = vand.u32 %v2858, 4294901760
      %2860 = vmatmul.f32.gmra.mxu0 %v2859
      %v2861 = vpop.f32.mrf.mxu0
      %v2862 = vadd.f32 %v2674, %v2861
      %v2863 = vand.u32 %v2100, 4294901760
      %v2864 = vsub.f32 %v2100, %v2863
      %v2865 = vand.u32 %v2864, 4294901760
      %2866 = vmatmul.f32.gmra.mxu0 %v2865
      %v2867 = vpop.f32.mrf.mxu0
      %v2868 = vadd.f32 %v2679, %v2867
      %v2869 = vand.u32 %v2103, 4294901760
      %v2870 = vsub.f32 %v2103, %v2869
      %v2871 = vand.u32 %v2870, 4294901760
      %2872 = vmatmul.f32.gmra.mxu0 %v2871
      %v2873 = vpop.f32.mrf.mxu0
      %v2874 = vadd.f32 %v2684, %v2873
      %v2875 = vand.u32 %v2106, 4294901760
      %v2876 = vsub.f32 %v2106, %v2875
      %v2877 = vand.u32 %v2876, 4294901760
      %2878 = vmatmul.f32.gmra.mxu0 %v2877
      %v2879 = vpop.f32.mrf.mxu0
      %v2880 = vadd.f32 %v2689, %v2879
      %v2881 = vand.u32 %v2109, 4294901760
      %v2882 = vsub.f32 %v2109, %v2881
      %v2883 = vand.u32 %v2882, 4294901760
      %2884 = vmatmul.f32.gmra.mxu0 %v2883
      %v2885 = vpop.f32.mrf.mxu0
      %v2886 = vadd.f32 %v2694, %v2885
      %v2887 = vand.u32 %v2112, 4294901760
      %v2888 = vsub.f32 %v2112, %v2887
      %v2889 = vand.u32 %v2888, 4294901760
      %2890 = vmatmul.f32.gmra.mxu0 %v2889
      %v2891 = vpop.f32.mrf.mxu0
      %v2892 = vadd.f32 %v2699, %v2891
      %v2893 = vand.u32 %v2115, 4294901760
      %v2894 = vsub.f32 %v2115, %v2893
      %v2895 = vand.u32 %v2894, 4294901760
      %2896 = vmatmul.f32.gmra.mxu0 %v2895
      %v2897 = vpop.f32.mrf.mxu0
      %v2898 = vadd.f32 %v2704, %v2897
      %v2899 = vand.u32 %v2118, 4294901760
      %v2900 = vsub.f32 %v2118, %v2899
      %v2901 = vand.u32 %v2900, 4294901760
      %2902 = vmatmul.f32.gmra.mxu0 %v2901
      %v2903 = vpop.f32.mrf.mxu0
      %v2904 = vadd.f32 %v2709, %v2903
      %v2905 = vand.u32 %v2121, 4294901760
      %v2906 = vsub.f32 %v2121, %v2905
      %v2907 = vand.u32 %v2906, 4294901760
      %2908 = vmatmul.f32.gmra.mxu0 %v2907
      %v2909 = vpop.f32.mrf.mxu0
      %v2910 = vadd.f32 %v2714, %v2909
      %v2911 = vand.u32 %v2124, 4294901760
      %v2912 = vsub.f32 %v2124, %v2911
      %v2913 = vand.u32 %v2912, 4294901760
      %2914 = vmatmul.f32.gmra.mxu0 %v2913
      %v2915 = vpop.f32.mrf.mxu0
      %v2916 = vadd.f32 %v2719, %v2915
      %v2917 = vand.u32 %v2127, 4294901760
      %v2918 = vsub.f32 %v2127, %v2917
      %v2919 = vand.u32 %v2918, 4294901760
      %2920 = vmatmul.f32.gmra.mxu0 %v2919
      %v2921 = vpop.f32.mrf.mxu0
      %v2922 = vadd.f32 %v2724, %v2921
      %v2923 = vand.u32 %v2130, 4294901760
      %v2924 = vsub.f32 %v2130, %v2923
      %v2925 = vand.u32 %v2924, 4294901760
      %2926 = vmatmul.f32.gmra.mxu0 %v2925
      %v2927 = vpop.f32.mrf.mxu0
      %v2928 = vadd.f32 %v2729, %v2927
      %v2929 = vand.u32 %v2133, 4294901760
      %v2930 = vsub.f32 %v2133, %v2929
      %v2931 = vand.u32 %v2930, 4294901760
      %2932 = vmatmul.f32.gmra.mxu0 %v2931
      %v2933 = vpop.f32.mrf.mxu0
      %v2934 = vadd.f32 %v2734, %v2933
      %v2935 = vand.u32 %v2136, 4294901760
      %v2936 = vsub.f32 %v2136, %v2935
      %v2937 = vand.u32 %v2936, 4294901760
      %2938 = vmatmul.f32.gmra.mxu0 %v2937
      %v2939 = vpop.f32.mrf.mxu0
      %v2940 = vadd.f32 %v2739, %v2939
      %v2941 = vand.u32 %v2139, 4294901760
      %v2942 = vsub.f32 %v2139, %v2941
      %v2943 = vand.u32 %v2942, 4294901760
      %2944 = vmatmul.f32.gmra.mxu0 %v2943
      %v2945 = vpop.f32.mrf.mxu0
      %v2946 = vadd.f32 %v2744, %v2945
      %v2947 = vand.u32 %v2142, 4294901760
      %v2948 = vsub.f32 %v2142, %v2947
      %v2949 = vand.u32 %v2948, 4294901760
      %2950 = vmatmul.f32.gmra.mxu0 %v2949
      %v2951 = vpop.f32.mrf.mxu0
      %v2952 = vadd.f32 %v2749, %v2951
      %v2953 = vand.u32 %v2145, 4294901760
      %v2954 = vsub.f32 %v2145, %v2953
      %v2955 = vand.u32 %v2954, 4294901760
      %2956 = vmatmul.f32.gmra.mxu0 %v2955
      %v2957 = vpop.f32.mrf.mxu0
      %v2958 = vadd.f32 %v2754, %v2957
      %v2959 = vand.u32 %v2148, 4294901760
      %v2960 = vsub.f32 %v2148, %v2959
      %v2961 = vand.u32 %v2960, 4294901760
      %2962 = vmatmul.f32.gmra.mxu0 %v2961
      %v2963 = vpop.f32.mrf.mxu0
      %v2964 = vadd.f32 %v2759, %v2963
      %v2965 = vand.u32 %v2151, 4294901760
      %v2966 = vsub.f32 %v2151, %v2965
      %v2967 = vand.u32 %v2966, 4294901760
      %2968 = vmatmul.f32.gmra.mxu0 %v2967
      %v2969 = vpop.f32.mrf.mxu0
      %v2970 = vadd.f32 %v2764, %v2969
      %v2971 = vand.u32 %v2154, 4294901760
      %v2972 = vsub.f32 %v2154, %v2971
      %v2973 = vand.u32 %v2972, 4294901760
      %2974 = vmatmul.f32.gmra.mxu0 %v2973
      %v2975 = vpop.f32.mrf.mxu0
      %v2976 = vadd.f32 %v2769, %v2975
      %v2977 = vand.u32 %v2157, 4294901760
      %v2978 = vsub.f32 %v2157, %v2977
      %v2979 = vand.u32 %v2978, 4294901760
      %2980 = vmatmul.f32.gmra.mxu0 %v2979
      %v2981 = vpop.f32.mrf.mxu0
      %v2982 = vadd.f32 %v2774, %v2981
      %v2983 = vand.u32 %v2160, 4294901760
      %v2984 = vsub.f32 %v2160, %v2983
      %v2985 = vand.u32 %v2984, 4294901760
      %2986 = vmatmul.f32.gmra.mxu0 %v2985
      %v2987 = vpop.f32.mrf.mxu0
      %v2988 = vadd.f32 %v2779, %v2987
      %v2989 = vand.u32 %v2163, 4294901760
      %v2990 = vsub.f32 %v2163, %v2989
      %v2991 = vand.u32 %v2990, 4294901760
      %2992 = vmatmul.f32.gmra.mxu0 %v2991
      %v2993 = vpop.f32.mrf.mxu0
      %v2994 = vadd.f32 %v2784, %v2993
      %v2995 = vand.u32 %v2166, 4294901760
      %v2996 = vsub.f32 %v2166, %v2995
      %v2997 = vand.u32 %v2996, 4294901760
      %2998 = vmatmul.f32.gmra.mxu0 %v2997
      %v2999 = vpop.f32.mrf.mxu0
      %v3000 = vadd.f32 %v2789, %v2999
      %v3001 = vand.u32 %v2169, 4294901760
      %v3002 = vsub.f32 %v2169, %v3001
      %v3003 = vand.u32 %v3002, 4294901760
      %3004 = vmatmul.f32.gmra.mxu0 %v3003
      %v3005 = vpop.f32.mrf.mxu0
      %v3006 = vadd.f32 %v2794, %v3005
      %v3007 = vand.u32 %v2172, 4294901760
      %v3008 = vsub.f32 %v2172, %v3007
      %v3009 = vand.u32 %v3008, 4294901760
      %3010 = vmatmul.f32.gmra.mxu0 %v3009
      %v3011 = vpop.f32.mrf.mxu0
      %v3012 = vadd.f32 %v2799, %v3011
      %3013 = vdwg.mxu0
      %3014 = vmatpush.msra.mxu0 0.0
      %3015 = vmatpush.msra.mxu0 0.0
      %3016 = vmatpush.msra.mxu0 0.0
      %3017 = vmatpush.msra.mxu0 0.0
      %3018 = vmatpush.msra.mxu0 0.0
      %3019 = vmatpush.msra.mxu0 0.0
      %3020 = vmatpush.msra.mxu0 0.0
      %3021 = vmatpush.msra.mxu0 0.0
      %3022 = vmatpush.msra.mxu0 0.0
      %3023 = vmatpush.msra.mxu0 0.0
      %3024 = vmatpush.msra.mxu0 0.0
      %3025 = vmatpush.msra.mxu0 0.0
      %v3026 = vand.u32 %v2075, 4294901760
      %v3027 = vsub.f32 %v2075, %v3026
      %v3028 = vand.u32 %v3027, 4294901760
      %3029 = vmatpush.msra.mxu0 %v3028
      %v3030 = vand.u32 %v2074, 4294901760
      %v3031 = vsub.f32 %v2074, %v3030
      %v3032 = vand.u32 %v3031, 4294901760
      %3033 = vmatpush.msra.mxu0 %v3032
      %v3034 = vand.u32 %v2073, 4294901760
      %v3035 = vsub.f32 %v2073, %v3034
      %v3036 = vand.u32 %v3035, 4294901760
      %3037 = vmatpush.msra.mxu0 %v3036
      %v3038 = vand.u32 %v2072, 4294901760
      %v3039 = vsub.f32 %v2072, %v3038
      %v3040 = vand.u32 %v3039, 4294901760
      %3041 = vmatpush.msra.mxu0 %v3040
      %v3042 = vand.u32 %v2079, 4294901760
      %3043 = vmatmul.f32.gmra.mxu0 %v3042
      %v3044 = vpop.f32.mrf.mxu0
      %v3045 = vadd.f32 %v2826, %v3044
      %v3046 = vand.u32 %v2082, 4294901760
      %3047 = vmatmul.f32.gmra.mxu0 %v3046
      %v3048 = vpop.f32.mrf.mxu0
      %v3049 = vadd.f32 %v2832, %v3048
      %v3050 = vand.u32 %v2085, 4294901760
      %3051 = vmatmul.f32.gmra.mxu0 %v3050
      %v3052 = vpop.f32.mrf.mxu0
      %v3053 = vadd.f32 %v2838, %v3052
      %v3054 = vand.u32 %v2088, 4294901760
      %3055 = vmatmul.f32.gmra.mxu0 %v3054
      %v3056 = vpop.f32.mrf.mxu0
      %v3057 = vadd.f32 %v2844, %v3056
      %v3058 = vand.u32 %v2091, 4294901760
      %3059 = vmatmul.f32.gmra.mxu0 %v3058
      %v3060 = vpop.f32.mrf.mxu0
      %v3061 = vadd.f32 %v2850, %v3060
      %v3062 = vand.u32 %v2094, 4294901760
      %3063 = vmatmul.f32.gmra.mxu0 %v3062
      %v3064 = vpop.f32.mrf.mxu0
      %v3065 = vadd.f32 %v2856, %v3064
      %v3066 = vand.u32 %v2097, 4294901760
      %3067 = vmatmul.f32.gmra.mxu0 %v3066
      %v3068 = vpop.f32.mrf.mxu0
      %v3069 = vadd.f32 %v2862, %v3068
      %v3070 = vand.u32 %v2100, 4294901760
      %3071 = vmatmul.f32.gmra.mxu0 %v3070
      %v3072 = vpop.f32.mrf.mxu0
      %v3073 = vadd.f32 %v2868, %v3072
      %v3074 = vand.u32 %v2103, 4294901760
      %3075 = vmatmul.f32.gmra.mxu0 %v3074
      %v3076 = vpop.f32.mrf.mxu0
      %v3077 = vadd.f32 %v2874, %v3076
      %v3078 = vand.u32 %v2106, 4294901760
      %3079 = vmatmul.f32.gmra.mxu0 %v3078
      %v3080 = vpop.f32.mrf.mxu0
      %v3081 = vadd.f32 %v2880, %v3080
      %v3082 = vand.u32 %v2109, 4294901760
      %3083 = vmatmul.f32.gmra.mxu0 %v3082
      %v3084 = vpop.f32.mrf.mxu0
      %v3085 = vadd.f32 %v2886, %v3084
      %v3086 = vand.u32 %v2112, 4294901760
      %3087 = vmatmul.f32.gmra.mxu0 %v3086
      %v3088 = vpop.f32.mrf.mxu0
      %v3089 = vadd.f32 %v2892, %v3088
      %v3090 = vand.u32 %v2115, 4294901760
      %3091 = vmatmul.f32.gmra.mxu0 %v3090
      %v3092 = vpop.f32.mrf.mxu0
      %v3093 = vadd.f32 %v2898, %v3092
      %v3094 = vand.u32 %v2118, 4294901760
      %3095 = vmatmul.f32.gmra.mxu0 %v3094
      %v3096 = vpop.f32.mrf.mxu0
      %v3097 = vadd.f32 %v2904, %v3096
      %v3098 = vand.u32 %v2121, 4294901760
      %3099 = vmatmul.f32.gmra.mxu0 %v3098
      %v3100 = vpop.f32.mrf.mxu0
      %v3101 = vadd.f32 %v2910, %v3100
      %v3102 = vand.u32 %v2124, 4294901760
      %3103 = vmatmul.f32.gmra.mxu0 %v3102
      %v3104 = vpop.f32.mrf.mxu0
      %v3105 = vadd.f32 %v2916, %v3104
      %v3106 = vand.u32 %v2127, 4294901760
      %3107 = vmatmul.f32.gmra.mxu0 %v3106
      %v3108 = vpop.f32.mrf.mxu0
      %v3109 = vadd.f32 %v2922, %v3108
      %v3110 = vand.u32 %v2130, 4294901760
      %3111 = vmatmul.f32.gmra.mxu0 %v3110
      %v3112 = vpop.f32.mrf.mxu0
      %v3113 = vadd.f32 %v2928, %v3112
      %v3114 = vand.u32 %v2133, 4294901760
      %3115 = vmatmul.f32.gmra.mxu0 %v3114
      %v3116 = vpop.f32.mrf.mxu0
      %v3117 = vadd.f32 %v2934, %v3116
      %v3118 = vand.u32 %v2136, 4294901760
      %3119 = vmatmul.f32.gmra.mxu0 %v3118
      %v3120 = vpop.f32.mrf.mxu0
      %v3121 = vadd.f32 %v2940, %v3120
      %v3122 = vand.u32 %v2139, 4294901760
      %3123 = vmatmul.f32.gmra.mxu0 %v3122
      %v3124 = vpop.f32.mrf.mxu0
      %v3125 = vadd.f32 %v2946, %v3124
      %v3126 = vand.u32 %v2142, 4294901760
      %3127 = vmatmul.f32.gmra.mxu0 %v3126
      %v3128 = vpop.f32.mrf.mxu0
      %v3129 = vadd.f32 %v2952, %v3128
      %v3130 = vand.u32 %v2145, 4294901760
      %3131 = vmatmul.f32.gmra.mxu0 %v3130
      %v3132 = vpop.f32.mrf.mxu0
      %v3133 = vadd.f32 %v2958, %v3132
      %v3134 = vand.u32 %v2148, 4294901760
      %3135 = vmatmul.f32.gmra.mxu0 %v3134
      %v3136 = vpop.f32.mrf.mxu0
      %v3137 = vadd.f32 %v2964, %v3136
      %v3138 = vand.u32 %v2151, 4294901760
      %3139 = vmatmul.f32.gmra.mxu0 %v3138
      %v3140 = vpop.f32.mrf.mxu0
      %v3141 = vadd.f32 %v2970, %v3140
      %v3142 = vand.u32 %v2154, 4294901760
      %3143 = vmatmul.f32.gmra.mxu0 %v3142
      %v3144 = vpop.f32.mrf.mxu0
      %v3145 = vadd.f32 %v2976, %v3144
      %v3146 = vand.u32 %v2157, 4294901760
      %3147 = vmatmul.f32.gmra.mxu0 %v3146
      %v3148 = vpop.f32.mrf.mxu0
      %v3149 = vadd.f32 %v2982, %v3148
      %v3150 = vand.u32 %v2160, 4294901760
      %3151 = vmatmul.f32.gmra.mxu0 %v3150
      %v3152 = vpop.f32.mrf.mxu0
      %v3153 = vadd.f32 %v2988, %v3152
      %v3154 = vand.u32 %v2163, 4294901760
      %3155 = vmatmul.f32.gmra.mxu0 %v3154
      %v3156 = vpop.f32.mrf.mxu0
      %v3157 = vadd.f32 %v2994, %v3156
      %v3158 = vand.u32 %v2166, 4294901760
      %3159 = vmatmul.f32.gmra.mxu0 %v3158
      %v3160 = vpop.f32.mrf.mxu0
      %v3161 = vadd.f32 %v3000, %v3160
      %v3162 = vand.u32 %v2169, 4294901760
      %3163 = vmatmul.f32.gmra.mxu0 %v3162
      %v3164 = vpop.f32.mrf.mxu0
      %v3165 = vadd.f32 %v3006, %v3164
      %v3166 = vand.u32 %v2172, 4294901760
      %3167 = vmatmul.f32.gmra.mxu0 %v3166
      %v3168 = vpop.f32.mrf.mxu0
      %v3169 = vadd.f32 %v3012, %v3168
      %3170 = vdwg.mxu0
      %3171 = vmatpush.msra.mxu0 0.0
      %3172 = vmatpush.msra.mxu0 0.0
      %3173 = vmatpush.msra.mxu0 0.0
      %3174 = vmatpush.msra.mxu0 0.0
      %3175 = vmatpush.msra.mxu0 0.0
      %3176 = vmatpush.msra.mxu0 0.0
      %3177 = vmatpush.msra.mxu0 0.0
      %3178 = vmatpush.msra.mxu0 0.0
      %3179 = vmatpush.msra.mxu0 0.0
      %3180 = vmatpush.msra.mxu0 0.0
      %3181 = vmatpush.msra.mxu0 0.0
      %3182 = vmatpush.msra.mxu0 0.0
      %v3183 = vand.u32 %v2075, 4294901760
      %3184 = vmatpush.msra.mxu0 %v3183
      %v3185 = vand.u32 %v2074, 4294901760
      %3186 = vmatpush.msra.mxu0 %v3185
      %v3187 = vand.u32 %v2073, 4294901760
      %3188 = vmatpush.msra.mxu0 %v3187
      %v3189 = vand.u32 %v2072, 4294901760
      %3190 = vmatpush.msra.mxu0 %v3189
      %v3191 = vand.u32 %v2079, 4294901760
      %3192 = vmatmul.f32.gmra.mxu0 %v3191
      %v3193 = vpop.f32.mrf.mxu0
      %v3194 = vadd.f32 %v3045, %v3193
      %v3195 = vand.u32 %v2082, 4294901760
      %3196 = vmatmul.f32.gmra.mxu0 %v3195
      %v3197 = vpop.f32.mrf.mxu0
      %v3198 = vadd.f32 %v3049, %v3197
      %v3199 = vand.u32 %v2085, 4294901760
      %3200 = vmatmul.f32.gmra.mxu0 %v3199
      %v3201 = vpop.f32.mrf.mxu0
      %v3202 = vadd.f32 %v3053, %v3201
      %v3203 = vand.u32 %v2088, 4294901760
      %3204 = vmatmul.f32.gmra.mxu0 %v3203
      %v3205 = vpop.f32.mrf.mxu0
      %v3206 = vadd.f32 %v3057, %v3205
      %v3207 = vand.u32 %v2091, 4294901760
      %3208 = vmatmul.f32.gmra.mxu0 %v3207
      %v3209 = vpop.f32.mrf.mxu0
      %v3210 = vadd.f32 %v3061, %v3209
      %v3211 = vand.u32 %v2094, 4294901760
      %3212 = vmatmul.f32.gmra.mxu0 %v3211
      %v3213 = vpop.f32.mrf.mxu0
      %v3214 = vadd.f32 %v3065, %v3213
      %v3215 = vand.u32 %v2097, 4294901760
      %3216 = vmatmul.f32.gmra.mxu0 %v3215
      %v3217 = vpop.f32.mrf.mxu0
      %v3218 = vadd.f32 %v3069, %v3217
      %v3219 = vand.u32 %v2100, 4294901760
      %3220 = vmatmul.f32.gmra.mxu0 %v3219
      %v3221 = vpop.f32.mrf.mxu0
      %v3222 = vadd.f32 %v3073, %v3221
      %v3223 = vand.u32 %v2103, 4294901760
      %3224 = vmatmul.f32.gmra.mxu0 %v3223
      %v3225 = vpop.f32.mrf.mxu0
      %v3226 = vadd.f32 %v3077, %v3225
      %v3227 = vand.u32 %v2106, 4294901760
      %3228 = vmatmul.f32.gmra.mxu0 %v3227
      %v3229 = vpop.f32.mrf.mxu0
      %v3230 = vadd.f32 %v3081, %v3229
      %v3231 = vand.u32 %v2109, 4294901760
      %3232 = vmatmul.f32.gmra.mxu0 %v3231
      %v3233 = vpop.f32.mrf.mxu0
      %v3234 = vadd.f32 %v3085, %v3233
      %v3235 = vand.u32 %v2112, 4294901760
      %3236 = vmatmul.f32.gmra.mxu0 %v3235
      %v3237 = vpop.f32.mrf.mxu0
      %v3238 = vadd.f32 %v3089, %v3237
      %v3239 = vand.u32 %v2115, 4294901760
      %3240 = vmatmul.f32.gmra.mxu0 %v3239
      %v3241 = vpop.f32.mrf.mxu0
      %v3242 = vadd.f32 %v3093, %v3241
      %v3243 = vand.u32 %v2118, 4294901760
      %3244 = vmatmul.f32.gmra.mxu0 %v3243
      %v3245 = vpop.f32.mrf.mxu0
      %v3246 = vadd.f32 %v3097, %v3245
      %v3247 = vand.u32 %v2121, 4294901760
      %3248 = vmatmul.f32.gmra.mxu0 %v3247
      %v3249 = vpop.f32.mrf.mxu0
      %v3250 = vadd.f32 %v3101, %v3249
      %v3251 = vand.u32 %v2124, 4294901760
      %3252 = vmatmul.f32.gmra.mxu0 %v3251
      %v3253 = vpop.f32.mrf.mxu0
      %v3254 = vadd.f32 %v3105, %v3253
      %v3255 = vand.u32 %v2127, 4294901760
      %3256 = vmatmul.f32.gmra.mxu0 %v3255
      %v3257 = vpop.f32.mrf.mxu0
      %v3258 = vadd.f32 %v3109, %v3257
      %v3259 = vand.u32 %v2130, 4294901760
      %3260 = vmatmul.f32.gmra.mxu0 %v3259
      %v3261 = vpop.f32.mrf.mxu0
      %v3262 = vadd.f32 %v3113, %v3261
      %v3263 = vand.u32 %v2133, 4294901760
      %3264 = vmatmul.f32.gmra.mxu0 %v3263
      %v3265 = vpop.f32.mrf.mxu0
      %v3266 = vadd.f32 %v3117, %v3265
      %v3267 = vand.u32 %v2136, 4294901760
      %3268 = vmatmul.f32.gmra.mxu0 %v3267
      %v3269 = vpop.f32.mrf.mxu0
      %v3270 = vadd.f32 %v3121, %v3269
      %v3271 = vand.u32 %v2139, 4294901760
      %3272 = vmatmul.f32.gmra.mxu0 %v3271
      %v3273 = vpop.f32.mrf.mxu0
      %v3274 = vadd.f32 %v3125, %v3273
      %v3275 = vand.u32 %v2142, 4294901760
      %3276 = vmatmul.f32.gmra.mxu0 %v3275
      %v3277 = vpop.f32.mrf.mxu0
      %v3278 = vadd.f32 %v3129, %v3277
      %v3279 = vand.u32 %v2145, 4294901760
      %3280 = vmatmul.f32.gmra.mxu0 %v3279
      %v3281 = vpop.f32.mrf.mxu0
      %v3282 = vadd.f32 %v3133, %v3281
      %v3283 = vand.u32 %v2148, 4294901760
      %3284 = vmatmul.f32.gmra.mxu0 %v3283
      %v3285 = vpop.f32.mrf.mxu0
      %v3286 = vadd.f32 %v3137, %v3285
      %v3287 = vand.u32 %v2151, 4294901760
      %3288 = vmatmul.f32.gmra.mxu0 %v3287
      %v3289 = vpop.f32.mrf.mxu0
      %v3290 = vadd.f32 %v3141, %v3289
      %v3291 = vand.u32 %v2154, 4294901760
      %3292 = vmatmul.f32.gmra.mxu0 %v3291
      %v3293 = vpop.f32.mrf.mxu0
      %v3294 = vadd.f32 %v3145, %v3293
      %v3295 = vand.u32 %v2157, 4294901760
      %3296 = vmatmul.f32.gmra.mxu0 %v3295
      %v3297 = vpop.f32.mrf.mxu0
      %v3298 = vadd.f32 %v3149, %v3297
      %v3299 = vand.u32 %v2160, 4294901760
      %3300 = vmatmul.f32.gmra.mxu0 %v3299
      %v3301 = vpop.f32.mrf.mxu0
      %v3302 = vadd.f32 %v3153, %v3301
      %v3303 = vand.u32 %v2163, 4294901760
      %3304 = vmatmul.f32.gmra.mxu0 %v3303
      %v3305 = vpop.f32.mrf.mxu0
      %v3306 = vadd.f32 %v3157, %v3305
      %v3307 = vand.u32 %v2166, 4294901760
      %3308 = vmatmul.f32.gmra.mxu0 %v3307
      %v3309 = vpop.f32.mrf.mxu0
      %v3310 = vadd.f32 %v3161, %v3309
      %v3311 = vand.u32 %v2169, 4294901760
      %3312 = vmatmul.f32.gmra.mxu0 %v3311
      %v3313 = vpop.f32.mrf.mxu0
      %v3314 = vadd.f32 %v3165, %v3313
      %v3315 = vand.u32 %v2172, 4294901760
      %3316 = vmatmul.f32.gmra.mxu0 %v3315
      %v3317 = vpop.f32.mrf.mxu0
      %v3318 = vadd.f32 %v3169, %v3317
      %3319 = vdwg.mxu0
      %v3320 = vxor.u32 %v3194, 2147483648
      %v3321 = vxor.u32 %v3198, 2147483648
      %v3322 = vxor.u32 %v3202, 2147483648
      %v3323 = vxor.u32 %v3206, 2147483648
      %v3324 = vxor.u32 %v3210, 2147483648
      %v3325 = vxor.u32 %v3214, 2147483648
      %v3326 = vxor.u32 %v3218, 2147483648
      %v3327 = vxor.u32 %v3222, 2147483648
      %v3328 = vxor.u32 %v3226, 2147483648
      %v3329 = vxor.u32 %v3230, 2147483648
      %v3330 = vxor.u32 %v3234, 2147483648
      %v3331 = vxor.u32 %v3238, 2147483648
      %v3332 = vxor.u32 %v3242, 2147483648
      %v3333 = vxor.u32 %v3246, 2147483648
      %v3334 = vxor.u32 %v3250, 2147483648
      %v3335 = vxor.u32 %v3254, 2147483648
      %v3336 = vxor.u32 %v3258, 2147483648
      %v3337 = vxor.u32 %v3262, 2147483648
      %v3338 = vxor.u32 %v3266, 2147483648
      %v3339 = vxor.u32 %v3270, 2147483648
      %v3340 = vxor.u32 %v3274, 2147483648
      %v3341 = vxor.u32 %v3278, 2147483648
      %v3342 = vxor.u32 %v3282, 2147483648
      %v3343 = vxor.u32 %v3286, 2147483648
      %v3344 = vxor.u32 %v3290, 2147483648
      %v3345 = vxor.u32 %v3294, 2147483648
      %v3346 = vxor.u32 %v3298, 2147483648
      %v3347 = vxor.u32 %v3302, 2147483648
      %v3348 = vxor.u32 %v3306, 2147483648
      %v3349 = vxor.u32 %v3310, 2147483648
      %v3350 = vxor.u32 %v3314, 2147483648
      %v3351 = vxor.u32 %v3318, 2147483648
      %v3352 = vmul.f32 %v3320, 1.442695
      %v3353 = vpow.pop %v3352
      %v3354 = vmul.f32 %v3321, 1.442695
      %v3355 = vpow.pop %v3354
      %v3356 = vmul.f32 %v3322, 1.442695
      %v3357 = vpow.pop %v3356
      %v3358 = vmul.f32 %v3323, 1.442695
      %v3359 = vpow.pop %v3358
      %v3360 = vmul.f32 %v3324, 1.442695
      %v3361 = vpow.pop %v3360
      %v3362 = vmul.f32 %v3325, 1.442695
      %v3363 = vpow.pop %v3362
      %v3364 = vmul.f32 %v3326, 1.442695
      %v3365 = vpow.pop %v3364
      %v3366 = vmul.f32 %v3327, 1.442695
      %v3367 = vpow.pop %v3366
      %v3368 = vmul.f32 %v3328, 1.442695
      %v3369 = vpow.pop %v3368
      %v3370 = vmul.f32 %v3329, 1.442695
      %v3371 = vpow.pop %v3370
      %v3372 = vmul.f32 %v3330, 1.442695
      %v3373 = vpow.pop %v3372
      %v3374 = vmul.f32 %v3331, 1.442695
      %v3375 = vpow.pop %v3374
      %v3376 = vmul.f32 %v3332, 1.442695
      %v3377 = vpow.pop %v3376
      %v3378 = vmul.f32 %v3333, 1.442695
      %v3379 = vpow.pop %v3378
      %v3380 = vmul.f32 %v3334, 1.442695
      %v3381 = vpow.pop %v3380
      %v3382 = vmul.f32 %v3335, 1.442695
      %v3383 = vpow.pop %v3382
      %v3384 = vmul.f32 %v3336, 1.442695
      %v3385 = vpow.pop %v3384
      %v3386 = vmul.f32 %v3337, 1.442695
      %v3387 = vpow.pop %v3386
      %v3388 = vmul.f32 %v3338, 1.442695
      %v3389 = vpow.pop %v3388
      %v3390 = vmul.f32 %v3339, 1.442695
      %v3391 = vpow.pop %v3390
      %v3392 = vmul.f32 %v3340, 1.442695
      %v3393 = vpow.pop %v3392
      %v3394 = vmul.f32 %v3341, 1.442695
      %v3395 = vpow.pop %v3394
      %v3396 = vmul.f32 %v3342, 1.442695
      %v3397 = vpow.pop %v3396
      %v3398 = vmul.f32 %v3343, 1.442695
      %v3399 = vpow.pop %v3398
      %v3400 = vmul.f32 %v3344, 1.442695
      %v3401 = vpow.pop %v3400
      %v3402 = vmul.f32 %v3345, 1.442695
      %v3403 = vpow.pop %v3402
      %v3404 = vmul.f32 %v3346, 1.442695
      %v3405 = vpow.pop %v3404
      %v3406 = vmul.f32 %v3347, 1.442695
      %v3407 = vpow.pop %v3406
      %v3408 = vmul.f32 %v3348, 1.442695
      %v3409 = vpow.pop %v3408
      %v3410 = vmul.f32 %v3349, 1.442695
      %v3411 = vpow.pop %v3410
      %v3412 = vmul.f32 %v3350, 1.442695
      %v3413 = vpow.pop %v3412
      %v3414 = vmul.f32 %v3351, 1.442695
      %v3415 = vpow.pop %v3414
      %v3416 = vadd.f32 %v3353, 1.0
      %v3417 = vadd.f32 %v3355, 1.0
      %v3418 = vadd.f32 %v3357, 1.0
      %v3419 = vadd.f32 %v3359, 1.0
      %v3420 = vadd.f32 %v3361, 1.0
      %v3421 = vadd.f32 %v3363, 1.0
      %v3422 = vadd.f32 %v3365, 1.0
      %v3423 = vadd.f32 %v3367, 1.0
      %v3424 = vadd.f32 %v3369, 1.0
      %v3425 = vadd.f32 %v3371, 1.0
      %v3426 = vadd.f32 %v3373, 1.0
      %v3427 = vadd.f32 %v3375, 1.0
      %v3428 = vadd.f32 %v3377, 1.0
      %v3429 = vadd.f32 %v3379, 1.0
      %v3430 = vadd.f32 %v3381, 1.0
      %v3431 = vadd.f32 %v3383, 1.0
      %v3432 = vadd.f32 %v3385, 1.0
      %v3433 = vadd.f32 %v3387, 1.0
      %v3434 = vadd.f32 %v3389, 1.0
      %v3435 = vadd.f32 %v3391, 1.0
      %v3436 = vadd.f32 %v3393, 1.0
      %v3437 = vadd.f32 %v3395, 1.0
      %v3438 = vadd.f32 %v3397, 1.0
      %v3439 = vadd.f32 %v3399, 1.0
      %v3440 = vadd.f32 %v3401, 1.0
      %v3441 = vadd.f32 %v3403, 1.0
      %v3442 = vadd.f32 %v3405, 1.0
      %v3443 = vadd.f32 %v3407, 1.0
      %v3444 = vadd.f32 %v3409, 1.0
      %v3445 = vadd.f32 %v3411, 1.0
      %v3446 = vadd.f32 %v3413, 1.0
      %v3447 = vadd.f32 %v3415, 1.0
      %v3448 = vrcp.pop %v3416
      %v3449 = vmul.f32 %v3416, %v3448
      %v3450 = vsub.f32 1.0, %v3449
      %v3451 = vmul.f32 %v3448, %v3450
      %v3452 = vadd.f32 %v3448, %v3451
      %vm3453 = vweird.f32 %v3416
      %vm3454 = vweird.f32 %v3448
      %vm3455 = vmor %vm3453, %vm3454
      %v3456 = vsel %vm3455, %v3448, %v3452
      %v3457 = vand.u32 2147483647, %v3416
      %vm3458 = vcmp.eq.f32.partialorder %v3457, 8.507059e+37
      %v3459 = vand.u32 %v3416, 2147483648
      %v3460 = vor.u32 1.1754944e-38, %v3459
      %v3461 = vsel %vm3458, %v3460, %v3456
      %v3462 = vmul.f32 1.0, %v3461
      %v3463 = vrcp.pop %v3417
      %v3464 = vmul.f32 %v3417, %v3463
      %v3465 = vsub.f32 1.0, %v3464
      %v3466 = vmul.f32 %v3463, %v3465
      %v3467 = vadd.f32 %v3463, %v3466
      %vm3468 = vweird.f32 %v3417
      %vm3469 = vweird.f32 %v3463
      %vm3470 = vmor %vm3468, %vm3469
      %v3471 = vsel %vm3470, %v3463, %v3467
      %v3472 = vand.u32 2147483647, %v3417
      %vm3473 = vcmp.eq.f32.partialorder %v3472, 8.507059e+37
      %v3474 = vand.u32 %v3417, 2147483648
      %v3475 = vor.u32 1.1754944e-38, %v3474
      %v3476 = vsel %vm3473, %v3475, %v3471
      %v3477 = vmul.f32 1.0, %v3476
      %v3478 = vrcp.pop %v3418
      %v3479 = vmul.f32 %v3418, %v3478
      %v3480 = vsub.f32 1.0, %v3479
      %v3481 = vmul.f32 %v3478, %v3480
      %v3482 = vadd.f32 %v3478, %v3481
      %vm3483 = vweird.f32 %v3418
      %vm3484 = vweird.f32 %v3478
      %vm3485 = vmor %vm3483, %vm3484
      %v3486 = vsel %vm3485, %v3478, %v3482
      %v3487 = vand.u32 2147483647, %v3418
      %vm3488 = vcmp.eq.f32.partialorder %v3487, 8.507059e+37
      %v3489 = vand.u32 %v3418, 2147483648
      %v3490 = vor.u32 1.1754944e-38, %v3489
      %v3491 = vsel %vm3488, %v3490, %v3486
      %v3492 = vmul.f32 1.0, %v3491
      %v3493 = vrcp.pop %v3419
      %v3494 = vmul.f32 %v3419, %v3493
      %v3495 = vsub.f32 1.0, %v3494
      %v3496 = vmul.f32 %v3493, %v3495
      %v3497 = vadd.f32 %v3493, %v3496
      %vm3498 = vweird.f32 %v3419
      %vm3499 = vweird.f32 %v3493
      %vm3500 = vmor %vm3498, %vm3499
      %v3501 = vsel %vm3500, %v3493, %v3497
      %v3502 = vand.u32 2147483647, %v3419
      %vm3503 = vcmp.eq.f32.partialorder %v3502, 8.507059e+37
      %v3504 = vand.u32 %v3419, 2147483648
      %v3505 = vor.u32 1.1754944e-38, %v3504
      %v3506 = vsel %vm3503, %v3505, %v3501
      %v3507 = vmul.f32 1.0, %v3506
      %v3508 = vrcp.pop %v3420
      %v3509 = vmul.f32 %v3420, %v3508
      %v3510 = vsub.f32 1.0, %v3509
      %v3511 = vmul.f32 %v3508, %v3510
      %v3512 = vadd.f32 %v3508, %v3511
      %vm3513 = vweird.f32 %v3420
      %vm3514 = vweird.f32 %v3508
      %vm3515 = vmor %vm3513, %vm3514
      %v3516 = vsel %vm3515, %v3508, %v3512
      %v3517 = vand.u32 2147483647, %v3420
      %vm3518 = vcmp.eq.f32.partialorder %v3517, 8.507059e+37
      %v3519 = vand.u32 %v3420, 2147483648
      %v3520 = vor.u32 1.1754944e-38, %v3519
      %v3521 = vsel %vm3518, %v3520, %v3516
      %v3522 = vmul.f32 1.0, %v3521
      %v3523 = vrcp.pop %v3421
      %v3524 = vmul.f32 %v3421, %v3523
      %v3525 = vsub.f32 1.0, %v3524
      %v3526 = vmul.f32 %v3523, %v3525
      %v3527 = vadd.f32 %v3523, %v3526
      %vm3528 = vweird.f32 %v3421
      %vm3529 = vweird.f32 %v3523
      %vm3530 = vmor %vm3528, %vm3529
      %v3531 = vsel %vm3530, %v3523, %v3527
      %v3532 = vand.u32 2147483647, %v3421
      %vm3533 = vcmp.eq.f32.partialorder %v3532, 8.507059e+37
      %v3534 = vand.u32 %v3421, 2147483648
      %v3535 = vor.u32 1.1754944e-38, %v3534
      %v3536 = vsel %vm3533, %v3535, %v3531
      %v3537 = vmul.f32 1.0, %v3536
      %v3538 = vrcp.pop %v3422
      %v3539 = vmul.f32 %v3422, %v3538
      %v3540 = vsub.f32 1.0, %v3539
      %v3541 = vmul.f32 %v3538, %v3540
      %v3542 = vadd.f32 %v3538, %v3541
      %vm3543 = vweird.f32 %v3422
      %vm3544 = vweird.f32 %v3538
      %vm3545 = vmor %vm3543, %vm3544
      %v3546 = vsel %vm3545, %v3538, %v3542
      %v3547 = vand.u32 2147483647, %v3422
      %vm3548 = vcmp.eq.f32.partialorder %v3547, 8.507059e+37
      %v3549 = vand.u32 %v3422, 2147483648
      %v3550 = vor.u32 1.1754944e-38, %v3549
      %v3551 = vsel %vm3548, %v3550, %v3546
      %v3552 = vmul.f32 1.0, %v3551
      %v3553 = vrcp.pop %v3423
      %v3554 = vmul.f32 %v3423, %v3553
      %v3555 = vsub.f32 1.0, %v3554
      %v3556 = vmul.f32 %v3553, %v3555
      %v3557 = vadd.f32 %v3553, %v3556
      %vm3558 = vweird.f32 %v3423
      %vm3559 = vweird.f32 %v3553
      %vm3560 = vmor %vm3558, %vm3559
      %v3561 = vsel %vm3560, %v3553, %v3557
      %v3562 = vand.u32 2147483647, %v3423
      %vm3563 = vcmp.eq.f32.partialorder %v3562, 8.507059e+37
      %v3564 = vand.u32 %v3423, 2147483648
      %v3565 = vor.u32 1.1754944e-38, %v3564
      %v3566 = vsel %vm3563, %v3565, %v3561
      %v3567 = vmul.f32 1.0, %v3566
      %v3568 = vrcp.pop %v3424
      %v3569 = vmul.f32 %v3424, %v3568
      %v3570 = vsub.f32 1.0, %v3569
      %v3571 = vmul.f32 %v3568, %v3570
      %v3572 = vadd.f32 %v3568, %v3571
      %vm3573 = vweird.f32 %v3424
      %vm3574 = vweird.f32 %v3568
      %vm3575 = vmor %vm3573, %vm3574
      %v3576 = vsel %vm3575, %v3568, %v3572
      %v3577 = vand.u32 2147483647, %v3424
      %vm3578 = vcmp.eq.f32.partialorder %v3577, 8.507059e+37
      %v3579 = vand.u32 %v3424, 2147483648
      %v3580 = vor.u32 1.1754944e-38, %v3579
      %v3581 = vsel %vm3578, %v3580, %v3576
      %v3582 = vmul.f32 1.0, %v3581
      %v3583 = vrcp.pop %v3425
      %v3584 = vmul.f32 %v3425, %v3583
      %v3585 = vsub.f32 1.0, %v3584
      %v3586 = vmul.f32 %v3583, %v3585
      %v3587 = vadd.f32 %v3583, %v3586
      %vm3588 = vweird.f32 %v3425
      %vm3589 = vweird.f32 %v3583
      %vm3590 = vmor %vm3588, %vm3589
      %v3591 = vsel %vm3590, %v3583, %v3587
      %v3592 = vand.u32 2147483647, %v3425
      %vm3593 = vcmp.eq.f32.partialorder %v3592, 8.507059e+37
      %v3594 = vand.u32 %v3425, 2147483648
      %v3595 = vor.u32 1.1754944e-38, %v3594
      %v3596 = vsel %vm3593, %v3595, %v3591
      %v3597 = vmul.f32 1.0, %v3596
      %v3598 = vrcp.pop %v3426
      %v3599 = vmul.f32 %v3426, %v3598
      %v3600 = vsub.f32 1.0, %v3599
      %v3601 = vmul.f32 %v3598, %v3600
      %v3602 = vadd.f32 %v3598, %v3601
      %vm3603 = vweird.f32 %v3426
      %vm3604 = vweird.f32 %v3598
      %vm3605 = vmor %vm3603, %vm3604
      %v3606 = vsel %vm3605, %v3598, %v3602
      %v3607 = vand.u32 2147483647, %v3426
      %vm3608 = vcmp.eq.f32.partialorder %v3607, 8.507059e+37
      %v3609 = vand.u32 %v3426, 2147483648
      %v3610 = vor.u32 1.1754944e-38, %v3609
      %v3611 = vsel %vm3608, %v3610, %v3606
      %v3612 = vmul.f32 1.0, %v3611
      %v3613 = vrcp.pop %v3427
      %v3614 = vmul.f32 %v3427, %v3613
      %v3615 = vsub.f32 1.0, %v3614
      %v3616 = vmul.f32 %v3613, %v3615
      %v3617 = vadd.f32 %v3613, %v3616
      %vm3618 = vweird.f32 %v3427
      %vm3619 = vweird.f32 %v3613
      %vm3620 = vmor %vm3618, %vm3619
      %v3621 = vsel %vm3620, %v3613, %v3617
      %v3622 = vand.u32 2147483647, %v3427
      %vm3623 = vcmp.eq.f32.partialorder %v3622, 8.507059e+37
      %v3624 = vand.u32 %v3427, 2147483648
      %v3625 = vor.u32 1.1754944e-38, %v3624
      %v3626 = vsel %vm3623, %v3625, %v3621
      %v3627 = vmul.f32 1.0, %v3626
      %v3628 = vrcp.pop %v3428
      %v3629 = vmul.f32 %v3428, %v3628
      %v3630 = vsub.f32 1.0, %v3629
      %v3631 = vmul.f32 %v3628, %v3630
      %v3632 = vadd.f32 %v3628, %v3631
      %vm3633 = vweird.f32 %v3428
      %vm3634 = vweird.f32 %v3628
      %vm3635 = vmor %vm3633, %vm3634
      %v3636 = vsel %vm3635, %v3628, %v3632
      %v3637 = vand.u32 2147483647, %v3428
      %vm3638 = vcmp.eq.f32.partialorder %v3637, 8.507059e+37
      %v3639 = vand.u32 %v3428, 2147483648
      %v3640 = vor.u32 1.1754944e-38, %v3639
      %v3641 = vsel %vm3638, %v3640, %v3636
      %v3642 = vmul.f32 1.0, %v3641
      %v3643 = vrcp.pop %v3429
      %v3644 = vmul.f32 %v3429, %v3643
      %v3645 = vsub.f32 1.0, %v3644
      %v3646 = vmul.f32 %v3643, %v3645
      %v3647 = vadd.f32 %v3643, %v3646
      %vm3648 = vweird.f32 %v3429
      %vm3649 = vweird.f32 %v3643
      %vm3650 = vmor %vm3648, %vm3649
      %v3651 = vsel %vm3650, %v3643, %v3647
      %v3652 = vand.u32 2147483647, %v3429
      %vm3653 = vcmp.eq.f32.partialorder %v3652, 8.507059e+37
      %v3654 = vand.u32 %v3429, 2147483648
      %v3655 = vor.u32 1.1754944e-38, %v3654
      %v3656 = vsel %vm3653, %v3655, %v3651
      %v3657 = vmul.f32 1.0, %v3656
      %v3658 = vrcp.pop %v3430
      %v3659 = vmul.f32 %v3430, %v3658
      %v3660 = vsub.f32 1.0, %v3659
      %v3661 = vmul.f32 %v3658, %v3660
      %v3662 = vadd.f32 %v3658, %v3661
      %vm3663 = vweird.f32 %v3430
      %vm3664 = vweird.f32 %v3658
      %vm3665 = vmor %vm3663, %vm3664
      %v3666 = vsel %vm3665, %v3658, %v3662
      %v3667 = vand.u32 2147483647, %v3430
      %vm3668 = vcmp.eq.f32.partialorder %v3667, 8.507059e+37
      %v3669 = vand.u32 %v3430, 2147483648
      %v3670 = vor.u32 1.1754944e-38, %v3669
      %v3671 = vsel %vm3668, %v3670, %v3666
      %v3672 = vmul.f32 1.0, %v3671
      %v3673 = vrcp.pop %v3431
      %v3674 = vmul.f32 %v3431, %v3673
      %v3675 = vsub.f32 1.0, %v3674
      %v3676 = vmul.f32 %v3673, %v3675
      %v3677 = vadd.f32 %v3673, %v3676
      %vm3678 = vweird.f32 %v3431
      %vm3679 = vweird.f32 %v3673
      %vm3680 = vmor %vm3678, %vm3679
      %v3681 = vsel %vm3680, %v3673, %v3677
      %v3682 = vand.u32 2147483647, %v3431
      %vm3683 = vcmp.eq.f32.partialorder %v3682, 8.507059e+37
      %v3684 = vand.u32 %v3431, 2147483648
      %v3685 = vor.u32 1.1754944e-38, %v3684
      %v3686 = vsel %vm3683, %v3685, %v3681
      %v3687 = vmul.f32 1.0, %v3686
      %v3688 = vrcp.pop %v3432
      %v3689 = vmul.f32 %v3432, %v3688
      %v3690 = vsub.f32 1.0, %v3689
      %v3691 = vmul.f32 %v3688, %v3690
      %v3692 = vadd.f32 %v3688, %v3691
      %vm3693 = vweird.f32 %v3432
      %vm3694 = vweird.f32 %v3688
      %vm3695 = vmor %vm3693, %vm3694
      %v3696 = vsel %vm3695, %v3688, %v3692
      %v3697 = vand.u32 2147483647, %v3432
      %vm3698 = vcmp.eq.f32.partialorder %v3697, 8.507059e+37
      %v3699 = vand.u32 %v3432, 2147483648
      %v3700 = vor.u32 1.1754944e-38, %v3699
      %v3701 = vsel %vm3698, %v3700, %v3696
      %v3702 = vmul.f32 1.0, %v3701
      %v3703 = vrcp.pop %v3433
      %v3704 = vmul.f32 %v3433, %v3703
      %v3705 = vsub.f32 1.0, %v3704
      %v3706 = vmul.f32 %v3703, %v3705
      %v3707 = vadd.f32 %v3703, %v3706
      %vm3708 = vweird.f32 %v3433
      %vm3709 = vweird.f32 %v3703
      %vm3710 = vmor %vm3708, %vm3709
      %v3711 = vsel %vm3710, %v3703, %v3707
      %v3712 = vand.u32 2147483647, %v3433
      %vm3713 = vcmp.eq.f32.partialorder %v3712, 8.507059e+37
      %v3714 = vand.u32 %v3433, 2147483648
      %v3715 = vor.u32 1.1754944e-38, %v3714
      %v3716 = vsel %vm3713, %v3715, %v3711
      %v3717 = vmul.f32 1.0, %v3716
      %v3718 = vrcp.pop %v3434
      %v3719 = vmul.f32 %v3434, %v3718
      %v3720 = vsub.f32 1.0, %v3719
      %v3721 = vmul.f32 %v3718, %v3720
      %v3722 = vadd.f32 %v3718, %v3721
      %vm3723 = vweird.f32 %v3434
      %vm3724 = vweird.f32 %v3718
      %vm3725 = vmor %vm3723, %vm3724
      %v3726 = vsel %vm3725, %v3718, %v3722
      %v3727 = vand.u32 2147483647, %v3434
      %vm3728 = vcmp.eq.f32.partialorder %v3727, 8.507059e+37
      %v3729 = vand.u32 %v3434, 2147483648
      %v3730 = vor.u32 1.1754944e-38, %v3729
      %v3731 = vsel %vm3728, %v3730, %v3726
      %v3732 = vmul.f32 1.0, %v3731
      %v3733 = vrcp.pop %v3435
      %v3734 = vmul.f32 %v3435, %v3733
      %v3735 = vsub.f32 1.0, %v3734
      %v3736 = vmul.f32 %v3733, %v3735
      %v3737 = vadd.f32 %v3733, %v3736
      %vm3738 = vweird.f32 %v3435
      %vm3739 = vweird.f32 %v3733
      %vm3740 = vmor %vm3738, %vm3739
      %v3741 = vsel %vm3740, %v3733, %v3737
      %v3742 = vand.u32 2147483647, %v3435
      %vm3743 = vcmp.eq.f32.partialorder %v3742, 8.507059e+37
      %v3744 = vand.u32 %v3435, 2147483648
      %v3745 = vor.u32 1.1754944e-38, %v3744
      %v3746 = vsel %vm3743, %v3745, %v3741
      %v3747 = vmul.f32 1.0, %v3746
      %v3748 = vrcp.pop %v3436
      %v3749 = vmul.f32 %v3436, %v3748
      %v3750 = vsub.f32 1.0, %v3749
      %v3751 = vmul.f32 %v3748, %v3750
      %v3752 = vadd.f32 %v3748, %v3751
      %vm3753 = vweird.f32 %v3436
      %vm3754 = vweird.f32 %v3748
      %vm3755 = vmor %vm3753, %vm3754
      %v3756 = vsel %vm3755, %v3748, %v3752
      %v3757 = vand.u32 2147483647, %v3436
      %vm3758 = vcmp.eq.f32.partialorder %v3757, 8.507059e+37
      %v3759 = vand.u32 %v3436, 2147483648
      %v3760 = vor.u32 1.1754944e-38, %v3759
      %v3761 = vsel %vm3758, %v3760, %v3756
      %v3762 = vmul.f32 1.0, %v3761
      %v3763 = vrcp.pop %v3437
      %v3764 = vmul.f32 %v3437, %v3763
      %v3765 = vsub.f32 1.0, %v3764
      %v3766 = vmul.f32 %v3763, %v3765
      %v3767 = vadd.f32 %v3763, %v3766
      %vm3768 = vweird.f32 %v3437
      %vm3769 = vweird.f32 %v3763
      %vm3770 = vmor %vm3768, %vm3769
      %v3771 = vsel %vm3770, %v3763, %v3767
      %v3772 = vand.u32 2147483647, %v3437
      %vm3773 = vcmp.eq.f32.partialorder %v3772, 8.507059e+37
      %v3774 = vand.u32 %v3437, 2147483648
      %v3775 = vor.u32 1.1754944e-38, %v3774
      %v3776 = vsel %vm3773, %v3775, %v3771
      %v3777 = vmul.f32 1.0, %v3776
      %v3778 = vrcp.pop %v3438
      %v3779 = vmul.f32 %v3438, %v3778
      %v3780 = vsub.f32 1.0, %v3779
      %v3781 = vmul.f32 %v3778, %v3780
      %v3782 = vadd.f32 %v3778, %v3781
      %vm3783 = vweird.f32 %v3438
      %vm3784 = vweird.f32 %v3778
      %vm3785 = vmor %vm3783, %vm3784
      %v3786 = vsel %vm3785, %v3778, %v3782
      %v3787 = vand.u32 2147483647, %v3438
      %vm3788 = vcmp.eq.f32.partialorder %v3787, 8.507059e+37
      %v3789 = vand.u32 %v3438, 2147483648
      %v3790 = vor.u32 1.1754944e-38, %v3789
      %v3791 = vsel %vm3788, %v3790, %v3786
      %v3792 = vmul.f32 1.0, %v3791
      %v3793 = vrcp.pop %v3439
      %v3794 = vmul.f32 %v3439, %v3793
      %v3795 = vsub.f32 1.0, %v3794
      %v3796 = vmul.f32 %v3793, %v3795
      %v3797 = vadd.f32 %v3793, %v3796
      %vm3798 = vweird.f32 %v3439
      %vm3799 = vweird.f32 %v3793
      %vm3800 = vmor %vm3798, %vm3799
      %v3801 = vsel %vm3800, %v3793, %v3797
      %v3802 = vand.u32 2147483647, %v3439
      %vm3803 = vcmp.eq.f32.partialorder %v3802, 8.507059e+37
      %v3804 = vand.u32 %v3439, 2147483648
      %v3805 = vor.u32 1.1754944e-38, %v3804
      %v3806 = vsel %vm3803, %v3805, %v3801
      %v3807 = vmul.f32 1.0, %v3806
      %v3808 = vrcp.pop %v3440
      %v3809 = vmul.f32 %v3440, %v3808
      %v3810 = vsub.f32 1.0, %v3809
      %v3811 = vmul.f32 %v3808, %v3810
      %v3812 = vadd.f32 %v3808, %v3811
      %vm3813 = vweird.f32 %v3440
      %vm3814 = vweird.f32 %v3808
      %vm3815 = vmor %vm3813, %vm3814
      %v3816 = vsel %vm3815, %v3808, %v3812
      %v3817 = vand.u32 2147483647, %v3440
      %vm3818 = vcmp.eq.f32.partialorder %v3817, 8.507059e+37
      %v3819 = vand.u32 %v3440, 2147483648
      %v3820 = vor.u32 1.1754944e-38, %v3819
      %v3821 = vsel %vm3818, %v3820, %v3816
      %v3822 = vmul.f32 1.0, %v3821
      %v3823 = vrcp.pop %v3441
      %v3824 = vmul.f32 %v3441, %v3823
      %v3825 = vsub.f32 1.0, %v3824
      %v3826 = vmul.f32 %v3823, %v3825
      %v3827 = vadd.f32 %v3823, %v3826
      %vm3828 = vweird.f32 %v3441
      %vm3829 = vweird.f32 %v3823
      %vm3830 = vmor %vm3828, %vm3829
      %v3831 = vsel %vm3830, %v3823, %v3827
      %v3832 = vand.u32 2147483647, %v3441
      %vm3833 = vcmp.eq.f32.partialorder %v3832, 8.507059e+37
      %v3834 = vand.u32 %v3441, 2147483648
      %v3835 = vor.u32 1.1754944e-38, %v3834
      %v3836 = vsel %vm3833, %v3835, %v3831
      %v3837 = vmul.f32 1.0, %v3836
      %v3838 = vrcp.pop %v3442
      %v3839 = vmul.f32 %v3442, %v3838
      %v3840 = vsub.f32 1.0, %v3839
      %v3841 = vmul.f32 %v3838, %v3840
      %v3842 = vadd.f32 %v3838, %v3841
      %vm3843 = vweird.f32 %v3442
      %vm3844 = vweird.f32 %v3838
      %vm3845 = vmor %vm3843, %vm3844
      %v3846 = vsel %vm3845, %v3838, %v3842
      %v3847 = vand.u32 2147483647, %v3442
      %vm3848 = vcmp.eq.f32.partialorder %v3847, 8.507059e+37
      %v3849 = vand.u32 %v3442, 2147483648
      %v3850 = vor.u32 1.1754944e-38, %v3849
      %v3851 = vsel %vm3848, %v3850, %v3846
      %v3852 = vmul.f32 1.0, %v3851
      %v3853 = vrcp.pop %v3443
      %v3854 = vmul.f32 %v3443, %v3853
      %v3855 = vsub.f32 1.0, %v3854
      %v3856 = vmul.f32 %v3853, %v3855
      %v3857 = vadd.f32 %v3853, %v3856
      %vm3858 = vweird.f32 %v3443
      %vm3859 = vweird.f32 %v3853
      %vm3860 = vmor %vm3858, %vm3859
      %v3861 = vsel %vm3860, %v3853, %v3857
      %v3862 = vand.u32 2147483647, %v3443
      %vm3863 = vcmp.eq.f32.partialorder %v3862, 8.507059e+37
      %v3864 = vand.u32 %v3443, 2147483648
      %v3865 = vor.u32 1.1754944e-38, %v3864
      %v3866 = vsel %vm3863, %v3865, %v3861
      %v3867 = vmul.f32 1.0, %v3866
      %v3868 = vrcp.pop %v3444
      %v3869 = vmul.f32 %v3444, %v3868
      %v3870 = vsub.f32 1.0, %v3869
      %v3871 = vmul.f32 %v3868, %v3870
      %v3872 = vadd.f32 %v3868, %v3871
      %vm3873 = vweird.f32 %v3444
      %vm3874 = vweird.f32 %v3868
      %vm3875 = vmor %vm3873, %vm3874
      %v3876 = vsel %vm3875, %v3868, %v3872
      %v3877 = vand.u32 2147483647, %v3444
      %vm3878 = vcmp.eq.f32.partialorder %v3877, 8.507059e+37
      %v3879 = vand.u32 %v3444, 2147483648
      %v3880 = vor.u32 1.1754944e-38, %v3879
      %v3881 = vsel %vm3878, %v3880, %v3876
      %v3882 = vmul.f32 1.0, %v3881
      %v3883 = vrcp.pop %v3445
      %v3884 = vmul.f32 %v3445, %v3883
      %v3885 = vsub.f32 1.0, %v3884
      %v3886 = vmul.f32 %v3883, %v3885
      %v3887 = vadd.f32 %v3883, %v3886
      %vm3888 = vweird.f32 %v3445
      %vm3889 = vweird.f32 %v3883
      %vm3890 = vmor %vm3888, %vm3889
      %v3891 = vsel %vm3890, %v3883, %v3887
      %v3892 = vand.u32 2147483647, %v3445
      %vm3893 = vcmp.eq.f32.partialorder %v3892, 8.507059e+37
      %v3894 = vand.u32 %v3445, 2147483648
      %v3895 = vor.u32 1.1754944e-38, %v3894
      %v3896 = vsel %vm3893, %v3895, %v3891
      %v3897 = vmul.f32 1.0, %v3896
      %v3898 = vrcp.pop %v3446
      %v3899 = vmul.f32 %v3446, %v3898
      %v3900 = vsub.f32 1.0, %v3899
      %v3901 = vmul.f32 %v3898, %v3900
      %v3902 = vadd.f32 %v3898, %v3901
      %vm3903 = vweird.f32 %v3446
      %vm3904 = vweird.f32 %v3898
      %vm3905 = vmor %vm3903, %vm3904
      %v3906 = vsel %vm3905, %v3898, %v3902
      %v3907 = vand.u32 2147483647, %v3446
      %vm3908 = vcmp.eq.f32.partialorder %v3907, 8.507059e+37
      %v3909 = vand.u32 %v3446, 2147483648
      %v3910 = vor.u32 1.1754944e-38, %v3909
      %v3911 = vsel %vm3908, %v3910, %v3906
      %v3912 = vmul.f32 1.0, %v3911
      %v3913 = vrcp.pop %v3447
      %v3914 = vmul.f32 %v3447, %v3913
      %v3915 = vsub.f32 1.0, %v3914
      %v3916 = vmul.f32 %v3913, %v3915
      %v3917 = vadd.f32 %v3913, %v3916
      %vm3918 = vweird.f32 %v3447
      %vm3919 = vweird.f32 %v3913
      %vm3920 = vmor %vm3918, %vm3919
      %v3921 = vsel %vm3920, %v3913, %v3917
      %v3922 = vand.u32 2147483647, %v3447
      %vm3923 = vcmp.eq.f32.partialorder %v3922, 8.507059e+37
      %v3924 = vand.u32 %v3447, 2147483648
      %v3925 = vor.u32 1.1754944e-38, %v3924
      %v3926 = vsel %vm3923, %v3925, %v3921
      %v3927 = vmul.f32 1.0, %v3926
      %3929 = vset.pattern.permute.xlu0 0
      %3930 = vperm.xlu0 %3929, %v3462
      %v3931 = vpop.permute.xlu0 %3930
      %3934 = vset.pattern.permute.xlu0 0
      %3935 = vperm.xlu0 %3934, %v3477
      %v3936 = vpop.permute.xlu0 %3935
      %3939 = vset.pattern.permute.xlu0 0
      %3940 = vperm.xlu0 %3939, %v3492
      %v3941 = vpop.permute.xlu0 %3940
      %3944 = vset.pattern.permute.xlu0 0
      %3945 = vperm.xlu0 %3944, %v3507
      %v3946 = vpop.permute.xlu0 %3945
      %3949 = vset.pattern.permute.xlu0 0
      %3950 = vperm.xlu0 %3949, %v3522
      %v3951 = vpop.permute.xlu0 %3950
      %3954 = vset.pattern.permute.xlu0 0
      %3955 = vperm.xlu0 %3954, %v3537
      %v3956 = vpop.permute.xlu0 %3955
      %3959 = vset.pattern.permute.xlu0 0
      %3960 = vperm.xlu0 %3959, %v3552
      %v3961 = vpop.permute.xlu0 %3960
      %3964 = vset.pattern.permute.xlu0 0
      %3965 = vperm.xlu0 %3964, %v3567
      %v3966 = vpop.permute.xlu0 %3965
      %3969 = vset.pattern.permute.xlu0 0
      %3970 = vperm.xlu0 %3969, %v3582
      %v3971 = vpop.permute.xlu0 %3970
      %3974 = vset.pattern.permute.xlu0 0
      %3975 = vperm.xlu0 %3974, %v3597
      %v3976 = vpop.permute.xlu0 %3975
      %3979 = vset.pattern.permute.xlu0 0
      %3980 = vperm.xlu0 %3979, %v3612
      %v3981 = vpop.permute.xlu0 %3980
      %3984 = vset.pattern.permute.xlu0 0
      %3985 = vperm.xlu0 %3984, %v3627
      %v3986 = vpop.permute.xlu0 %3985
      %3989 = vset.pattern.permute.xlu0 0
      %3990 = vperm.xlu0 %3989, %v3642
      %v3991 = vpop.permute.xlu0 %3990
      %3994 = vset.pattern.permute.xlu0 0
      %3995 = vperm.xlu0 %3994, %v3657
      %v3996 = vpop.permute.xlu0 %3995
      %3999 = vset.pattern.permute.xlu0 0
      %4000 = vperm.xlu0 %3999, %v3672
      %v4001 = vpop.permute.xlu0 %4000
      %4004 = vset.pattern.permute.xlu0 0
      %4005 = vperm.xlu0 %4004, %v3687
      %v4006 = vpop.permute.xlu0 %4005
      %4009 = vset.pattern.permute.xlu0 0
      %4010 = vperm.xlu0 %4009, %v3702
      %v4011 = vpop.permute.xlu0 %4010
      %4014 = vset.pattern.permute.xlu0 0
      %4015 = vperm.xlu0 %4014, %v3717
      %v4016 = vpop.permute.xlu0 %4015
      %4019 = vset.pattern.permute.xlu0 0
      %4020 = vperm.xlu0 %4019, %v3732
      %v4021 = vpop.permute.xlu0 %4020
      %4024 = vset.pattern.permute.xlu0 0
      %4025 = vperm.xlu0 %4024, %v3747
      %v4026 = vpop.permute.xlu0 %4025
      %4029 = vset.pattern.permute.xlu0 0
      %4030 = vperm.xlu0 %4029, %v3762
      %v4031 = vpop.permute.xlu0 %4030
      %4034 = vset.pattern.permute.xlu0 0
      %4035 = vperm.xlu0 %4034, %v3777
      %v4036 = vpop.permute.xlu0 %4035
      %4039 = vset.pattern.permute.xlu0 0
      %4040 = vperm.xlu0 %4039, %v3792
      %v4041 = vpop.permute.xlu0 %4040
      %4044 = vset.pattern.permute.xlu0 0
      %4045 = vperm.xlu0 %4044, %v3807
      %v4046 = vpop.permute.xlu0 %4045
      %4049 = vset.pattern.permute.xlu0 0
      %4050 = vperm.xlu0 %4049, %v3822
      %v4051 = vpop.permute.xlu0 %4050
      %4054 = vset.pattern.permute.xlu0 0
      %4055 = vperm.xlu0 %4054, %v3837
      %v4056 = vpop.permute.xlu0 %4055
      %4059 = vset.pattern.permute.xlu0 0
      %4060 = vperm.xlu0 %4059, %v3852
      %v4061 = vpop.permute.xlu0 %4060
      %4064 = vset.pattern.permute.xlu0 0
      %4065 = vperm.xlu0 %4064, %v3867
      %v4066 = vpop.permute.xlu0 %4065
      %4069 = vset.pattern.permute.xlu0 0
      %4070 = vperm.xlu0 %4069, %v3882
      %v4071 = vpop.permute.xlu0 %4070
      %4074 = vset.pattern.permute.xlu0 0
      %4075 = vperm.xlu0 %4074, %v3897
      %v4076 = vpop.permute.xlu0 %4075
      %4079 = vset.pattern.permute.xlu0 0
      %4080 = vperm.xlu0 %4079, %v3912
      %v4081 = vpop.permute.xlu0 %4080
      %4084 = vset.pattern.permute.xlu0 0
      %4085 = vperm.xlu0 %4084, %v3927
      %v4086 = vpop.permute.xlu0 %4085
      %v4088 = vmul.f32 %v3931, %v408
      %v4089 = vmul.f32 %v3936, %v409
      %v4090 = vmul.f32 %v3941, %v408
      %v4091 = vmul.f32 %v3946, %v409
      %v4092 = vmul.f32 %v3951, %v408
      %v4093 = vmul.f32 %v3956, %v409
      %v4094 = vmul.f32 %v3961, %v408
      %v4095 = vmul.f32 %v3966, %v409
      %v4096 = vmul.f32 %v3971, %v408
      %v4097 = vmul.f32 %v3976, %v409
      %v4098 = vmul.f32 %v3981, %v408
      %v4099 = vmul.f32 %v3986, %v409
      %v4100 = vmul.f32 %v3991, %v408
      %v4101 = vmul.f32 %v3996, %v409
      %v4102 = vmul.f32 %v4001, %v408
      %v4103 = vmul.f32 %v4006, %v409
      %v4104 = vmul.f32 %v4011, %v408
      %v4105 = vmul.f32 %v4016, %v409
      %v4106 = vmul.f32 %v4021, %v408
      %v4107 = vmul.f32 %v4026, %v409
      %v4108 = vmul.f32 %v4031, %v408
      %v4109 = vmul.f32 %v4036, %v409
      %v4110 = vmul.f32 %v4041, %v408
      %v4111 = vmul.f32 %v4046, %v409
      %v4112 = vmul.f32 %v4051, %v408
      %v4113 = vmul.f32 %v4056, %v409
      %v4114 = vmul.f32 %v4061, %v408
      %v4115 = vmul.f32 %v4066, %v409
      %v4116 = vmul.f32 %v4071, %v408
      %v4117 = vmul.f32 %v4076, %v409
      %v4118 = vmul.f32 %v4081, %v408
      %v4119 = vmul.f32 %v4086, %v409
      %v4120 = vsel %vm446, %v4088, 0.0
      %v4121 = vsel %vm446, %v4089, 0.0
      %v4122 = vadd.f32 %v4120, %v4121
      %v4123 = vrot.slane %v4122, 4
      %v4124 = vadd.f32 %v4122, %v4123
      %v4125 = vrot.slane %v4124, 2
      %v4126 = vadd.f32 %v4124, %v4125
      %v4127 = vrot.slane %v4126, 1
      %v4128 = vadd.f32 %v4126, %v4127
      %v4129 = vsel %vm446, %v4090, 0.0
      %v4130 = vsel %vm446, %v4091, 0.0
      %v4131 = vadd.f32 %v4129, %v4130
      %v4132 = vrot.slane %v4131, 4
      %v4133 = vadd.f32 %v4131, %v4132
      %v4134 = vrot.slane %v4133, 2
      %v4135 = vadd.f32 %v4133, %v4134
      %v4136 = vrot.slane %v4135, 1
      %v4137 = vadd.f32 %v4135, %v4136
      %v4138 = vsel %vm446, %v4092, 0.0
      %v4139 = vsel %vm446, %v4093, 0.0
      %v4140 = vadd.f32 %v4138, %v4139
      %v4141 = vrot.slane %v4140, 4
      %v4142 = vadd.f32 %v4140, %v4141
      %v4143 = vrot.slane %v4142, 2
      %v4144 = vadd.f32 %v4142, %v4143
      %v4145 = vrot.slane %v4144, 1
      %v4146 = vadd.f32 %v4144, %v4145
      %v4147 = vsel %vm446, %v4094, 0.0
      %v4148 = vsel %vm446, %v4095, 0.0
      %v4149 = vadd.f32 %v4147, %v4148
      %v4150 = vrot.slane %v4149, 4
      %v4151 = vadd.f32 %v4149, %v4150
      %v4152 = vrot.slane %v4151, 2
      %v4153 = vadd.f32 %v4151, %v4152
      %v4154 = vrot.slane %v4153, 1
      %v4155 = vadd.f32 %v4153, %v4154
      %v4156 = vsel %vm446, %v4096, 0.0
      %v4157 = vsel %vm446, %v4097, 0.0
      %v4158 = vadd.f32 %v4156, %v4157
      %v4159 = vrot.slane %v4158, 4
      %v4160 = vadd.f32 %v4158, %v4159
      %v4161 = vrot.slane %v4160, 2
      %v4162 = vadd.f32 %v4160, %v4161
      %v4163 = vrot.slane %v4162, 1
      %v4164 = vadd.f32 %v4162, %v4163
      %v4165 = vsel %vm446, %v4098, 0.0
      %v4166 = vsel %vm446, %v4099, 0.0
      %v4167 = vadd.f32 %v4165, %v4166
      %v4168 = vrot.slane %v4167, 4
      %v4169 = vadd.f32 %v4167, %v4168
      %v4170 = vrot.slane %v4169, 2
      %v4171 = vadd.f32 %v4169, %v4170
      %v4172 = vrot.slane %v4171, 1
      %v4173 = vadd.f32 %v4171, %v4172
      %v4174 = vsel %vm446, %v4100, 0.0
      %v4175 = vsel %vm446, %v4101, 0.0
      %v4176 = vadd.f32 %v4174, %v4175
      %v4177 = vrot.slane %v4176, 4
      %v4178 = vadd.f32 %v4176, %v4177
      %v4179 = vrot.slane %v4178, 2
      %v4180 = vadd.f32 %v4178, %v4179
      %v4181 = vrot.slane %v4180, 1
      %v4182 = vadd.f32 %v4180, %v4181
      %v4183 = vsel %vm446, %v4102, 0.0
      %v4184 = vsel %vm446, %v4103, 0.0
      %v4185 = vadd.f32 %v4183, %v4184
      %v4186 = vrot.slane %v4185, 4
      %v4187 = vadd.f32 %v4185, %v4186
      %v4188 = vrot.slane %v4187, 2
      %v4189 = vadd.f32 %v4187, %v4188
      %v4190 = vrot.slane %v4189, 1
      %v4191 = vadd.f32 %v4189, %v4190
      %v4192 = vsel %vm446, %v4104, 0.0
      %v4193 = vsel %vm446, %v4105, 0.0
      %v4194 = vadd.f32 %v4192, %v4193
      %v4195 = vrot.slane %v4194, 4
      %v4196 = vadd.f32 %v4194, %v4195
      %v4197 = vrot.slane %v4196, 2
      %v4198 = vadd.f32 %v4196, %v4197
      %v4199 = vrot.slane %v4198, 1
      %v4200 = vadd.f32 %v4198, %v4199
      %v4201 = vsel %vm446, %v4106, 0.0
      %v4202 = vsel %vm446, %v4107, 0.0
      %v4203 = vadd.f32 %v4201, %v4202
      %v4204 = vrot.slane %v4203, 4
      %v4205 = vadd.f32 %v4203, %v4204
      %v4206 = vrot.slane %v4205, 2
      %v4207 = vadd.f32 %v4205, %v4206
      %v4208 = vrot.slane %v4207, 1
      %v4209 = vadd.f32 %v4207, %v4208
      %v4210 = vsel %vm446, %v4108, 0.0
      %v4211 = vsel %vm446, %v4109, 0.0
      %v4212 = vadd.f32 %v4210, %v4211
      %v4213 = vrot.slane %v4212, 4
      %v4214 = vadd.f32 %v4212, %v4213
      %v4215 = vrot.slane %v4214, 2
      %v4216 = vadd.f32 %v4214, %v4215
      %v4217 = vrot.slane %v4216, 1
      %v4218 = vadd.f32 %v4216, %v4217
      %v4219 = vsel %vm446, %v4110, 0.0
      %v4220 = vsel %vm446, %v4111, 0.0
      %v4221 = vadd.f32 %v4219, %v4220
      %v4222 = vrot.slane %v4221, 4
      %v4223 = vadd.f32 %v4221, %v4222
      %v4224 = vrot.slane %v4223, 2
      %v4225 = vadd.f32 %v4223, %v4224
      %v4226 = vrot.slane %v4225, 1
      %v4227 = vadd.f32 %v4225, %v4226
      %v4228 = vsel %vm446, %v4112, 0.0
      %v4229 = vsel %vm446, %v4113, 0.0
      %v4230 = vadd.f32 %v4228, %v4229
      %v4231 = vrot.slane %v4230, 4
      %v4232 = vadd.f32 %v4230, %v4231
      %v4233 = vrot.slane %v4232, 2
      %v4234 = vadd.f32 %v4232, %v4233
      %v4235 = vrot.slane %v4234, 1
      %v4236 = vadd.f32 %v4234, %v4235
      %v4237 = vsel %vm446, %v4114, 0.0
      %v4238 = vsel %vm446, %v4115, 0.0
      %v4239 = vadd.f32 %v4237, %v4238
      %v4240 = vrot.slane %v4239, 4
      %v4241 = vadd.f32 %v4239, %v4240
      %v4242 = vrot.slane %v4241, 2
      %v4243 = vadd.f32 %v4241, %v4242
      %v4244 = vrot.slane %v4243, 1
      %v4245 = vadd.f32 %v4243, %v4244
      %v4246 = vsel %vm446, %v4116, 0.0
      %v4247 = vsel %vm446, %v4117, 0.0
      %v4248 = vadd.f32 %v4246, %v4247
      %v4249 = vrot.slane %v4248, 4
      %v4250 = vadd.f32 %v4248, %v4249
      %v4251 = vrot.slane %v4250, 2
      %v4252 = vadd.f32 %v4250, %v4251
      %v4253 = vrot.slane %v4252, 1
      %v4254 = vadd.f32 %v4252, %v4253
      %v4255 = vsel %vm446, %v4118, 0.0
      %v4256 = vsel %vm446, %v4119, 0.0
      %v4257 = vadd.f32 %v4255, %v4256
      %v4258 = vrot.slane %v4257, 4
      %v4259 = vadd.f32 %v4257, %v4258
      %v4260 = vrot.slane %v4259, 2
      %v4261 = vadd.f32 %v4259, %v4260
      %v4262 = vrot.slane %v4261, 1
      %v4263 = vadd.f32 %v4261, %v4262
      %v4264 = vld [vmem:[%s7] sm:$0xff]
      %v4265 = vld [vmem:[%s7 + $0x8] sm:$0xff]
      %v4266 = vld [vmem:[%s7 + $0x10] sm:$0xff]
      %v4267 = vld [vmem:[%s7 + $0x18] sm:$0xff]
      %vm4284 = vcmask 1041409
      %v4285 = vsel %vm4284, %v4137, %v4128
      %vm4286 = vcmask 1042434
      %v4287 = vsel %vm4286, %v4146, %v4285
      %vm4288 = vcmask 1043459
      %v4289 = vsel %vm4288, %v4155, %v4287
      %vm4290 = vcmask 1044484
      %v4291 = vsel %vm4290, %v4164, %v4289
      %vm4292 = vcmask 1045509
      %v4293 = vsel %vm4292, %v4173, %v4291
      %vm4294 = vcmask 1046534
      %v4295 = vsel %vm4294, %v4182, %v4293
      %vm4296 = vcmask 1047559
      %v4297 = vsel %vm4296, %v4191, %v4295
      %v4298 = vsel %vm4284, %v4209, %v4200
      %v4299 = vsel %vm4286, %v4218, %v4298
      %v4300 = vsel %vm4288, %v4227, %v4299
      %v4301 = vsel %vm4290, %v4236, %v4300
      %v4302 = vsel %vm4292, %v4245, %v4301
      %v4303 = vsel %vm4294, %v4254, %v4302
      %v4304 = vsel %vm4296, %v4263, %v4303
      %v4305 = vsel %vm446, %v4297, 0
      %v4307 = vsel %vm446, %v4304, 0
      %4309 = vmatpush.msra.mxu0 0.0
      %4310 = vmatpush.msra.mxu0 0.0
      %4311 = vmatpush.msra.mxu0 0.0
      %4312 = vmatpush.msra.mxu0 0.0
      %4313 = vmatpush.msra.mxu0 0.0
      %4314 = vmatpush.msra.mxu0 0.0
      %4315 = vmatpush.msra.mxu0 0.0
      %4316 = vmatpush.msra.mxu0 0.0
      %4317 = vmatpush.msra.mxu0 0.0
      %4318 = vmatpush.msra.mxu0 0.0
      %4319 = vmatpush.msra.mxu0 0.0
      %4320 = vmatpush.msra.mxu0 0.0
      %v4321 = vand.u32 %v4267, 4294901760
      %4322 = vmatpush.msra.mxu0 %v4321
      %v4323 = vand.u32 %v4266, 4294901760
      %4324 = vmatpush.msra.mxu0 %v4323
      %v4325 = vand.u32 %v4265, 4294901760
      %4326 = vmatpush.msra.mxu0 %v4325
      %v4327 = vand.u32 %v4264, 4294901760
      %4328 = vmatpush.msra.mxu0 %v4327
      %v4329 = vand.u32 %v4305, 4294901760
      %v4330 = vsub.f32 %v4305, %v4329
      %v4331 = vand.u32 %v4330, 4294901760
      %v4332 = vsub.f32 %v4330, %v4331
      %v4333 = vand.u32 %v4332, 4294901760
      %4334 = vmatmul.f32.gmra.mxu0 %v4333
      %v4335 = vpop.f32.mrf.mxu0
      %v4336 = vadd.f32 0.0, %v4335
      %v4337 = vand.u32 %v4307, 4294901760
      %v4338 = vsub.f32 %v4307, %v4337
      %v4339 = vand.u32 %v4338, 4294901760
      %v4340 = vsub.f32 %v4338, %v4339
      %v4341 = vand.u32 %v4340, 4294901760
      %4342 = vmatmul.f32.gmra.mxu0 %v4341
      %v4343 = vpop.f32.mrf.mxu0
      %v4344 = vadd.f32 0.0, %v4343
      %4345 = vdwg.mxu0
      %4346 = vmatpush.msra.mxu0 0.0
      %4347 = vmatpush.msra.mxu0 0.0
      %4348 = vmatpush.msra.mxu0 0.0
      %4349 = vmatpush.msra.mxu0 0.0
      %4350 = vmatpush.msra.mxu0 0.0
      %4351 = vmatpush.msra.mxu0 0.0
      %4352 = vmatpush.msra.mxu0 0.0
      %4353 = vmatpush.msra.mxu0 0.0
      %4354 = vmatpush.msra.mxu0 0.0
      %4355 = vmatpush.msra.mxu0 0.0
      %4356 = vmatpush.msra.mxu0 0.0
      %4357 = vmatpush.msra.mxu0 0.0
      %v4358 = vand.u32 %v4267, 4294901760
      %v4359 = vsub.f32 %v4267, %v4358
      %v4360 = vand.u32 %v4359, 4294901760
      %v4361 = vsub.f32 %v4359, %v4360
      %v4362 = vand.u32 %v4361, 4294901760
      %4363 = vmatpush.msra.mxu0 %v4362
      %v4364 = vand.u32 %v4266, 4294901760
      %v4365 = vsub.f32 %v4266, %v4364
      %v4366 = vand.u32 %v4365, 4294901760
      %v4367 = vsub.f32 %v4365, %v4366
      %v4368 = vand.u32 %v4367, 4294901760
      %4369 = vmatpush.msra.mxu0 %v4368
      %v4370 = vand.u32 %v4265, 4294901760
      %v4371 = vsub.f32 %v4265, %v4370
      %v4372 = vand.u32 %v4371, 4294901760
      %v4373 = vsub.f32 %v4371, %v4372
      %v4374 = vand.u32 %v4373, 4294901760
      %4375 = vmatpush.msra.mxu0 %v4374
      %v4376 = vand.u32 %v4264, 4294901760
      %v4377 = vsub.f32 %v4264, %v4376
      %v4378 = vand.u32 %v4377, 4294901760
      %v4379 = vsub.f32 %v4377, %v4378
      %v4380 = vand.u32 %v4379, 4294901760
      %4381 = vmatpush.msra.mxu0 %v4380
      %v4382 = vand.u32 %v4305, 4294901760
      %4383 = vmatmul.f32.gmra.mxu0 %v4382
      %v4384 = vpop.f32.mrf.mxu0
      %v4385 = vadd.f32 %v4336, %v4384
      %v4386 = vand.u32 %v4307, 4294901760
      %4387 = vmatmul.f32.gmra.mxu0 %v4386
      %v4388 = vpop.f32.mrf.mxu0
      %v4389 = vadd.f32 %v4344, %v4388
      %4390 = vdwg.mxu0
      %4391 = vmatpush.msra.mxu0 0.0
      %4392 = vmatpush.msra.mxu0 0.0
      %4393 = vmatpush.msra.mxu0 0.0
      %4394 = vmatpush.msra.mxu0 0.0
      %4395 = vmatpush.msra.mxu0 0.0
      %4396 = vmatpush.msra.mxu0 0.0
      %4397 = vmatpush.msra.mxu0 0.0
      %4398 = vmatpush.msra.mxu0 0.0
      %4399 = vmatpush.msra.mxu0 0.0
      %4400 = vmatpush.msra.mxu0 0.0
      %4401 = vmatpush.msra.mxu0 0.0
      %4402 = vmatpush.msra.mxu0 0.0
      %v4403 = vand.u32 %v4267, 4294901760
      %v4404 = vsub.f32 %v4267, %v4403
      %4405 = vmatpush.msra.mxu0 %v4404
      %v4406 = vand.u32 %v4266, 4294901760
      %v4407 = vsub.f32 %v4266, %v4406
      %4408 = vmatpush.msra.mxu0 %v4407
      %v4409 = vand.u32 %v4265, 4294901760
      %v4410 = vsub.f32 %v4265, %v4409
      %4411 = vmatpush.msra.mxu0 %v4410
      %v4412 = vand.u32 %v4264, 4294901760
      %v4413 = vsub.f32 %v4264, %v4412
      %4414 = vmatpush.msra.mxu0 %v4413
      %v4415 = vand.u32 %v4305, 4294901760
      %v4416 = vsub.f32 %v4305, %v4415
      %4417 = vmatmul.f32.gmra.mxu0 %v4416
      %v4418 = vpop.f32.mrf.mxu0
      %v4419 = vadd.f32 %v4385, %v4418
      %v4420 = vand.u32 %v4307, 4294901760
      %v4421 = vsub.f32 %v4307, %v4420
      %4422 = vmatmul.f32.gmra.mxu0 %v4421
      %v4423 = vpop.f32.mrf.mxu0
      %v4424 = vadd.f32 %v4389, %v4423
      %4425 = vdwg.mxu0
      %4426 = vmatpush.msra.mxu0 0.0
      %4427 = vmatpush.msra.mxu0 0.0
      %4428 = vmatpush.msra.mxu0 0.0
      %4429 = vmatpush.msra.mxu0 0.0
      %4430 = vmatpush.msra.mxu0 0.0
      %4431 = vmatpush.msra.mxu0 0.0
      %4432 = vmatpush.msra.mxu0 0.0
      %4433 = vmatpush.msra.mxu0 0.0
      %4434 = vmatpush.msra.mxu0 0.0
      %4435 = vmatpush.msra.mxu0 0.0
      %4436 = vmatpush.msra.mxu0 0.0
      %4437 = vmatpush.msra.mxu0 0.0
      %v4438 = vand.u32 %v4267, 4294901760
      %4439 = vmatpush.msra.mxu0 %v4438
      %v4440 = vand.u32 %v4266, 4294901760
      %4441 = vmatpush.msra.mxu0 %v4440
      %v4442 = vand.u32 %v4265, 4294901760
      %4443 = vmatpush.msra.mxu0 %v4442
      %v4444 = vand.u32 %v4264, 4294901760
      %4445 = vmatpush.msra.mxu0 %v4444
      %v4446 = vand.u32 %v4305, 4294901760
      %v4447 = vsub.f32 %v4305, %v4446
      %v4448 = vand.u32 %v4447, 4294901760
      %4449 = vmatmul.f32.gmra.mxu0 %v4448
      %v4450 = vpop.f32.mrf.mxu0
      %v4451 = vadd.f32 %v4419, %v4450
      %v4452 = vand.u32 %v4307, 4294901760
      %v4453 = vsub.f32 %v4307, %v4452
      %v4454 = vand.u32 %v4453, 4294901760
      %4455 = vmatmul.f32.gmra.mxu0 %v4454
      %v4456 = vpop.f32.mrf.mxu0
      %v4457 = vadd.f32 %v4424, %v4456
      %4458 = vdwg.mxu0
      %4459 = vmatpush.msra.mxu0 0.0
      %4460 = vmatpush.msra.mxu0 0.0
      %4461 = vmatpush.msra.mxu0 0.0
      %4462 = vmatpush.msra.mxu0 0.0
      %4463 = vmatpush.msra.mxu0 0.0
      %4464 = vmatpush.msra.mxu0 0.0
      %4465 = vmatpush.msra.mxu0 0.0
      %4466 = vmatpush.msra.mxu0 0.0
      %4467 = vmatpush.msra.mxu0 0.0
      %4468 = vmatpush.msra.mxu0 0.0
      %4469 = vmatpush.msra.mxu0 0.0
      %4470 = vmatpush.msra.mxu0 0.0
      %v4471 = vand.u32 %v4267, 4294901760
      %v4472 = vsub.f32 %v4267, %v4471
      %v4473 = vand.u32 %v4472, 4294901760
      %4474 = vmatpush.msra.mxu0 %v4473
      %v4475 = vand.u32 %v4266, 4294901760
      %v4476 = vsub.f32 %v4266, %v4475
      %v4477 = vand.u32 %v4476, 4294901760
      %4478 = vmatpush.msra.mxu0 %v4477
      %v4479 = vand.u32 %v4265, 4294901760
      %v4480 = vsub.f32 %v4265, %v4479
      %v4481 = vand.u32 %v4480, 4294901760
      %4482 = vmatpush.msra.mxu0 %v4481
      %v4483 = vand.u32 %v4264, 4294901760
      %v4484 = vsub.f32 %v4264, %v4483
      %v4485 = vand.u32 %v4484, 4294901760
      %4486 = vmatpush.msra.mxu0 %v4485
      %v4487 = vand.u32 %v4305, 4294901760
      %4488 = vmatmul.f32.gmra.mxu0 %v4487
      %v4489 = vpop.f32.mrf.mxu0
      %v4490 = vadd.f32 %v4451, %v4489
      %v4491 = vand.u32 %v4307, 4294901760
      %4492 = vmatmul.f32.gmra.mxu0 %v4491
      %v4493 = vpop.f32.mrf.mxu0
      %v4494 = vadd.f32 %v4457, %v4493
      %4495 = vdwg.mxu0
      %4496 = vmatpush.msra.mxu0 0.0
      %4497 = vmatpush.msra.mxu0 0.0
      %4498 = vmatpush.msra.mxu0 0.0
      %4499 = vmatpush.msra.mxu0 0.0
      %4500 = vmatpush.msra.mxu0 0.0
      %4501 = vmatpush.msra.mxu0 0.0
      %4502 = vmatpush.msra.mxu0 0.0
      %4503 = vmatpush.msra.mxu0 0.0
      %4504 = vmatpush.msra.mxu0 0.0
      %4505 = vmatpush.msra.mxu0 0.0
      %4506 = vmatpush.msra.mxu0 0.0
      %4507 = vmatpush.msra.mxu0 0.0
      %v4508 = vand.u32 %v4267, 4294901760
      %4509 = vmatpush.msra.mxu0 %v4508
      %v4510 = vand.u32 %v4266, 4294901760
      %4511 = vmatpush.msra.mxu0 %v4510
      %v4512 = vand.u32 %v4265, 4294901760
      %4513 = vmatpush.msra.mxu0 %v4512
      %v4514 = vand.u32 %v4264, 4294901760
      %4515 = vmatpush.msra.mxu0 %v4514
      %v4516 = vand.u32 %v4305, 4294901760
      %4517 = vmatmul.f32.gmra.mxu0 %v4516
      %v4518 = vpop.f32.mrf.mxu0
      %v4519 = vadd.f32 %v4490, %v4518
      %v4520 = vand.u32 %v4307, 4294901760
      %4521 = vmatmul.f32.gmra.mxu0 %v4520
      %v4522 = vpop.f32.mrf.mxu0
      %v4523 = vadd.f32 %v4494, %v4522
      %4524 = vdwg.mxu0
      %4527 = vrot.lane.b32.xlu0 %v4519, 32
      %v4528 = vpop.permute.xlu0 %4527
      %4529 = vrot.lane.b32.xlu0 %v4523, 32
      %v4530 = vpop.permute.xlu0 %4529
      %v4533 = vadd.f32 %v663, %v4528
      %v4534 = vadd.f32 %v667, %v4530
      %v4537 = vrot.slane %v4533, 1
      %v4538 = vrot.slane %v4533, 2
      %v4539 = vrot.slane %v4533, 3
      %v4540 = vrot.slane %v4533, 4
      %v4541 = vrot.slane %v4533, 5
      %v4542 = vrot.slane %v4533, 6
      %v4543 = vrot.slane %v4533, 7
      %v4544 = vrot.slane %v4534, 1
      %v4545 = vrot.slane %v4534, 2
      %v4546 = vrot.slane %v4534, 3
      %v4547 = vrot.slane %v4534, 4
      %v4548 = vrot.slane %v4534, 5
      %v4549 = vrot.slane %v4534, 6
      %v4550 = vrot.slane %v4534, 7
      %v4551 = vperm.slane %v4533, 0
      %v4552 = vperm.slane %v4537, 0
      %v4553 = vperm.slane %v4538, 0
      %v4554 = vperm.slane %v4539, 0
      %v4555 = vperm.slane %v4540, 0
      %v4556 = vperm.slane %v4541, 0
      %v4557 = vperm.slane %v4542, 0
      %v4558 = vperm.slane %v4543, 0
      %v4559 = vperm.slane %v4534, 0
      %v4560 = vperm.slane %v4544, 0
      %v4561 = vperm.slane %v4545, 0
      %v4562 = vperm.slane %v4546, 0
      %v4563 = vperm.slane %v4547, 0
      %v4564 = vperm.slane %v4548, 0
      %v4565 = vperm.slane %v4549, 0
      %v4566 = vperm.slane %v4550, 0
      %v4583 = vadd.f32 %v4551, %v4533
      %v4584 = vadd.f32 %v4551, %v4534
      %v4585 = vadd.f32 %v4552, %v4533
      %v4586 = vadd.f32 %v4552, %v4534
      %v4587 = vadd.f32 %v4553, %v4533
      %v4588 = vadd.f32 %v4553, %v4534
      %v4589 = vadd.f32 %v4554, %v4533
      %v4590 = vadd.f32 %v4554, %v4534
      %v4591 = vadd.f32 %v4555, %v4533
      %v4592 = vadd.f32 %v4555, %v4534
      %v4593 = vadd.f32 %v4556, %v4533
      %v4594 = vadd.f32 %v4556, %v4534
      %v4595 = vadd.f32 %v4557, %v4533
      %v4596 = vadd.f32 %v4557, %v4534
      %v4597 = vadd.f32 %v4558, %v4533
      %v4598 = vadd.f32 %v4558, %v4534
      %v4599 = vadd.f32 %v4559, %v4533
      %v4600 = vadd.f32 %v4559, %v4534
      %v4601 = vadd.f32 %v4560, %v4533
      %v4602 = vadd.f32 %v4560, %v4534
      %v4603 = vadd.f32 %v4561, %v4533
      %v4604 = vadd.f32 %v4561, %v4534
      %v4605 = vadd.f32 %v4562, %v4533
      %v4606 = vadd.f32 %v4562, %v4534
      %v4607 = vadd.f32 %v4563, %v4533
      %v4608 = vadd.f32 %v4563, %v4534
      %v4609 = vadd.f32 %v4564, %v4533
      %v4610 = vadd.f32 %v4564, %v4534
      %v4611 = vadd.f32 %v4565, %v4533
      %v4612 = vadd.f32 %v4565, %v4534
      %v4613 = vadd.f32 %v4566, %v4533
      %v4614 = vadd.f32 %v4566, %v4534
      %v4615 = vadd.f32 %v4583, %v1766
      %v4616 = vadd.f32 %v4584, %v1770
      %v4617 = vadd.f32 %v4585, %v1774
      %v4618 = vadd.f32 %v4586, %v1778
      %v4619 = vadd.f32 %v4587, %v1782
      %v4620 = vadd.f32 %v4588, %v1786
      %v4621 = vadd.f32 %v4589, %v1790
      %v4622 = vadd.f32 %v4590, %v1794
      %v4623 = vadd.f32 %v4591, %v1798
      %v4624 = vadd.f32 %v4592, %v1802
      %v4625 = vadd.f32 %v4593, %v1806
      %v4626 = vadd.f32 %v4594, %v1810
      %v4627 = vadd.f32 %v4595, %v1814
      %v4628 = vadd.f32 %v4596, %v1818
      %v4629 = vadd.f32 %v4597, %v1822
      %v4630 = vadd.f32 %v4598, %v1826
      %v4631 = vadd.f32 %v4599, %v1830
      %v4632 = vadd.f32 %v4600, %v1834
      %v4633 = vadd.f32 %v4601, %v1838
      %v4634 = vadd.f32 %v4602, %v1842
      %v4635 = vadd.f32 %v4603, %v1846
      %v4636 = vadd.f32 %v4604, %v1850
      %v4637 = vadd.f32 %v4605, %v1854
      %v4638 = vadd.f32 %v4606, %v1858
      %v4639 = vadd.f32 %v4607, %v1862
      %v4640 = vadd.f32 %v4608, %v1866
      %v4641 = vadd.f32 %v4609, %v1870
      %v4642 = vadd.f32 %v4610, %v1874
      %v4643 = vadd.f32 %v4611, %v1878
      %v4644 = vadd.f32 %v4612, %v1882
      %v4645 = vadd.f32 %v4613, %v1886
      %v4646 = vadd.f32 %v4614, %v1890
      %v4647 = vld [vmem:[%s8] sm:$0x1]
      %v4649 = vperm.slane %v4647, 0
      %4650 = vrot.lane.b32.xlu0 %v4649, 32
      %v4651 = vpop.permute.xlu0 %4650
      %v4653 = vadd.f32 %v4615, %v4651
      %v4654 = vadd.f32 %v4616, %v4651
      %v4655 = vadd.f32 %v4617, %v4651
      %v4656 = vadd.f32 %v4618, %v4651
      %v4657 = vadd.f32 %v4619, %v4651
      %v4658 = vadd.f32 %v4620, %v4651
      %v4659 = vadd.f32 %v4621, %v4651
      %v4660 = vadd.f32 %v4622, %v4651
      %v4661 = vadd.f32 %v4623, %v4651
      %v4662 = vadd.f32 %v4624, %v4651
      %v4663 = vadd.f32 %v4625, %v4651
      %v4664 = vadd.f32 %v4626, %v4651
      %v4665 = vadd.f32 %v4627, %v4651
      %v4666 = vadd.f32 %v4628, %v4651
      %v4667 = vadd.f32 %v4629, %v4651
      %v4668 = vadd.f32 %v4630, %v4651
      %v4669 = vadd.f32 %v4631, %v4651
      %v4670 = vadd.f32 %v4632, %v4651
      %v4671 = vadd.f32 %v4633, %v4651
      %v4672 = vadd.f32 %v4634, %v4651
      %v4673 = vadd.f32 %v4635, %v4651
      %v4674 = vadd.f32 %v4636, %v4651
      %v4675 = vadd.f32 %v4637, %v4651
      %v4676 = vadd.f32 %v4638, %v4651
      %v4677 = vadd.f32 %v4639, %v4651
      %v4678 = vadd.f32 %v4640, %v4651
      %v4679 = vadd.f32 %v4641, %v4651
      %v4680 = vadd.f32 %v4642, %v4651
      %v4681 = vadd.f32 %v4643, %v4651
      %v4682 = vadd.f32 %v4644, %v4651
      %v4683 = vadd.f32 %v4645, %v4651
      %v4684 = vadd.f32 %v4646, %v4651
      %v4685 = vmax.f32 %v4653, 0.0
      %v4686 = vmax.f32 %v4654, 0.0
      %v4687 = vmax.f32 %v4655, 0.0
      %v4688 = vmax.f32 %v4656, 0.0
      %v4689 = vmax.f32 %v4657, 0.0
      %v4690 = vmax.f32 %v4658, 0.0
      %v4691 = vmax.f32 %v4659, 0.0
      %v4692 = vmax.f32 %v4660, 0.0
      %v4693 = vmax.f32 %v4661, 0.0
      %v4694 = vmax.f32 %v4662, 0.0
      %v4695 = vmax.f32 %v4663, 0.0
      %v4696 = vmax.f32 %v4664, 0.0
      %v4697 = vmax.f32 %v4665, 0.0
      %v4698 = vmax.f32 %v4666, 0.0
      %v4699 = vmax.f32 %v4667, 0.0
      %v4700 = vmax.f32 %v4668, 0.0
      %v4701 = vmax.f32 %v4669, 0.0
      %v4702 = vmax.f32 %v4670, 0.0
      %v4703 = vmax.f32 %v4671, 0.0
      %v4704 = vmax.f32 %v4672, 0.0
      %v4705 = vmax.f32 %v4673, 0.0
      %v4706 = vmax.f32 %v4674, 0.0
      %v4707 = vmax.f32 %v4675, 0.0
      %v4708 = vmax.f32 %v4676, 0.0
      %v4709 = vmax.f32 %v4677, 0.0
      %v4710 = vmax.f32 %v4678, 0.0
      %v4711 = vmax.f32 %v4679, 0.0
      %v4712 = vmax.f32 %v4680, 0.0
      %v4713 = vmax.f32 %v4681, 0.0
      %v4714 = vmax.f32 %v4682, 0.0
      %v4715 = vmax.f32 %v4683, 0.0
      %v4716 = vmax.f32 %v4684, 0.0
      %v4717 = vld [vmem:[%s9] sm:$0xff]
      %v4718 = vld [vmem:[%s9 + $0x8] sm:$0xff]
      %v4719 = vld [vmem:[%s9 + $0x10] sm:$0xff]
      %v4720 = vld [vmem:[%s9 + $0x18] sm:$0xff]
      %v4721 = vld [vmem:[%s10] sm:$0x1]
      %v4723 = vperm.slane %v4721, 0
      %4757 = vrot.lane.b32.xlu0 %v4685, 96
      %v4758 = vpop.permute.xlu0 %4757
      %4759 = vrot.lane.b32.xlu0 %v4686, 96
      %v4760 = vpop.permute.xlu0 %4759
      %4761 = vrot.lane.b32.xlu0 %v4687, 96
      %v4762 = vpop.permute.xlu0 %4761
      %4763 = vrot.lane.b32.xlu0 %v4688, 96
      %v4764 = vpop.permute.xlu0 %4763
      %4765 = vrot.lane.b32.xlu0 %v4689, 96
      %v4766 = vpop.permute.xlu0 %4765
      %4767 = vrot.lane.b32.xlu0 %v4690, 96
      %v4768 = vpop.permute.xlu0 %4767
      %4769 = vrot.lane.b32.xlu0 %v4691, 96
      %v4770 = vpop.permute.xlu0 %4769
      %4771 = vrot.lane.b32.xlu0 %v4692, 96
      %v4772 = vpop.permute.xlu0 %4771
      %4773 = vrot.lane.b32.xlu0 %v4693, 96
      %v4774 = vpop.permute.xlu0 %4773
      %4775 = vrot.lane.b32.xlu0 %v4694, 96
      %v4776 = vpop.permute.xlu0 %4775
      %4777 = vrot.lane.b32.xlu0 %v4695, 96
      %v4778 = vpop.permute.xlu0 %4777
      %4779 = vrot.lane.b32.xlu0 %v4696, 96
      %v4780 = vpop.permute.xlu0 %4779
      %4781 = vrot.lane.b32.xlu0 %v4697, 96
      %v4782 = vpop.permute.xlu0 %4781
      %4783 = vrot.lane.b32.xlu0 %v4698, 96
      %v4784 = vpop.permute.xlu0 %4783
      %4785 = vrot.lane.b32.xlu0 %v4699, 96
      %v4786 = vpop.permute.xlu0 %4785
      %4787 = vrot.lane.b32.xlu0 %v4700, 96
      %v4788 = vpop.permute.xlu0 %4787
      %4789 = vrot.lane.b32.xlu0 %v4701, 96
      %v4790 = vpop.permute.xlu0 %4789
      %4791 = vrot.lane.b32.xlu0 %v4702, 96
      %v4792 = vpop.permute.xlu0 %4791
      %4793 = vrot.lane.b32.xlu0 %v4703, 96
      %v4794 = vpop.permute.xlu0 %4793
      %4795 = vrot.lane.b32.xlu0 %v4704, 96
      %v4796 = vpop.permute.xlu0 %4795
      %4797 = vrot.lane.b32.xlu0 %v4705, 96
      %v4798 = vpop.permute.xlu0 %4797
      %4799 = vrot.lane.b32.xlu0 %v4706, 96
      %v4800 = vpop.permute.xlu0 %4799
      %4801 = vrot.lane.b32.xlu0 %v4707, 96
      %v4802 = vpop.permute.xlu0 %4801
      %4803 = vrot.lane.b32.xlu0 %v4708, 96
      %v4804 = vpop.permute.xlu0 %4803
      %4805 = vrot.lane.b32.xlu0 %v4709, 96
      %v4806 = vpop.permute.xlu0 %4805
      %4807 = vrot.lane.b32.xlu0 %v4710, 96
      %v4808 = vpop.permute.xlu0 %4807
      %4809 = vrot.lane.b32.xlu0 %v4711, 96
      %v4810 = vpop.permute.xlu0 %4809
      %4811 = vrot.lane.b32.xlu0 %v4712, 96
      %v4812 = vpop.permute.xlu0 %4811
      %4813 = vrot.lane.b32.xlu0 %v4713, 96
      %v4814 = vpop.permute.xlu0 %4813
      %4815 = vrot.lane.b32.xlu0 %v4714, 96
      %v4816 = vpop.permute.xlu0 %4815
      %4817 = vrot.lane.b32.xlu0 %v4715, 96
      %v4818 = vpop.permute.xlu0 %4817
      %4819 = vrot.lane.b32.xlu0 %v4716, 96
      %v4820 = vpop.permute.xlu0 %4819
      %v4821 = vsel %vm446, %v4758, 0
      %v4823 = vsel %vm446, %v4760, 0
      %v4825 = vsel %vm446, %v4762, 0
      %v4827 = vsel %vm446, %v4764, 0
      %v4829 = vsel %vm446, %v4766, 0
      %v4831 = vsel %vm446, %v4768, 0
      %v4833 = vsel %vm446, %v4770, 0
      %v4835 = vsel %vm446, %v4772, 0
      %v4837 = vsel %vm446, %v4774, 0
      %v4839 = vsel %vm446, %v4776, 0
      %v4841 = vsel %vm446, %v4778, 0
      %v4843 = vsel %vm446, %v4780, 0
      %v4845 = vsel %vm446, %v4782, 0
      %v4847 = vsel %vm446, %v4784, 0
      %v4849 = vsel %vm446, %v4786, 0
      %v4851 = vsel %vm446, %v4788, 0
      %v4853 = vsel %vm446, %v4790, 0
      %v4855 = vsel %vm446, %v4792, 0
      %v4857 = vsel %vm446, %v4794, 0
      %v4859 = vsel %vm446, %v4796, 0
      %v4861 = vsel %vm446, %v4798, 0
      %v4863 = vsel %vm446, %v4800, 0
      %v4865 = vsel %vm446, %v4802, 0
      %v4867 = vsel %vm446, %v4804, 0
      %v4869 = vsel %vm446, %v4806, 0
      %v4871 = vsel %vm446, %v4808, 0
      %v4873 = vsel %vm446, %v4810, 0
      %v4875 = vsel %vm446, %v4812, 0
      %v4877 = vsel %vm446, %v4814, 0
      %v4879 = vsel %vm446, %v4816, 0
      %v4881 = vsel %vm446, %v4818, 0
      %v4883 = vsel %vm446, %v4820, 0
      %4885 = vmatpush.msra.mxu0 0.0
      %4886 = vmatpush.msra.mxu0 0.0
      %4887 = vmatpush.msra.mxu0 0.0
      %4888 = vmatpush.msra.mxu0 0.0
      %4889 = vmatpush.msra.mxu0 0.0
      %4890 = vmatpush.msra.mxu0 0.0
      %4891 = vmatpush.msra.mxu0 0.0
      %4892 = vmatpush.msra.mxu0 0.0
      %4893 = vmatpush.msra.mxu0 0.0
      %4894 = vmatpush.msra.mxu0 0.0
      %4895 = vmatpush.msra.mxu0 0.0
      %4896 = vmatpush.msra.mxu0 0.0
      %v4897 = vand.u32 %v4720, 4294901760
      %4898 = vmatpush.msra.mxu0 %v4897
      %v4899 = vand.u32 %v4719, 4294901760
      %4900 = vmatpush.msra.mxu0 %v4899
      %v4901 = vand.u32 %v4718, 4294901760
      %4902 = vmatpush.msra.mxu0 %v4901
      %v4903 = vand.u32 %v4717, 4294901760
      %4904 = vmatpush.msra.mxu0 %v4903
      %v4905 = vand.u32 %v4821, 4294901760
      %v4906 = vsub.f32 %v4821, %v4905
      %v4907 = vand.u32 %v4906, 4294901760
      %v4908 = vsub.f32 %v4906, %v4907
      %v4909 = vand.u32 %v4908, 4294901760
      %4910 = vmatmul.f32.gmra.mxu0 %v4909
      %v4911 = vpop.f32.mrf.mxu0
      %v4912 = vadd.f32 %v4723, %v4911
      %v4913 = vand.u32 %v4823, 4294901760
      %v4914 = vsub.f32 %v4823, %v4913
      %v4915 = vand.u32 %v4914, 4294901760
      %v4916 = vsub.f32 %v4914, %v4915
      %v4917 = vand.u32 %v4916, 4294901760
      %4918 = vmatmul.f32.gmra.mxu0 %v4917
      %v4919 = vpop.f32.mrf.mxu0
      %v4920 = vadd.f32 %v4723, %v4919
      %v4921 = vand.u32 %v4825, 4294901760
      %v4922 = vsub.f32 %v4825, %v4921
      %v4923 = vand.u32 %v4922, 4294901760
      %v4924 = vsub.f32 %v4922, %v4923
      %v4925 = vand.u32 %v4924, 4294901760
      %4926 = vmatmul.f32.gmra.mxu0 %v4925
      %v4927 = vpop.f32.mrf.mxu0
      %v4928 = vadd.f32 %v4723, %v4927
      %v4929 = vand.u32 %v4827, 4294901760
      %v4930 = vsub.f32 %v4827, %v4929
      %v4931 = vand.u32 %v4930, 4294901760
      %v4932 = vsub.f32 %v4930, %v4931
      %v4933 = vand.u32 %v4932, 4294901760
      %4934 = vmatmul.f32.gmra.mxu0 %v4933
      %v4935 = vpop.f32.mrf.mxu0
      %v4936 = vadd.f32 %v4723, %v4935
      %v4937 = vand.u32 %v4829, 4294901760
      %v4938 = vsub.f32 %v4829, %v4937
      %v4939 = vand.u32 %v4938, 4294901760
      %v4940 = vsub.f32 %v4938, %v4939
      %v4941 = vand.u32 %v4940, 4294901760
      %4942 = vmatmul.f32.gmra.mxu0 %v4941
      %v4943 = vpop.f32.mrf.mxu0
      %v4944 = vadd.f32 %v4723, %v4943
      %v4945 = vand.u32 %v4831, 4294901760
      %v4946 = vsub.f32 %v4831, %v4945
      %v4947 = vand.u32 %v4946, 4294901760
      %v4948 = vsub.f32 %v4946, %v4947
      %v4949 = vand.u32 %v4948, 4294901760
      %4950 = vmatmul.f32.gmra.mxu0 %v4949
      %v4951 = vpop.f32.mrf.mxu0
      %v4952 = vadd.f32 %v4723, %v4951
      %v4953 = vand.u32 %v4833, 4294901760
      %v4954 = vsub.f32 %v4833, %v4953
      %v4955 = vand.u32 %v4954, 4294901760
      %v4956 = vsub.f32 %v4954, %v4955
      %v4957 = vand.u32 %v4956, 4294901760
      %4958 = vmatmul.f32.gmra.mxu0 %v4957
      %v4959 = vpop.f32.mrf.mxu0
      %v4960 = vadd.f32 %v4723, %v4959
      %v4961 = vand.u32 %v4835, 4294901760
      %v4962 = vsub.f32 %v4835, %v4961
      %v4963 = vand.u32 %v4962, 4294901760
      %v4964 = vsub.f32 %v4962, %v4963
      %v4965 = vand.u32 %v4964, 4294901760
      %4966 = vmatmul.f32.gmra.mxu0 %v4965
      %v4967 = vpop.f32.mrf.mxu0
      %v4968 = vadd.f32 %v4723, %v4967
      %v4969 = vand.u32 %v4837, 4294901760
      %v4970 = vsub.f32 %v4837, %v4969
      %v4971 = vand.u32 %v4970, 4294901760
      %v4972 = vsub.f32 %v4970, %v4971
      %v4973 = vand.u32 %v4972, 4294901760
      %4974 = vmatmul.f32.gmra.mxu0 %v4973
      %v4975 = vpop.f32.mrf.mxu0
      %v4976 = vadd.f32 %v4723, %v4975
      %v4977 = vand.u32 %v4839, 4294901760
      %v4978 = vsub.f32 %v4839, %v4977
      %v4979 = vand.u32 %v4978, 4294901760
      %v4980 = vsub.f32 %v4978, %v4979
      %v4981 = vand.u32 %v4980, 4294901760
      %4982 = vmatmul.f32.gmra.mxu0 %v4981
      %v4983 = vpop.f32.mrf.mxu0
      %v4984 = vadd.f32 %v4723, %v4983
      %v4985 = vand.u32 %v4841, 4294901760
      %v4986 = vsub.f32 %v4841, %v4985
      %v4987 = vand.u32 %v4986, 4294901760
      %v4988 = vsub.f32 %v4986, %v4987
      %v4989 = vand.u32 %v4988, 4294901760
      %4990 = vmatmul.f32.gmra.mxu0 %v4989
      %v4991 = vpop.f32.mrf.mxu0
      %v4992 = vadd.f32 %v4723, %v4991
      %v4993 = vand.u32 %v4843, 4294901760
      %v4994 = vsub.f32 %v4843, %v4993
      %v4995 = vand.u32 %v4994, 4294901760
      %v4996 = vsub.f32 %v4994, %v4995
      %v4997 = vand.u32 %v4996, 4294901760
      %4998 = vmatmul.f32.gmra.mxu0 %v4997
      %v4999 = vpop.f32.mrf.mxu0
      %v5000 = vadd.f32 %v4723, %v4999
      %v5001 = vand.u32 %v4845, 4294901760
      %v5002 = vsub.f32 %v4845, %v5001
      %v5003 = vand.u32 %v5002, 4294901760
      %v5004 = vsub.f32 %v5002, %v5003
      %v5005 = vand.u32 %v5004, 4294901760
      %5006 = vmatmul.f32.gmra.mxu0 %v5005
      %v5007 = vpop.f32.mrf.mxu0
      %v5008 = vadd.f32 %v4723, %v5007
      %v5009 = vand.u32 %v4847, 4294901760
      %v5010 = vsub.f32 %v4847, %v5009
      %v5011 = vand.u32 %v5010, 4294901760
      %v5012 = vsub.f32 %v5010, %v5011
      %v5013 = vand.u32 %v5012, 4294901760
      %5014 = vmatmul.f32.gmra.mxu0 %v5013
      %v5015 = vpop.f32.mrf.mxu0
      %v5016 = vadd.f32 %v4723, %v5015
      %v5017 = vand.u32 %v4849, 4294901760
      %v5018 = vsub.f32 %v4849, %v5017
      %v5019 = vand.u32 %v5018, 4294901760
      %v5020 = vsub.f32 %v5018, %v5019
      %v5021 = vand.u32 %v5020, 4294901760
      %5022 = vmatmul.f32.gmra.mxu0 %v5021
      %v5023 = vpop.f32.mrf.mxu0
      %v5024 = vadd.f32 %v4723, %v5023
      %v5025 = vand.u32 %v4851, 4294901760
      %v5026 = vsub.f32 %v4851, %v5025
      %v5027 = vand.u32 %v5026, 4294901760
      %v5028 = vsub.f32 %v5026, %v5027
      %v5029 = vand.u32 %v5028, 4294901760
      %5030 = vmatmul.f32.gmra.mxu0 %v5029
      %v5031 = vpop.f32.mrf.mxu0
      %v5032 = vadd.f32 %v4723, %v5031
      %v5033 = vand.u32 %v4853, 4294901760
      %v5034 = vsub.f32 %v4853, %v5033
      %v5035 = vand.u32 %v5034, 4294901760
      %v5036 = vsub.f32 %v5034, %v5035
      %v5037 = vand.u32 %v5036, 4294901760
      %5038 = vmatmul.f32.gmra.mxu0 %v5037
      %v5039 = vpop.f32.mrf.mxu0
      %v5040 = vadd.f32 %v4723, %v5039
      %v5041 = vand.u32 %v4855, 4294901760
      %v5042 = vsub.f32 %v4855, %v5041
      %v5043 = vand.u32 %v5042, 4294901760
      %v5044 = vsub.f32 %v5042, %v5043
      %v5045 = vand.u32 %v5044, 4294901760
      %5046 = vmatmul.f32.gmra.mxu0 %v5045
      %v5047 = vpop.f32.mrf.mxu0
      %v5048 = vadd.f32 %v4723, %v5047
      %v5049 = vand.u32 %v4857, 4294901760
      %v5050 = vsub.f32 %v4857, %v5049
      %v5051 = vand.u32 %v5050, 4294901760
      %v5052 = vsub.f32 %v5050, %v5051
      %v5053 = vand.u32 %v5052, 4294901760
      %5054 = vmatmul.f32.gmra.mxu0 %v5053
      %v5055 = vpop.f32.mrf.mxu0
      %v5056 = vadd.f32 %v4723, %v5055
      %v5057 = vand.u32 %v4859, 4294901760
      %v5058 = vsub.f32 %v4859, %v5057
      %v5059 = vand.u32 %v5058, 4294901760
      %v5060 = vsub.f32 %v5058, %v5059
      %v5061 = vand.u32 %v5060, 4294901760
      %5062 = vmatmul.f32.gmra.mxu0 %v5061
      %v5063 = vpop.f32.mrf.mxu0
      %v5064 = vadd.f32 %v4723, %v5063
      %v5065 = vand.u32 %v4861, 4294901760
      %v5066 = vsub.f32 %v4861, %v5065
      %v5067 = vand.u32 %v5066, 4294901760
      %v5068 = vsub.f32 %v5066, %v5067
      %v5069 = vand.u32 %v5068, 4294901760
      %5070 = vmatmul.f32.gmra.mxu0 %v5069
      %v5071 = vpop.f32.mrf.mxu0
      %v5072 = vadd.f32 %v4723, %v5071
      %v5073 = vand.u32 %v4863, 4294901760
      %v5074 = vsub.f32 %v4863, %v5073
      %v5075 = vand.u32 %v5074, 4294901760
      %v5076 = vsub.f32 %v5074, %v5075
      %v5077 = vand.u32 %v5076, 4294901760
      %5078 = vmatmul.f32.gmra.mxu0 %v5077
      %v5079 = vpop.f32.mrf.mxu0
      %v5080 = vadd.f32 %v4723, %v5079
      %v5081 = vand.u32 %v4865, 4294901760
      %v5082 = vsub.f32 %v4865, %v5081
      %v5083 = vand.u32 %v5082, 4294901760
      %v5084 = vsub.f32 %v5082, %v5083
      %v5085 = vand.u32 %v5084, 4294901760
      %5086 = vmatmul.f32.gmra.mxu0 %v5085
      %v5087 = vpop.f32.mrf.mxu0
      %v5088 = vadd.f32 %v4723, %v5087
      %v5089 = vand.u32 %v4867, 4294901760
      %v5090 = vsub.f32 %v4867, %v5089
      %v5091 = vand.u32 %v5090, 4294901760
      %v5092 = vsub.f32 %v5090, %v5091
      %v5093 = vand.u32 %v5092, 4294901760
      %5094 = vmatmul.f32.gmra.mxu0 %v5093
      %v5095 = vpop.f32.mrf.mxu0
      %v5096 = vadd.f32 %v4723, %v5095
      %v5097 = vand.u32 %v4869, 4294901760
      %v5098 = vsub.f32 %v4869, %v5097
      %v5099 = vand.u32 %v5098, 4294901760
      %v5100 = vsub.f32 %v5098, %v5099
      %v5101 = vand.u32 %v5100, 4294901760
      %5102 = vmatmul.f32.gmra.mxu0 %v5101
      %v5103 = vpop.f32.mrf.mxu0
      %v5104 = vadd.f32 %v4723, %v5103
      %v5105 = vand.u32 %v4871, 4294901760
      %v5106 = vsub.f32 %v4871, %v5105
      %v5107 = vand.u32 %v5106, 4294901760
      %v5108 = vsub.f32 %v5106, %v5107
      %v5109 = vand.u32 %v5108, 4294901760
      %5110 = vmatmul.f32.gmra.mxu0 %v5109
      %v5111 = vpop.f32.mrf.mxu0
      %v5112 = vadd.f32 %v4723, %v5111
      %v5113 = vand.u32 %v4873, 4294901760
      %v5114 = vsub.f32 %v4873, %v5113
      %v5115 = vand.u32 %v5114, 4294901760
      %v5116 = vsub.f32 %v5114, %v5115
      %v5117 = vand.u32 %v5116, 4294901760
      %5118 = vmatmul.f32.gmra.mxu0 %v5117
      %v5119 = vpop.f32.mrf.mxu0
      %v5120 = vadd.f32 %v4723, %v5119
      %v5121 = vand.u32 %v4875, 4294901760
      %v5122 = vsub.f32 %v4875, %v5121
      %v5123 = vand.u32 %v5122, 4294901760
      %v5124 = vsub.f32 %v5122, %v5123
      %v5125 = vand.u32 %v5124, 4294901760
      %5126 = vmatmul.f32.gmra.mxu0 %v5125
      %v5127 = vpop.f32.mrf.mxu0
      %v5128 = vadd.f32 %v4723, %v5127
      %v5129 = vand.u32 %v4877, 4294901760
      %v5130 = vsub.f32 %v4877, %v5129
      %v5131 = vand.u32 %v5130, 4294901760
      %v5132 = vsub.f32 %v5130, %v5131
      %v5133 = vand.u32 %v5132, 4294901760
      %5134 = vmatmul.f32.gmra.mxu0 %v5133
      %v5135 = vpop.f32.mrf.mxu0
      %v5136 = vadd.f32 %v4723, %v5135
      %v5137 = vand.u32 %v4879, 4294901760
      %v5138 = vsub.f32 %v4879, %v5137
      %v5139 = vand.u32 %v5138, 4294901760
      %v5140 = vsub.f32 %v5138, %v5139
      %v5141 = vand.u32 %v5140, 4294901760
      %5142 = vmatmul.f32.gmra.mxu0 %v5141
      %v5143 = vpop.f32.mrf.mxu0
      %v5144 = vadd.f32 %v4723, %v5143
      %v5145 = vand.u32 %v4881, 4294901760
      %v5146 = vsub.f32 %v4881, %v5145
      %v5147 = vand.u32 %v5146, 4294901760
      %v5148 = vsub.f32 %v5146, %v5147
      %v5149 = vand.u32 %v5148, 4294901760
      %5150 = vmatmul.f32.gmra.mxu0 %v5149
      %v5151 = vpop.f32.mrf.mxu0
      %v5152 = vadd.f32 %v4723, %v5151
      %v5153 = vand.u32 %v4883, 4294901760
      %v5154 = vsub.f32 %v4883, %v5153
      %v5155 = vand.u32 %v5154, 4294901760
      %v5156 = vsub.f32 %v5154, %v5155
      %v5157 = vand.u32 %v5156, 4294901760
      %5158 = vmatmul.f32.gmra.mxu0 %v5157
      %v5159 = vpop.f32.mrf.mxu0
      %v5160 = vadd.f32 %v4723, %v5159
      %5161 = vdwg.mxu0
      %5162 = vmatpush.msra.mxu0 0.0
      %5163 = vmatpush.msra.mxu0 0.0
      %5164 = vmatpush.msra.mxu0 0.0
      %5165 = vmatpush.msra.mxu0 0.0
      %5166 = vmatpush.msra.mxu0 0.0
      %5167 = vmatpush.msra.mxu0 0.0
      %5168 = vmatpush.msra.mxu0 0.0
      %5169 = vmatpush.msra.mxu0 0.0
      %5170 = vmatpush.msra.mxu0 0.0
      %5171 = vmatpush.msra.mxu0 0.0
      %5172 = vmatpush.msra.mxu0 0.0
      %5173 = vmatpush.msra.mxu0 0.0
      %v5174 = vand.u32 %v4720, 4294901760
      %v5175 = vsub.f32 %v4720, %v5174
      %v5176 = vand.u32 %v5175, 4294901760
      %v5177 = vsub.f32 %v5175, %v5176
      %v5178 = vand.u32 %v5177, 4294901760
      %5179 = vmatpush.msra.mxu0 %v5178
      %v5180 = vand.u32 %v4719, 4294901760
      %v5181 = vsub.f32 %v4719, %v5180
      %v5182 = vand.u32 %v5181, 4294901760
      %v5183 = vsub.f32 %v5181, %v5182
      %v5184 = vand.u32 %v5183, 4294901760
      %5185 = vmatpush.msra.mxu0 %v5184
      %v5186 = vand.u32 %v4718, 4294901760
      %v5187 = vsub.f32 %v4718, %v5186
      %v5188 = vand.u32 %v5187, 4294901760
      %v5189 = vsub.f32 %v5187, %v5188
      %v5190 = vand.u32 %v5189, 4294901760
      %5191 = vmatpush.msra.mxu0 %v5190
      %v5192 = vand.u32 %v4717, 4294901760
      %v5193 = vsub.f32 %v4717, %v5192
      %v5194 = vand.u32 %v5193, 4294901760
      %v5195 = vsub.f32 %v5193, %v5194
      %v5196 = vand.u32 %v5195, 4294901760
      %5197 = vmatpush.msra.mxu0 %v5196
      %v5198 = vand.u32 %v4821, 4294901760
      %5199 = vmatmul.f32.gmra.mxu0 %v5198
      %v5200 = vpop.f32.mrf.mxu0
      %v5201 = vadd.f32 %v4912, %v5200
      %v5202 = vand.u32 %v4823, 4294901760
      %5203 = vmatmul.f32.gmra.mxu0 %v5202
      %v5204 = vpop.f32.mrf.mxu0
      %v5205 = vadd.f32 %v4920, %v5204
      %v5206 = vand.u32 %v4825, 4294901760
      %5207 = vmatmul.f32.gmra.mxu0 %v5206
      %v5208 = vpop.f32.mrf.mxu0
      %v5209 = vadd.f32 %v4928, %v5208
      %v5210 = vand.u32 %v4827, 4294901760
      %5211 = vmatmul.f32.gmra.mxu0 %v5210
      %v5212 = vpop.f32.mrf.mxu0
      %v5213 = vadd.f32 %v4936, %v5212
      %v5214 = vand.u32 %v4829, 4294901760
      %5215 = vmatmul.f32.gmra.mxu0 %v5214
      %v5216 = vpop.f32.mrf.mxu0
      %v5217 = vadd.f32 %v4944, %v5216
      %v5218 = vand.u32 %v4831, 4294901760
      %5219 = vmatmul.f32.gmra.mxu0 %v5218
      %v5220 = vpop.f32.mrf.mxu0
      %v5221 = vadd.f32 %v4952, %v5220
      %v5222 = vand.u32 %v4833, 4294901760
      %5223 = vmatmul.f32.gmra.mxu0 %v5222
      %v5224 = vpop.f32.mrf.mxu0
      %v5225 = vadd.f32 %v4960, %v5224
      %v5226 = vand.u32 %v4835, 4294901760
      %5227 = vmatmul.f32.gmra.mxu0 %v5226
      %v5228 = vpop.f32.mrf.mxu0
      %v5229 = vadd.f32 %v4968, %v5228
      %v5230 = vand.u32 %v4837, 4294901760
      %5231 = vmatmul.f32.gmra.mxu0 %v5230
      %v5232 = vpop.f32.mrf.mxu0
      %v5233 = vadd.f32 %v4976, %v5232
      %v5234 = vand.u32 %v4839, 4294901760
      %5235 = vmatmul.f32.gmra.mxu0 %v5234
      %v5236 = vpop.f32.mrf.mxu0
      %v5237 = vadd.f32 %v4984, %v5236
      %v5238 = vand.u32 %v4841, 4294901760
      %5239 = vmatmul.f32.gmra.mxu0 %v5238
      %v5240 = vpop.f32.mrf.mxu0
      %v5241 = vadd.f32 %v4992, %v5240
      %v5242 = vand.u32 %v4843, 4294901760
      %5243 = vmatmul.f32.gmra.mxu0 %v5242
      %v5244 = vpop.f32.mrf.mxu0
      %v5245 = vadd.f32 %v5000, %v5244
      %v5246 = vand.u32 %v4845, 4294901760
      %5247 = vmatmul.f32.gmra.mxu0 %v5246
      %v5248 = vpop.f32.mrf.mxu0
      %v5249 = vadd.f32 %v5008, %v5248
      %v5250 = vand.u32 %v4847, 4294901760
      %5251 = vmatmul.f32.gmra.mxu0 %v5250
      %v5252 = vpop.f32.mrf.mxu0
      %v5253 = vadd.f32 %v5016, %v5252
      %v5254 = vand.u32 %v4849, 4294901760
      %5255 = vmatmul.f32.gmra.mxu0 %v5254
      %v5256 = vpop.f32.mrf.mxu0
      %v5257 = vadd.f32 %v5024, %v5256
      %v5258 = vand.u32 %v4851, 4294901760
      %5259 = vmatmul.f32.gmra.mxu0 %v5258
      %v5260 = vpop.f32.mrf.mxu0
      %v5261 = vadd.f32 %v5032, %v5260
      %v5262 = vand.u32 %v4853, 4294901760
      %5263 = vmatmul.f32.gmra.mxu0 %v5262
      %v5264 = vpop.f32.mrf.mxu0
      %v5265 = vadd.f32 %v5040, %v5264
      %v5266 = vand.u32 %v4855, 4294901760
      %5267 = vmatmul.f32.gmra.mxu0 %v5266
      %v5268 = vpop.f32.mrf.mxu0
      %v5269 = vadd.f32 %v5048, %v5268
      %v5270 = vand.u32 %v4857, 4294901760
      %5271 = vmatmul.f32.gmra.mxu0 %v5270
      %v5272 = vpop.f32.mrf.mxu0
      %v5273 = vadd.f32 %v5056, %v5272
      %v5274 = vand.u32 %v4859, 4294901760
      %5275 = vmatmul.f32.gmra.mxu0 %v5274
      %v5276 = vpop.f32.mrf.mxu0
      %v5277 = vadd.f32 %v5064, %v5276
      %v5278 = vand.u32 %v4861, 4294901760
      %5279 = vmatmul.f32.gmra.mxu0 %v5278
      %v5280 = vpop.f32.mrf.mxu0
      %v5281 = vadd.f32 %v5072, %v5280
      %v5282 = vand.u32 %v4863, 4294901760
      %5283 = vmatmul.f32.gmra.mxu0 %v5282
      %v5284 = vpop.f32.mrf.mxu0
      %v5285 = vadd.f32 %v5080, %v5284
      %v5286 = vand.u32 %v4865, 4294901760
      %5287 = vmatmul.f32.gmra.mxu0 %v5286
      %v5288 = vpop.f32.mrf.mxu0
      %v5289 = vadd.f32 %v5088, %v5288
      %v5290 = vand.u32 %v4867, 4294901760
      %5291 = vmatmul.f32.gmra.mxu0 %v5290
      %v5292 = vpop.f32.mrf.mxu0
      %v5293 = vadd.f32 %v5096, %v5292
      %v5294 = vand.u32 %v4869, 4294901760
      %5295 = vmatmul.f32.gmra.mxu0 %v5294
      %v5296 = vpop.f32.mrf.mxu0
      %v5297 = vadd.f32 %v5104, %v5296
      %v5298 = vand.u32 %v4871, 4294901760
      %5299 = vmatmul.f32.gmra.mxu0 %v5298
      %v5300 = vpop.f32.mrf.mxu0
      %v5301 = vadd.f32 %v5112, %v5300
      %v5302 = vand.u32 %v4873, 4294901760
      %5303 = vmatmul.f32.gmra.mxu0 %v5302
      %v5304 = vpop.f32.mrf.mxu0
      %v5305 = vadd.f32 %v5120, %v5304
      %v5306 = vand.u32 %v4875, 4294901760
      %5307 = vmatmul.f32.gmra.mxu0 %v5306
      %v5308 = vpop.f32.mrf.mxu0
      %v5309 = vadd.f32 %v5128, %v5308
      %v5310 = vand.u32 %v4877, 4294901760
      %5311 = vmatmul.f32.gmra.mxu0 %v5310
      %v5312 = vpop.f32.mrf.mxu0
      %v5313 = vadd.f32 %v5136, %v5312
      %v5314 = vand.u32 %v4879, 4294901760
      %5315 = vmatmul.f32.gmra.mxu0 %v5314
      %v5316 = vpop.f32.mrf.mxu0
      %v5317 = vadd.f32 %v5144, %v5316
      %v5318 = vand.u32 %v4881, 4294901760
      %5319 = vmatmul.f32.gmra.mxu0 %v5318
      %v5320 = vpop.f32.mrf.mxu0
      %v5321 = vadd.f32 %v5152, %v5320
      %v5322 = vand.u32 %v4883, 4294901760
      %5323 = vmatmul.f32.gmra.mxu0 %v5322
      %v5324 = vpop.f32.mrf.mxu0
      %v5325 = vadd.f32 %v5160, %v5324
      %5326 = vdwg.mxu0
      %5327 = vmatpush.msra.mxu0 0.0
      %5328 = vmatpush.msra.mxu0 0.0
      %5329 = vmatpush.msra.mxu0 0.0
      %5330 = vmatpush.msra.mxu0 0.0
      %5331 = vmatpush.msra.mxu0 0.0
      %5332 = vmatpush.msra.mxu0 0.0
      %5333 = vmatpush.msra.mxu0 0.0
      %5334 = vmatpush.msra.mxu0 0.0
      %5335 = vmatpush.msra.mxu0 0.0
      %5336 = vmatpush.msra.mxu0 0.0
      %5337 = vmatpush.msra.mxu0 0.0
      %5338 = vmatpush.msra.mxu0 0.0
      %v5339 = vand.u32 %v4720, 4294901760
      %v5340 = vsub.f32 %v4720, %v5339
      %5341 = vmatpush.msra.mxu0 %v5340
      %v5342 = vand.u32 %v4719, 4294901760
      %v5343 = vsub.f32 %v4719, %v5342
      %5344 = vmatpush.msra.mxu0 %v5343
      %v5345 = vand.u32 %v4718, 4294901760
      %v5346 = vsub.f32 %v4718, %v5345
      %5347 = vmatpush.msra.mxu0 %v5346
      %v5348 = vand.u32 %v4717, 4294901760
      %v5349 = vsub.f32 %v4717, %v5348
      %5350 = vmatpush.msra.mxu0 %v5349
      %v5351 = vand.u32 %v4821, 4294901760
      %v5352 = vsub.f32 %v4821, %v5351
      %5353 = vmatmul.f32.gmra.mxu0 %v5352
      %v5354 = vpop.f32.mrf.mxu0
      %v5355 = vadd.f32 %v5201, %v5354
      %v5356 = vand.u32 %v4823, 4294901760
      %v5357 = vsub.f32 %v4823, %v5356
      %5358 = vmatmul.f32.gmra.mxu0 %v5357
      %v5359 = vpop.f32.mrf.mxu0
      %v5360 = vadd.f32 %v5205, %v5359
      %v5361 = vand.u32 %v4825, 4294901760
      %v5362 = vsub.f32 %v4825, %v5361
      %5363 = vmatmul.f32.gmra.mxu0 %v5362
      %v5364 = vpop.f32.mrf.mxu0
      %v5365 = vadd.f32 %v5209, %v5364
      %v5366 = vand.u32 %v4827, 4294901760
      %v5367 = vsub.f32 %v4827, %v5366
      %5368 = vmatmul.f32.gmra.mxu0 %v5367
      %v5369 = vpop.f32.mrf.mxu0
      %v5370 = vadd.f32 %v5213, %v5369
      %v5371 = vand.u32 %v4829, 4294901760
      %v5372 = vsub.f32 %v4829, %v5371
      %5373 = vmatmul.f32.gmra.mxu0 %v5372
      %v5374 = vpop.f32.mrf.mxu0
      %v5375 = vadd.f32 %v5217, %v5374
      %v5376 = vand.u32 %v4831, 4294901760
      %v5377 = vsub.f32 %v4831, %v5376
      %5378 = vmatmul.f32.gmra.mxu0 %v5377
      %v5379 = vpop.f32.mrf.mxu0
      %v5380 = vadd.f32 %v5221, %v5379
      %v5381 = vand.u32 %v4833, 4294901760
      %v5382 = vsub.f32 %v4833, %v5381
      %5383 = vmatmul.f32.gmra.mxu0 %v5382
      %v5384 = vpop.f32.mrf.mxu0
      %v5385 = vadd.f32 %v5225, %v5384
      %v5386 = vand.u32 %v4835, 4294901760
      %v5387 = vsub.f32 %v4835, %v5386
      %5388 = vmatmul.f32.gmra.mxu0 %v5387
      %v5389 = vpop.f32.mrf.mxu0
      %v5390 = vadd.f32 %v5229, %v5389
      %v5391 = vand.u32 %v4837, 4294901760
      %v5392 = vsub.f32 %v4837, %v5391
      %5393 = vmatmul.f32.gmra.mxu0 %v5392
      %v5394 = vpop.f32.mrf.mxu0
      %v5395 = vadd.f32 %v5233, %v5394
      %v5396 = vand.u32 %v4839, 4294901760
      %v5397 = vsub.f32 %v4839, %v5396
      %5398 = vmatmul.f32.gmra.mxu0 %v5397
      %v5399 = vpop.f32.mrf.mxu0
      %v5400 = vadd.f32 %v5237, %v5399
      %v5401 = vand.u32 %v4841, 4294901760
      %v5402 = vsub.f32 %v4841, %v5401
      %5403 = vmatmul.f32.gmra.mxu0 %v5402
      %v5404 = vpop.f32.mrf.mxu0
      %v5405 = vadd.f32 %v5241, %v5404
      %v5406 = vand.u32 %v4843, 4294901760
      %v5407 = vsub.f32 %v4843, %v5406
      %5408 = vmatmul.f32.gmra.mxu0 %v5407
      %v5409 = vpop.f32.mrf.mxu0
      %v5410 = vadd.f32 %v5245, %v5409
      %v5411 = vand.u32 %v4845, 4294901760
      %v5412 = vsub.f32 %v4845, %v5411
      %5413 = vmatmul.f32.gmra.mxu0 %v5412
      %v5414 = vpop.f32.mrf.mxu0
      %v5415 = vadd.f32 %v5249, %v5414
      %v5416 = vand.u32 %v4847, 4294901760
      %v5417 = vsub.f32 %v4847, %v5416
      %5418 = vmatmul.f32.gmra.mxu0 %v5417
      %v5419 = vpop.f32.mrf.mxu0
      %v5420 = vadd.f32 %v5253, %v5419
      %v5421 = vand.u32 %v4849, 4294901760
      %v5422 = vsub.f32 %v4849, %v5421
      %5423 = vmatmul.f32.gmra.mxu0 %v5422
      %v5424 = vpop.f32.mrf.mxu0
      %v5425 = vadd.f32 %v5257, %v5424
      %v5426 = vand.u32 %v4851, 4294901760
      %v5427 = vsub.f32 %v4851, %v5426
      %5428 = vmatmul.f32.gmra.mxu0 %v5427
      %v5429 = vpop.f32.mrf.mxu0
      %v5430 = vadd.f32 %v5261, %v5429
      %v5431 = vand.u32 %v4853, 4294901760
      %v5432 = vsub.f32 %v4853, %v5431
      %5433 = vmatmul.f32.gmra.mxu0 %v5432
      %v5434 = vpop.f32.mrf.mxu0
      %v5435 = vadd.f32 %v5265, %v5434
      %v5436 = vand.u32 %v4855, 4294901760
      %v5437 = vsub.f32 %v4855, %v5436
      %5438 = vmatmul.f32.gmra.mxu0 %v5437
      %v5439 = vpop.f32.mrf.mxu0
      %v5440 = vadd.f32 %v5269, %v5439
      %v5441 = vand.u32 %v4857, 4294901760
      %v5442 = vsub.f32 %v4857, %v5441
      %5443 = vmatmul.f32.gmra.mxu0 %v5442
      %v5444 = vpop.f32.mrf.mxu0
      %v5445 = vadd.f32 %v5273, %v5444
      %v5446 = vand.u32 %v4859, 4294901760
      %v5447 = vsub.f32 %v4859, %v5446
      %5448 = vmatmul.f32.gmra.mxu0 %v5447
      %v5449 = vpop.f32.mrf.mxu0
      %v5450 = vadd.f32 %v5277, %v5449
      %v5451 = vand.u32 %v4861, 4294901760
      %v5452 = vsub.f32 %v4861, %v5451
      %5453 = vmatmul.f32.gmra.mxu0 %v5452
      %v5454 = vpop.f32.mrf.mxu0
      %v5455 = vadd.f32 %v5281, %v5454
      %v5456 = vand.u32 %v4863, 4294901760
      %v5457 = vsub.f32 %v4863, %v5456
      %5458 = vmatmul.f32.gmra.mxu0 %v5457
      %v5459 = vpop.f32.mrf.mxu0
      %v5460 = vadd.f32 %v5285, %v5459
      %v5461 = vand.u32 %v4865, 4294901760
      %v5462 = vsub.f32 %v4865, %v5461
      %5463 = vmatmul.f32.gmra.mxu0 %v5462
      %v5464 = vpop.f32.mrf.mxu0
      %v5465 = vadd.f32 %v5289, %v5464
      %v5466 = vand.u32 %v4867, 4294901760
      %v5467 = vsub.f32 %v4867, %v5466
      %5468 = vmatmul.f32.gmra.mxu0 %v5467
      %v5469 = vpop.f32.mrf.mxu0
      %v5470 = vadd.f32 %v5293, %v5469
      %v5471 = vand.u32 %v4869, 4294901760
      %v5472 = vsub.f32 %v4869, %v5471
      %5473 = vmatmul.f32.gmra.mxu0 %v5472
      %v5474 = vpop.f32.mrf.mxu0
      %v5475 = vadd.f32 %v5297, %v5474
      %v5476 = vand.u32 %v4871, 4294901760
      %v5477 = vsub.f32 %v4871, %v5476
      %5478 = vmatmul.f32.gmra.mxu0 %v5477
      %v5479 = vpop.f32.mrf.mxu0
      %v5480 = vadd.f32 %v5301, %v5479
      %v5481 = vand.u32 %v4873, 4294901760
      %v5482 = vsub.f32 %v4873, %v5481
      %5483 = vmatmul.f32.gmra.mxu0 %v5482
      %v5484 = vpop.f32.mrf.mxu0
      %v5485 = vadd.f32 %v5305, %v5484
      %v5486 = vand.u32 %v4875, 4294901760
      %v5487 = vsub.f32 %v4875, %v5486
      %5488 = vmatmul.f32.gmra.mxu0 %v5487
      %v5489 = vpop.f32.mrf.mxu0
      %v5490 = vadd.f32 %v5309, %v5489
      %v5491 = vand.u32 %v4877, 4294901760
      %v5492 = vsub.f32 %v4877, %v5491
      %5493 = vmatmul.f32.gmra.mxu0 %v5492
      %v5494 = vpop.f32.mrf.mxu0
      %v5495 = vadd.f32 %v5313, %v5494
      %v5496 = vand.u32 %v4879, 4294901760
      %v5497 = vsub.f32 %v4879, %v5496
      %5498 = vmatmul.f32.gmra.mxu0 %v5497
      %v5499 = vpop.f32.mrf.mxu0
      %v5500 = vadd.f32 %v5317, %v5499
      %v5501 = vand.u32 %v4881, 4294901760
      %v5502 = vsub.f32 %v4881, %v5501
      %5503 = vmatmul.f32.gmra.mxu0 %v5502
      %v5504 = vpop.f32.mrf.mxu0
      %v5505 = vadd.f32 %v5321, %v5504
      %v5506 = vand.u32 %v4883, 4294901760
      %v5507 = vsub.f32 %v4883, %v5506
      %5508 = vmatmul.f32.gmra.mxu0 %v5507
      %v5509 = vpop.f32.mrf.mxu0
      %v5510 = vadd.f32 %v5325, %v5509
      %5511 = vdwg.mxu0
      %5512 = vmatpush.msra.mxu0 0.0
      %5513 = vmatpush.msra.mxu0 0.0
      %5514 = vmatpush.msra.mxu0 0.0
      %5515 = vmatpush.msra.mxu0 0.0
      %5516 = vmatpush.msra.mxu0 0.0
      %5517 = vmatpush.msra.mxu0 0.0
      %5518 = vmatpush.msra.mxu0 0.0
      %5519 = vmatpush.msra.mxu0 0.0
      %5520 = vmatpush.msra.mxu0 0.0
      %5521 = vmatpush.msra.mxu0 0.0
      %5522 = vmatpush.msra.mxu0 0.0
      %5523 = vmatpush.msra.mxu0 0.0
      %v5524 = vand.u32 %v4720, 4294901760
      %5525 = vmatpush.msra.mxu0 %v5524
      %v5526 = vand.u32 %v4719, 4294901760
      %5527 = vmatpush.msra.mxu0 %v5526
      %v5528 = vand.u32 %v4718, 4294901760
      %5529 = vmatpush.msra.mxu0 %v5528
      %v5530 = vand.u32 %v4717, 4294901760
      %5531 = vmatpush.msra.mxu0 %v5530
      %v5532 = vand.u32 %v4821, 4294901760
      %v5533 = vsub.f32 %v4821, %v5532
      %v5534 = vand.u32 %v5533, 4294901760
      %5535 = vmatmul.f32.gmra.mxu0 %v5534
      %v5536 = vpop.f32.mrf.mxu0
      %v5537 = vadd.f32 %v5355, %v5536
      %v5538 = vand.u32 %v4823, 4294901760
      %v5539 = vsub.f32 %v4823, %v5538
      %v5540 = vand.u32 %v5539, 4294901760
      %5541 = vmatmul.f32.gmra.mxu0 %v5540
      %v5542 = vpop.f32.mrf.mxu0
      %v5543 = vadd.f32 %v5360, %v5542
      %v5544 = vand.u32 %v4825, 4294901760
      %v5545 = vsub.f32 %v4825, %v5544
      %v5546 = vand.u32 %v5545, 4294901760
      %5547 = vmatmul.f32.gmra.mxu0 %v5546
      %v5548 = vpop.f32.mrf.mxu0
      %v5549 = vadd.f32 %v5365, %v5548
      %v5550 = vand.u32 %v4827, 4294901760
      %v5551 = vsub.f32 %v4827, %v5550
      %v5552 = vand.u32 %v5551, 4294901760
      %5553 = vmatmul.f32.gmra.mxu0 %v5552
      %v5554 = vpop.f32.mrf.mxu0
      %v5555 = vadd.f32 %v5370, %v5554
      %v5556 = vand.u32 %v4829, 4294901760
      %v5557 = vsub.f32 %v4829, %v5556
      %v5558 = vand.u32 %v5557, 4294901760
      %5559 = vmatmul.f32.gmra.mxu0 %v5558
      %v5560 = vpop.f32.mrf.mxu0
      %v5561 = vadd.f32 %v5375, %v5560
      %v5562 = vand.u32 %v4831, 4294901760
      %v5563 = vsub.f32 %v4831, %v5562
      %v5564 = vand.u32 %v5563, 4294901760
      %5565 = vmatmul.f32.gmra.mxu0 %v5564
      %v5566 = vpop.f32.mrf.mxu0
      %v5567 = vadd.f32 %v5380, %v5566
      %v5568 = vand.u32 %v4833, 4294901760
      %v5569 = vsub.f32 %v4833, %v5568
      %v5570 = vand.u32 %v5569, 4294901760
      %5571 = vmatmul.f32.gmra.mxu0 %v5570
      %v5572 = vpop.f32.mrf.mxu0
      %v5573 = vadd.f32 %v5385, %v5572
      %v5574 = vand.u32 %v4835, 4294901760
      %v5575 = vsub.f32 %v4835, %v5574
      %v5576 = vand.u32 %v5575, 4294901760
      %5577 = vmatmul.f32.gmra.mxu0 %v5576
      %v5578 = vpop.f32.mrf.mxu0
      %v5579 = vadd.f32 %v5390, %v5578
      %v5580 = vand.u32 %v4837, 4294901760
      %v5581 = vsub.f32 %v4837, %v5580
      %v5582 = vand.u32 %v5581, 4294901760
      %5583 = vmatmul.f32.gmra.mxu0 %v5582
      %v5584 = vpop.f32.mrf.mxu0
      %v5585 = vadd.f32 %v5395, %v5584
      %v5586 = vand.u32 %v4839, 4294901760
      %v5587 = vsub.f32 %v4839, %v5586
      %v5588 = vand.u32 %v5587, 4294901760
      %5589 = vmatmul.f32.gmra.mxu0 %v5588
      %v5590 = vpop.f32.mrf.mxu0
      %v5591 = vadd.f32 %v5400, %v5590
      %v5592 = vand.u32 %v4841, 4294901760
      %v5593 = vsub.f32 %v4841, %v5592
      %v5594 = vand.u32 %v5593, 4294901760
      %5595 = vmatmul.f32.gmra.mxu0 %v5594
      %v5596 = vpop.f32.mrf.mxu0
      %v5597 = vadd.f32 %v5405, %v5596
      %v5598 = vand.u32 %v4843, 4294901760
      %v5599 = vsub.f32 %v4843, %v5598
      %v5600 = vand.u32 %v5599, 4294901760
      %5601 = vmatmul.f32.gmra.mxu0 %v5600
      %v5602 = vpop.f32.mrf.mxu0
      %v5603 = vadd.f32 %v5410, %v5602
      %v5604 = vand.u32 %v4845, 4294901760
      %v5605 = vsub.f32 %v4845, %v5604
      %v5606 = vand.u32 %v5605, 4294901760
      %5607 = vmatmul.f32.gmra.mxu0 %v5606
      %v5608 = vpop.f32.mrf.mxu0
      %v5609 = vadd.f32 %v5415, %v5608
      %v5610 = vand.u32 %v4847, 4294901760
      %v5611 = vsub.f32 %v4847, %v5610
      %v5612 = vand.u32 %v5611, 4294901760
      %5613 = vmatmul.f32.gmra.mxu0 %v5612
      %v5614 = vpop.f32.mrf.mxu0
      %v5615 = vadd.f32 %v5420, %v5614
      %v5616 = vand.u32 %v4849, 4294901760
      %v5617 = vsub.f32 %v4849, %v5616
      %v5618 = vand.u32 %v5617, 4294901760
      %5619 = vmatmul.f32.gmra.mxu0 %v5618
      %v5620 = vpop.f32.mrf.mxu0
      %v5621 = vadd.f32 %v5425, %v5620
      %v5622 = vand.u32 %v4851, 4294901760
      %v5623 = vsub.f32 %v4851, %v5622
      %v5624 = vand.u32 %v5623, 4294901760
      %5625 = vmatmul.f32.gmra.mxu0 %v5624
      %v5626 = vpop.f32.mrf.mxu0
      %v5627 = vadd.f32 %v5430, %v5626
      %v5628 = vand.u32 %v4853, 4294901760
      %v5629 = vsub.f32 %v4853, %v5628
      %v5630 = vand.u32 %v5629, 4294901760
      %5631 = vmatmul.f32.gmra.mxu0 %v5630
      %v5632 = vpop.f32.mrf.mxu0
      %v5633 = vadd.f32 %v5435, %v5632
      %v5634 = vand.u32 %v4855, 4294901760
      %v5635 = vsub.f32 %v4855, %v5634
      %v5636 = vand.u32 %v5635, 4294901760
      %5637 = vmatmul.f32.gmra.mxu0 %v5636
      %v5638 = vpop.f32.mrf.mxu0
      %v5639 = vadd.f32 %v5440, %v5638
      %v5640 = vand.u32 %v4857, 4294901760
      %v5641 = vsub.f32 %v4857, %v5640
      %v5642 = vand.u32 %v5641, 4294901760
      %5643 = vmatmul.f32.gmra.mxu0 %v5642
      %v5644 = vpop.f32.mrf.mxu0
      %v5645 = vadd.f32 %v5445, %v5644
      %v5646 = vand.u32 %v4859, 4294901760
      %v5647 = vsub.f32 %v4859, %v5646
      %v5648 = vand.u32 %v5647, 4294901760
      %5649 = vmatmul.f32.gmra.mxu0 %v5648
      %v5650 = vpop.f32.mrf.mxu0
      %v5651 = vadd.f32 %v5450, %v5650
      %v5652 = vand.u32 %v4861, 4294901760
      %v5653 = vsub.f32 %v4861, %v5652
      %v5654 = vand.u32 %v5653, 4294901760
      %5655 = vmatmul.f32.gmra.mxu0 %v5654
      %v5656 = vpop.f32.mrf.mxu0
      %v5657 = vadd.f32 %v5455, %v5656
      %v5658 = vand.u32 %v4863, 4294901760
      %v5659 = vsub.f32 %v4863, %v5658
      %v5660 = vand.u32 %v5659, 4294901760
      %5661 = vmatmul.f32.gmra.mxu0 %v5660
      %v5662 = vpop.f32.mrf.mxu0
      %v5663 = vadd.f32 %v5460, %v5662
      %v5664 = vand.u32 %v4865, 4294901760
      %v5665 = vsub.f32 %v4865, %v5664
      %v5666 = vand.u32 %v5665, 4294901760
      %5667 = vmatmul.f32.gmra.mxu0 %v5666
      %v5668 = vpop.f32.mrf.mxu0
      %v5669 = vadd.f32 %v5465, %v5668
      %v5670 = vand.u32 %v4867, 4294901760
      %v5671 = vsub.f32 %v4867, %v5670
      %v5672 = vand.u32 %v5671, 4294901760
      %5673 = vmatmul.f32.gmra.mxu0 %v5672
      %v5674 = vpop.f32.mrf.mxu0
      %v5675 = vadd.f32 %v5470, %v5674
      %v5676 = vand.u32 %v4869, 4294901760
      %v5677 = vsub.f32 %v4869, %v5676
      %v5678 = vand.u32 %v5677, 4294901760
      %5679 = vmatmul.f32.gmra.mxu0 %v5678
      %v5680 = vpop.f32.mrf.mxu0
      %v5681 = vadd.f32 %v5475, %v5680
      %v5682 = vand.u32 %v4871, 4294901760
      %v5683 = vsub.f32 %v4871, %v5682
      %v5684 = vand.u32 %v5683, 4294901760
      %5685 = vmatmul.f32.gmra.mxu0 %v5684
      %v5686 = vpop.f32.mrf.mxu0
      %v5687 = vadd.f32 %v5480, %v5686
      %v5688 = vand.u32 %v4873, 4294901760
      %v5689 = vsub.f32 %v4873, %v5688
      %v5690 = vand.u32 %v5689, 4294901760
      %5691 = vmatmul.f32.gmra.mxu0 %v5690
      %v5692 = vpop.f32.mrf.mxu0
      %v5693 = vadd.f32 %v5485, %v5692
      %v5694 = vand.u32 %v4875, 4294901760
      %v5695 = vsub.f32 %v4875, %v5694
      %v5696 = vand.u32 %v5695, 4294901760
      %5697 = vmatmul.f32.gmra.mxu0 %v5696
      %v5698 = vpop.f32.mrf.mxu0
      %v5699 = vadd.f32 %v5490, %v5698
      %v5700 = vand.u32 %v4877, 4294901760
      %v5701 = vsub.f32 %v4877, %v5700
      %v5702 = vand.u32 %v5701, 4294901760
      %5703 = vmatmul.f32.gmra.mxu0 %v5702
      %v5704 = vpop.f32.mrf.mxu0
      %v5705 = vadd.f32 %v5495, %v5704
      %v5706 = vand.u32 %v4879, 4294901760
      %v5707 = vsub.f32 %v4879, %v5706
      %v5708 = vand.u32 %v5707, 4294901760
      %5709 = vmatmul.f32.gmra.mxu0 %v5708
      %v5710 = vpop.f32.mrf.mxu0
      %v5711 = vadd.f32 %v5500, %v5710
      %v5712 = vand.u32 %v4881, 4294901760
      %v5713 = vsub.f32 %v4881, %v5712
      %v5714 = vand.u32 %v5713, 4294901760
      %5715 = vmatmul.f32.gmra.mxu0 %v5714
      %v5716 = vpop.f32.mrf.mxu0
      %v5717 = vadd.f32 %v5505, %v5716
      %v5718 = vand.u32 %v4883, 4294901760
      %v5719 = vsub.f32 %v4883, %v5718
      %v5720 = vand.u32 %v5719, 4294901760
      %5721 = vmatmul.f32.gmra.mxu0 %v5720
      %v5722 = vpop.f32.mrf.mxu0
      %v5723 = vadd.f32 %v5510, %v5722
      %5724 = vdwg.mxu0
      %5725 = vmatpush.msra.mxu0 0.0
      %5726 = vmatpush.msra.mxu0 0.0
      %5727 = vmatpush.msra.mxu0 0.0
      %5728 = vmatpush.msra.mxu0 0.0
      %5729 = vmatpush.msra.mxu0 0.0
      %5730 = vmatpush.msra.mxu0 0.0
      %5731 = vmatpush.msra.mxu0 0.0
      %5732 = vmatpush.msra.mxu0 0.0
      %5733 = vmatpush.msra.mxu0 0.0
      %5734 = vmatpush.msra.mxu0 0.0
      %5735 = vmatpush.msra.mxu0 0.0
      %5736 = vmatpush.msra.mxu0 0.0
      %v5737 = vand.u32 %v4720, 4294901760
      %v5738 = vsub.f32 %v4720, %v5737
      %v5739 = vand.u32 %v5738, 4294901760
      %5740 = vmatpush.msra.mxu0 %v5739
      %v5741 = vand.u32 %v4719, 4294901760
      %v5742 = vsub.f32 %v4719, %v5741
      %v5743 = vand.u32 %v5742, 4294901760
      %5744 = vmatpush.msra.mxu0 %v5743
      %v5745 = vand.u32 %v4718, 4294901760
      %v5746 = vsub.f32 %v4718, %v5745
      %v5747 = vand.u32 %v5746, 4294901760
      %5748 = vmatpush.msra.mxu0 %v5747
      %v5749 = vand.u32 %v4717, 4294901760
      %v5750 = vsub.f32 %v4717, %v5749
      %v5751 = vand.u32 %v5750, 4294901760
      %5752 = vmatpush.msra.mxu0 %v5751
      %v5753 = vand.u32 %v4821, 4294901760
      %5754 = vmatmul.f32.gmra.mxu0 %v5753
      %v5755 = vpop.f32.mrf.mxu0
      %v5756 = vadd.f32 %v5537, %v5755
      %v5757 = vand.u32 %v4823, 4294901760
      %5758 = vmatmul.f32.gmra.mxu0 %v5757
      %v5759 = vpop.f32.mrf.mxu0
      %v5760 = vadd.f32 %v5543, %v5759
      %v5761 = vand.u32 %v4825, 4294901760
      %5762 = vmatmul.f32.gmra.mxu0 %v5761
      %v5763 = vpop.f32.mrf.mxu0
      %v5764 = vadd.f32 %v5549, %v5763
      %v5765 = vand.u32 %v4827, 4294901760
      %5766 = vmatmul.f32.gmra.mxu0 %v5765
      %v5767 = vpop.f32.mrf.mxu0
      %v5768 = vadd.f32 %v5555, %v5767
      %v5769 = vand.u32 %v4829, 4294901760
      %5770 = vmatmul.f32.gmra.mxu0 %v5769
      %v5771 = vpop.f32.mrf.mxu0
      %v5772 = vadd.f32 %v5561, %v5771
      %v5773 = vand.u32 %v4831, 4294901760
      %5774 = vmatmul.f32.gmra.mxu0 %v5773
      %v5775 = vpop.f32.mrf.mxu0
      %v5776 = vadd.f32 %v5567, %v5775
      %v5777 = vand.u32 %v4833, 4294901760
      %5778 = vmatmul.f32.gmra.mxu0 %v5777
      %v5779 = vpop.f32.mrf.mxu0
      %v5780 = vadd.f32 %v5573, %v5779
      %v5781 = vand.u32 %v4835, 4294901760
      %5782 = vmatmul.f32.gmra.mxu0 %v5781
      %v5783 = vpop.f32.mrf.mxu0
      %v5784 = vadd.f32 %v5579, %v5783
      %v5785 = vand.u32 %v4837, 4294901760
      %5786 = vmatmul.f32.gmra.mxu0 %v5785
      %v5787 = vpop.f32.mrf.mxu0
      %v5788 = vadd.f32 %v5585, %v5787
      %v5789 = vand.u32 %v4839, 4294901760
      %5790 = vmatmul.f32.gmra.mxu0 %v5789
      %v5791 = vpop.f32.mrf.mxu0
      %v5792 = vadd.f32 %v5591, %v5791
      %v5793 = vand.u32 %v4841, 4294901760
      %5794 = vmatmul.f32.gmra.mxu0 %v5793
      %v5795 = vpop.f32.mrf.mxu0
      %v5796 = vadd.f32 %v5597, %v5795
      %v5797 = vand.u32 %v4843, 4294901760
      %5798 = vmatmul.f32.gmra.mxu0 %v5797
      %v5799 = vpop.f32.mrf.mxu0
      %v5800 = vadd.f32 %v5603, %v5799
      %v5801 = vand.u32 %v4845, 4294901760
      %5802 = vmatmul.f32.gmra.mxu0 %v5801
      %v5803 = vpop.f32.mrf.mxu0
      %v5804 = vadd.f32 %v5609, %v5803
      %v5805 = vand.u32 %v4847, 4294901760
      %5806 = vmatmul.f32.gmra.mxu0 %v5805
      %v5807 = vpop.f32.mrf.mxu0
      %v5808 = vadd.f32 %v5615, %v5807
      %v5809 = vand.u32 %v4849, 4294901760
      %5810 = vmatmul.f32.gmra.mxu0 %v5809
      %v5811 = vpop.f32.mrf.mxu0
      %v5812 = vadd.f32 %v5621, %v5811
      %v5813 = vand.u32 %v4851, 4294901760
      %5814 = vmatmul.f32.gmra.mxu0 %v5813
      %v5815 = vpop.f32.mrf.mxu0
      %v5816 = vadd.f32 %v5627, %v5815
      %v5817 = vand.u32 %v4853, 4294901760
      %5818 = vmatmul.f32.gmra.mxu0 %v5817
      %v5819 = vpop.f32.mrf.mxu0
      %v5820 = vadd.f32 %v5633, %v5819
      %v5821 = vand.u32 %v4855, 4294901760
      %5822 = vmatmul.f32.gmra.mxu0 %v5821
      %v5823 = vpop.f32.mrf.mxu0
      %v5824 = vadd.f32 %v5639, %v5823
      %v5825 = vand.u32 %v4857, 4294901760
      %5826 = vmatmul.f32.gmra.mxu0 %v5825
      %v5827 = vpop.f32.mrf.mxu0
      %v5828 = vadd.f32 %v5645, %v5827
      %v5829 = vand.u32 %v4859, 4294901760
      %5830 = vmatmul.f32.gmra.mxu0 %v5829
      %v5831 = vpop.f32.mrf.mxu0
      %v5832 = vadd.f32 %v5651, %v5831
      %v5833 = vand.u32 %v4861, 4294901760
      %5834 = vmatmul.f32.gmra.mxu0 %v5833
      %v5835 = vpop.f32.mrf.mxu0
      %v5836 = vadd.f32 %v5657, %v5835
      %v5837 = vand.u32 %v4863, 4294901760
      %5838 = vmatmul.f32.gmra.mxu0 %v5837
      %v5839 = vpop.f32.mrf.mxu0
      %v5840 = vadd.f32 %v5663, %v5839
      %v5841 = vand.u32 %v4865, 4294901760
      %5842 = vmatmul.f32.gmra.mxu0 %v5841
      %v5843 = vpop.f32.mrf.mxu0
      %v5844 = vadd.f32 %v5669, %v5843
      %v5845 = vand.u32 %v4867, 4294901760
      %5846 = vmatmul.f32.gmra.mxu0 %v5845
      %v5847 = vpop.f32.mrf.mxu0
      %v5848 = vadd.f32 %v5675, %v5847
      %v5849 = vand.u32 %v4869, 4294901760
      %5850 = vmatmul.f32.gmra.mxu0 %v5849
      %v5851 = vpop.f32.mrf.mxu0
      %v5852 = vadd.f32 %v5681, %v5851
      %v5853 = vand.u32 %v4871, 4294901760
      %5854 = vmatmul.f32.gmra.mxu0 %v5853
      %v5855 = vpop.f32.mrf.mxu0
      %v5856 = vadd.f32 %v5687, %v5855
      %v5857 = vand.u32 %v4873, 4294901760
      %5858 = vmatmul.f32.gmra.mxu0 %v5857
      %v5859 = vpop.f32.mrf.mxu0
      %v5860 = vadd.f32 %v5693, %v5859
      %v5861 = vand.u32 %v4875, 4294901760
      %5862 = vmatmul.f32.gmra.mxu0 %v5861
      %v5863 = vpop.f32.mrf.mxu0
      %v5864 = vadd.f32 %v5699, %v5863
      %v5865 = vand.u32 %v4877, 4294901760
      %5866 = vmatmul.f32.gmra.mxu0 %v5865
      %v5867 = vpop.f32.mrf.mxu0
      %v5868 = vadd.f32 %v5705, %v5867
      %v5869 = vand.u32 %v4879, 4294901760
      %5870 = vmatmul.f32.gmra.mxu0 %v5869
      %v5871 = vpop.f32.mrf.mxu0
      %v5872 = vadd.f32 %v5711, %v5871
      %v5873 = vand.u32 %v4881, 4294901760
      %5874 = vmatmul.f32.gmra.mxu0 %v5873
      %v5875 = vpop.f32.mrf.mxu0
      %v5876 = vadd.f32 %v5717, %v5875
      %v5877 = vand.u32 %v4883, 4294901760
      %5878 = vmatmul.f32.gmra.mxu0 %v5877
      %v5879 = vpop.f32.mrf.mxu0
      %v5880 = vadd.f32 %v5723, %v5879
      %5881 = vdwg.mxu0
      %5882 = vmatpush.msra.mxu0 0.0
      %5883 = vmatpush.msra.mxu0 0.0
      %5884 = vmatpush.msra.mxu0 0.0
      %5885 = vmatpush.msra.mxu0 0.0
      %5886 = vmatpush.msra.mxu0 0.0
      %5887 = vmatpush.msra.mxu0 0.0
      %5888 = vmatpush.msra.mxu0 0.0
      %5889 = vmatpush.msra.mxu0 0.0
      %5890 = vmatpush.msra.mxu0 0.0
      %5891 = vmatpush.msra.mxu0 0.0
      %5892 = vmatpush.msra.mxu0 0.0
      %5893 = vmatpush.msra.mxu0 0.0
      %v5894 = vand.u32 %v4720, 4294901760
      %5895 = vmatpush.msra.mxu0 %v5894
      %v5896 = vand.u32 %v4719, 4294901760
      %5897 = vmatpush.msra.mxu0 %v5896
      %v5898 = vand.u32 %v4718, 4294901760
      %5899 = vmatpush.msra.mxu0 %v5898
      %v5900 = vand.u32 %v4717, 4294901760
      %5901 = vmatpush.msra.mxu0 %v5900
      %v5902 = vand.u32 %v4821, 4294901760
      %5903 = vmatmul.f32.gmra.mxu0 %v5902
      %v5904 = vpop.f32.mrf.mxu0
      %v5905 = vadd.f32 %v5756, %v5904
      %v5906 = vand.u32 %v4823, 4294901760
      %5907 = vmatmul.f32.gmra.mxu0 %v5906
      %v5908 = vpop.f32.mrf.mxu0
      %v5909 = vadd.f32 %v5760, %v5908
      %v5910 = vand.u32 %v4825, 4294901760
      %5911 = vmatmul.f32.gmra.mxu0 %v5910
      %v5912 = vpop.f32.mrf.mxu0
      %v5913 = vadd.f32 %v5764, %v5912
      %v5914 = vand.u32 %v4827, 4294901760
      %5915 = vmatmul.f32.gmra.mxu0 %v5914
      %v5916 = vpop.f32.mrf.mxu0
      %v5917 = vadd.f32 %v5768, %v5916
      %v5918 = vand.u32 %v4829, 4294901760
      %5919 = vmatmul.f32.gmra.mxu0 %v5918
      %v5920 = vpop.f32.mrf.mxu0
      %v5921 = vadd.f32 %v5772, %v5920
      %v5922 = vand.u32 %v4831, 4294901760
      %5923 = vmatmul.f32.gmra.mxu0 %v5922
      %v5924 = vpop.f32.mrf.mxu0
      %v5925 = vadd.f32 %v5776, %v5924
      %v5926 = vand.u32 %v4833, 4294901760
      %5927 = vmatmul.f32.gmra.mxu0 %v5926
      %v5928 = vpop.f32.mrf.mxu0
      %v5929 = vadd.f32 %v5780, %v5928
      %v5930 = vand.u32 %v4835, 4294901760
      %5931 = vmatmul.f32.gmra.mxu0 %v5930
      %v5932 = vpop.f32.mrf.mxu0
      %v5933 = vadd.f32 %v5784, %v5932
      %v5934 = vand.u32 %v4837, 4294901760
      %5935 = vmatmul.f32.gmra.mxu0 %v5934
      %v5936 = vpop.f32.mrf.mxu0
      %v5937 = vadd.f32 %v5788, %v5936
      %v5938 = vand.u32 %v4839, 4294901760
      %5939 = vmatmul.f32.gmra.mxu0 %v5938
      %v5940 = vpop.f32.mrf.mxu0
      %v5941 = vadd.f32 %v5792, %v5940
      %v5942 = vand.u32 %v4841, 4294901760
      %5943 = vmatmul.f32.gmra.mxu0 %v5942
      %v5944 = vpop.f32.mrf.mxu0
      %v5945 = vadd.f32 %v5796, %v5944
      %v5946 = vand.u32 %v4843, 4294901760
      %5947 = vmatmul.f32.gmra.mxu0 %v5946
      %v5948 = vpop.f32.mrf.mxu0
      %v5949 = vadd.f32 %v5800, %v5948
      %v5950 = vand.u32 %v4845, 4294901760
      %5951 = vmatmul.f32.gmra.mxu0 %v5950
      %v5952 = vpop.f32.mrf.mxu0
      %v5953 = vadd.f32 %v5804, %v5952
      %v5954 = vand.u32 %v4847, 4294901760
      %5955 = vmatmul.f32.gmra.mxu0 %v5954
      %v5956 = vpop.f32.mrf.mxu0
      %v5957 = vadd.f32 %v5808, %v5956
      %v5958 = vand.u32 %v4849, 4294901760
      %5959 = vmatmul.f32.gmra.mxu0 %v5958
      %v5960 = vpop.f32.mrf.mxu0
      %v5961 = vadd.f32 %v5812, %v5960
      %v5962 = vand.u32 %v4851, 4294901760
      %5963 = vmatmul.f32.gmra.mxu0 %v5962
      %v5964 = vpop.f32.mrf.mxu0
      %v5965 = vadd.f32 %v5816, %v5964
      %v5966 = vand.u32 %v4853, 4294901760
      %5967 = vmatmul.f32.gmra.mxu0 %v5966
      %v5968 = vpop.f32.mrf.mxu0
      %v5969 = vadd.f32 %v5820, %v5968
      %v5970 = vand.u32 %v4855, 4294901760
      %5971 = vmatmul.f32.gmra.mxu0 %v5970
      %v5972 = vpop.f32.mrf.mxu0
      %v5973 = vadd.f32 %v5824, %v5972
      %v5974 = vand.u32 %v4857, 4294901760
      %5975 = vmatmul.f32.gmra.mxu0 %v5974
      %v5976 = vpop.f32.mrf.mxu0
      %v5977 = vadd.f32 %v5828, %v5976
      %v5978 = vand.u32 %v4859, 4294901760
      %5979 = vmatmul.f32.gmra.mxu0 %v5978
      %v5980 = vpop.f32.mrf.mxu0
      %v5981 = vadd.f32 %v5832, %v5980
      %v5982 = vand.u32 %v4861, 4294901760
      %5983 = vmatmul.f32.gmra.mxu0 %v5982
      %v5984 = vpop.f32.mrf.mxu0
      %v5985 = vadd.f32 %v5836, %v5984
      %v5986 = vand.u32 %v4863, 4294901760
      %5987 = vmatmul.f32.gmra.mxu0 %v5986
      %v5988 = vpop.f32.mrf.mxu0
      %v5989 = vadd.f32 %v5840, %v5988
      %v5990 = vand.u32 %v4865, 4294901760
      %5991 = vmatmul.f32.gmra.mxu0 %v5990
      %v5992 = vpop.f32.mrf.mxu0
      %v5993 = vadd.f32 %v5844, %v5992
      %v5994 = vand.u32 %v4867, 4294901760
      %5995 = vmatmul.f32.gmra.mxu0 %v5994
      %v5996 = vpop.f32.mrf.mxu0
      %v5997 = vadd.f32 %v5848, %v5996
      %v5998 = vand.u32 %v4869, 4294901760
      %5999 = vmatmul.f32.gmra.mxu0 %v5998
      %v6000 = vpop.f32.mrf.mxu0
      %v6001 = vadd.f32 %v5852, %v6000
      %v6002 = vand.u32 %v4871, 4294901760
      %6003 = vmatmul.f32.gmra.mxu0 %v6002
      %v6004 = vpop.f32.mrf.mxu0
      %v6005 = vadd.f32 %v5856, %v6004
      %v6006 = vand.u32 %v4873, 4294901760
      %6007 = vmatmul.f32.gmra.mxu0 %v6006
      %v6008 = vpop.f32.mrf.mxu0
      %v6009 = vadd.f32 %v5860, %v6008
      %v6010 = vand.u32 %v4875, 4294901760
      %6011 = vmatmul.f32.gmra.mxu0 %v6010
      %v6012 = vpop.f32.mrf.mxu0
      %v6013 = vadd.f32 %v5864, %v6012
      %v6014 = vand.u32 %v4877, 4294901760
      %6015 = vmatmul.f32.gmra.mxu0 %v6014
      %v6016 = vpop.f32.mrf.mxu0
      %v6017 = vadd.f32 %v5868, %v6016
      %v6018 = vand.u32 %v4879, 4294901760
      %6019 = vmatmul.f32.gmra.mxu0 %v6018
      %v6020 = vpop.f32.mrf.mxu0
      %v6021 = vadd.f32 %v5872, %v6020
      %v6022 = vand.u32 %v4881, 4294901760
      %6023 = vmatmul.f32.gmra.mxu0 %v6022
      %v6024 = vpop.f32.mrf.mxu0
      %v6025 = vadd.f32 %v5876, %v6024
      %v6026 = vand.u32 %v4883, 4294901760
      %6027 = vmatmul.f32.gmra.mxu0 %v6026
      %v6028 = vpop.f32.mrf.mxu0
      %v6029 = vadd.f32 %v5880, %v6028
      %6030 = vdwg.mxu0
      %vm6031 = vcmask 39936
      %6032 = vst.msk [vmem:[%s407] sm:$0xff] %vm6031, %v5905
      %6033 = vst.msk [vmem:[%s407 + $0x8] sm:$0xff] %vm6031, %v5909
      %6034 = vst.msk [vmem:[%s407 + $0x10] sm:$0xff] %vm6031, %v5913
      %6035 = vst.msk [vmem:[%s407 + $0x18] sm:$0xff] %vm6031, %v5917
      %6036 = vst.msk [vmem:[%s407 + $0x20] sm:$0xff] %vm6031, %v5921
      %6037 = vst.msk [vmem:[%s407 + $0x28] sm:$0xff] %vm6031, %v5925
      %6038 = vst.msk [vmem:[%s407 + $0x30] sm:$0xff] %vm6031, %v5929
      %6039 = vst.msk [vmem:[%s407 + $0x38] sm:$0xff] %vm6031, %v5933
      %6040 = vst.msk [vmem:[%s407 + $0x40] sm:$0xff] %vm6031, %v5937
      %6041 = vst.msk [vmem:[%s407 + $0x48] sm:$0xff] %vm6031, %v5941
      %6042 = vst.msk [vmem:[%s407 + $0x50] sm:$0xff] %vm6031, %v5945
      %6043 = vst.msk [vmem:[%s407 + $0x58] sm:$0xff] %vm6031, %v5949
      %6044 = vst.msk [vmem:[%s407 + $0x60] sm:$0xff] %vm6031, %v5953
      %6045 = vst.msk [vmem:[%s407 + $0x68] sm:$0xff] %vm6031, %v5957
      %6046 = vst.msk [vmem:[%s407 + $0x70] sm:$0xff] %vm6031, %v5961
      %6047 = vst.msk [vmem:[%s407 + $0x78] sm:$0xff] %vm6031, %v5965
      %6048 = vst.msk [vmem:[%s407 + $0x80] sm:$0xff] %vm6031, %v5969
      %6049 = vst.msk [vmem:[%s407 + $0x88] sm:$0xff] %vm6031, %v5973
      %6050 = vst.msk [vmem:[%s407 + $0x90] sm:$0xff] %vm6031, %v5977
      %6051 = vst.msk [vmem:[%s407 + $0x98] sm:$0xff] %vm6031, %v5981
      %6052 = vst.msk [vmem:[%s407 + $0xa0] sm:$0xff] %vm6031, %v5985
      %6053 = vst.msk [vmem:[%s407 + $0xa8] sm:$0xff] %vm6031, %v5989
      %6054 = vst.msk [vmem:[%s407 + $0xb0] sm:$0xff] %vm6031, %v5993
      %6055 = vst.msk [vmem:[%s407 + $0xb8] sm:$0xff] %vm6031, %v5997
      %6056 = vst.msk [vmem:[%s407 + $0xc0] sm:$0xff] %vm6031, %v6001
      %6057 = vst.msk [vmem:[%s407 + $0xc8] sm:$0xff] %vm6031, %v6005
      %6058 = vst.msk [vmem:[%s407 + $0xd0] sm:$0xff] %vm6031, %v6009
      %6059 = vst.msk [vmem:[%s407 + $0xd8] sm:$0xff] %vm6031, %v6013
      %6060 = vst.msk [vmem:[%s407 + $0xe0] sm:$0xff] %vm6031, %v6017
      %6061 = vst.msk [vmem:[%s407 + $0xe8] sm:$0xff] %vm6031, %v6021
      %6062 = vst.msk [vmem:[%s407 + $0xf0] sm:$0xff] %vm6031, %v6025
      %6063 = vst.msk [vmem:[%s407 + $0xf8] sm:$0xff] %vm6031, %v6029
      %p6064 = scmp.lt.s32.totalorder %s23, 1
      %s6065 = scalar_select %p6064, %s23, 1
      %s6066 = smul.addr %s6065, 32
      %s6067 = smul.addr %s6066, 8
      %s6068 = scalar_lea.vmem %s11, %s6067
      // Predicated region
      $region65: #{tpu_custom_call.1} parent=63 // pred_check
        %p6069 = pneg %p282
      $region66: #{tpu_custom_call.1} parent=63 // pred_check_branch
        %6071 = sbr.rel (%p6069) target = $region68
      $region67: #{tpu_custom_call.1} parent=63 // pred_region
        _
      $region68: #{tpu_custom_call.1} parent=63 // pred_fallthru
        _
    $region64: #{tpu_custom_call.1} parent=5 // pred_fallthru
      _
    %p6072 = scmp.le.s32.totalorder 2, %s18
    // Predicated region
    $region69: #{tpu_custom_call.1} parent=5 // pred_check
      %p6073 = pneg %p6072
    $region70: #{tpu_custom_call.1} parent=5 // pred_check_branch
      %6075 = sbr.rel (%p6073) target = $region72
    $region71: #{tpu_custom_call.1} parent=5 // pred_region
      %s6076 = ssub.s32 %s18, 2
      // Predicated region
      $region73: #{tpu_custom_call.1} parent=71 // pred_check
        %p6077 = pneg %p288
      $region74: #{tpu_custom_call.1} parent=71 // pred_check_branch
        %6079 = sbr.rel (%p6077) target = $region76
      $region75: #{tpu_custom_call.1} parent=71 // pred_region
        %p6080 = scmp.lt.s32.totalorder %s24, 1
        %s6081 = scalar_select %p6080, %s24, 1
        %s6082 = smul.addr %s6081, 32
        %s6083 = smul.addr %s6082, 8
        %s6084 = scalar_lea.vmem %s11, %s6083
      $region76: #{tpu_custom_call.1} parent=71 // pred_fallthru
        _
    $region72: #{tpu_custom_call.1} parent=5 // pred_fallthru
      _
  $region6: #{tpu_custom_call.1} parent=0 // loop_footer
    %s22 = sadd.s32 1, %s18
  $region7: #{tpu_custom_call.1} parent=0 // loop_footer_branch
    %17 = sbr.rel target = $region3
  $region8: #{tpu_custom_call.1} parent=0 // loop_exit
    _

</llo_original>
